<compile_context>
chip_gen: v5e
topology: v5e:2x2
jax: 0.10.0
libtpu: 0.0.40
codegen_flags: <defaults>
</compile_context>

<pallas_src>
import jax
import jax.numpy as jnp
from jax.experimental import pallas as pl
from jax.experimental.pallas import tpu as pltpu


# ----------------------------- configuration --------------------------------
IN_FEATURES = 3                     # coords dim
HIDDEN = 32                         # hidden_features
N_HIDDEN_LAYERS = 2                 # hidden_layers
OUT_FEATURES = 1                    # template SDF output
LATENT_SIZE = 16                    # latent_size
ATTR_NAMES = ("weight", "age")      # template_attributes keys
LATENT_IN = frozenset({N_HIDDEN_LAYERS // 2})   # skip-connection layer(s)

DISP_DIM = 3                        # displacement output dim
NB = 4                              # fused branches per attribute
N_TEMPLATE_EVALS = 3                # template(vf+c), template(vfz+c), template(c)
MAX_TILE_P = 1024                   # rows per grid step (multiple of 8)
MXU_DTYPE = jnp.bfloat16            # matmul operand dtype (f32 accumulation)

N_ATTR = len(ATTR_NAMES)
# out lanes: per attr [cur_e, inv_e, cur_0, inv_0] (12) | vf (3) | vf_wo_z (3)
#            | [model_out, model_out_z, template] (3*OUT_FEATURES)
OUT_W = N_ATTR * 4 * DISP_DIM + 2 * DISP_DIM + N_TEMPLATE_EVALS * OUT_FEATURES


def _round_up(x, m):
    return ((x + m - 1) // m) * m


def _dot_ref(x, w_ref):
    """MXU matmul: bf16 (or f32) operands, f32 accumulation."""
    return jnp.dot(x.astype(MXU_DTYPE), w_ref[...].astype(MXU_DTYPE),
                   preferred_element_type=jnp.float32)


def _disp_refs_per_attr():
    n = 6                                    # first: Wce, Wc0, Wcf, Wcov, Wemb, B
    for j in range(1, N_HIDDEN_LAYERS + 1):
        n += 7 if j in LATENT_IN else 2      # skip: Wh, Wce, Wc0, Wcf, Wcov, Wemb, B
    return n + 1                             # + Wout (final bias cancels)


# ------------------------------ Pallas kernel --------------------------------
def make_fused_kernel(n_hidden, latent_in, n_attr, out_features):
    per_attr = _disp_refs_per_attr()
    n_disp_refs = n_attr * per_attr

    def kernel(coords_ref, emb_ref, attri_ref, *refs):
        out_ref = refs[-1]
        wrefs = refs[:-1]
        coords0 = coords_ref[...]            # (T, 3)
        emb = emb_ref[...]                   # (T, L)

        relu = lambda v: jnp.maximum(v, 0.0)
        col = 0
        vf = None
        vfz = None

        for a in range(n_attr):
            aw = wrefs[a * per_attr:(a + 1) * per_attr]
            cov = attri_ref[:, a:a + 1]                      # (T, 1)

            # ---- static parse of this attribute's packed layer structure ----
            Wce, Wc0, Wcf, Wcov, Wemb, B1 = aw[0], aw[1], aw[2], aw[3], aw[4], aw[5]
            idx = 6
            layers = []
            for j in range(1, n_hidden + 1):
                if j in latent_in:
                    layers.append(("skip",) + tuple(aw[idx:idx + 7]))
                    idx += 7
                else:
                    layers.append(("plain",) + tuple(aw[idx:idx + 2]))
                    idx += 2
            Wout = aw[idx]

            # ---- covariate / embedding / bias terms: hoisted once per attr,
            #      reused by both the forward and the inverse evaluation ------
            const1 = cov * Wcov[...] + _dot_ref(emb, Wemb) + B1[...]   # (T, 4H)
            skip_consts = []
            for layer in layers:
                if layer[0] == "skip":
                    _, _Wh, _Sce, _Sc0, _Scf, Scov, Semb, Bs = layer
                    skip_consts.append(cov * Scov[...] + _dot_ref(emb, Semb)
                                       + Bs[...])
                else:
                    skip_consts.append(None)

            def eval_branches(c_e, c_0, same_coords):
                """All 4 branches lane-packed as (T, 4H); returns (T, 6)
                = [disp_with_emb | disp_without_emb] (final biases cancel)."""
                if same_coords:
                    pre = _dot_ref(c_e, Wcf) + const1
                else:
                    pre = _dot_ref(c_e, Wce) + _dot_ref(c_0, Wc0) + const1
                h = relu(pre)
                for li, layer in enumerate(layers):
                    if layer[0] == "skip":
                        _, Wh, Sce, Sc0, Scf, _Scov, _Semb, _Bs = layer
                        if same_coords:
                            sk = _dot_ref(c_e, Scf)
                        else:
                            sk = _dot_ref(c_e, Sce) + _dot_ref(c_0, Sc0)
                        h = relu(_dot_ref(h, Wh) + sk + skip_consts[li])
                    else:
                        _, W, B = layer
                        h = relu(_dot_ref(h, W) + B[...])
                return _dot_ref(h, Wout)                     # (T, 2*DISP_DIM)

            # forward displacements
            d_fwd = eval_branches(coords0, coords0, True)
            cur_e = d_fwd[:, 0:DISP_DIM]
            cur_0 = d_fwd[:, DISP_DIM:2 * DISP_DIM]
            # inverse displacements, fused (no HBM round trip of cur_*)
            d_inv = eval_branches(coords0 + cur_e, coords0 + cur_0, False)
            inv_e = -d_inv[:, 0:DISP_DIM]
            inv_0 = -d_inv[:, DISP_DIM:2 * DISP_DIM]

            out_ref[:, col:col + 3] = cur_e
            out_ref[:, col + 3:col + 6] = inv_e
            out_ref[:, col + 6:col + 9] = cur_0
            out_ref[:, col + 9:col + 12] = inv_0
            col += 12

            vf = cur_e if vf is None else vf + cur_e
            vfz = cur_0 if vfz is None else vfz + cur_0

        out_ref[:, col:col + 3] = vf
        out_ref[:, col + 3:col + 6] = vfz
        col += 6

        # ---- template MLP: 3 evaluations lane-packed via block-diag weights -
        tws = wrefs[n_disp_refs:]
        pre = (_dot_ref(vf + coords0, tws[0])
               + _dot_ref(vfz + coords0, tws[1])
               + _dot_ref(coords0, tws[2])
               + tws[3][...])
        h = relu(pre)
        tidx = 4
        for _ in range(n_hidden):
            h = relu(_dot_ref(h, tws[tidx]) + tws[tidx + 1][...])
            tidx += 2
        # outermost_linear=False -> final ReLU
        o = relu(_dot_ref(h, tws[tidx]) + tws[tidx + 1][...])
        out_ref[:, col:col + N_TEMPLATE_EVALS * out_features] = o

    return kernel


# ------------------------------ pallas_call wrapper --------------------------
def fused_call(coords_p, emb_p, attri_p, weights, tile_p):
    p_pad = coords_p.shape[0]
    kernel = make_fused_kernel(N_HIDDEN_LAYERS, LATENT_IN, N_ATTR, OUT_FEATURES)
    in_specs = [
        pl.BlockSpec((tile_p, coords_p.shape[1]), lambda i: (i, 0)),
        pl.BlockSpec((tile_p, emb_p.shape[1]), lambda i: (i, 0)),
        pl.BlockSpec((tile_p, attri_p.shape[1]), lambda i: (i, 0)),
    ] + [pl.BlockSpec(w.shape, lambda i: (0, 0)) for w in weights]
    return pl.pallas_call(
        kernel,
        out_shape=jax.ShapeDtypeStruct((p_pad, OUT_W), jnp.float32),
        grid=(pl.cdiv(p_pad, tile_p),),
        in_specs=in_specs,
        out_specs=pl.BlockSpec((tile_p, OUT_W), lambda i: (i, 0)),
        compiler_params=pltpu.CompilerParams(
            dimension_semantics=("parallel",)),
    )(coords_p, emb_p, attri_p, *weights)


# ------------------------------ parameters -----------------------------------
def _linear(key, fan_in, fan_out):
    w = jax.random.normal(key, (fan_in, fan_out), jnp.float32) * (2.0 / fan_in) ** 0.5
    b = jnp.zeros((1, fan_out), jnp.float32)
    return w, b


def _block_diag(w, n):
    r, c = w.shape
    out = jnp.zeros((n * r, n * c), w.dtype)
    for k in range(n):
        out = out.at[k * r:(k + 1) * r, k * c:(k + 1) * c].set(w)
    return out


def init_deepsdf_raw(key):
    """Per-attribute reference (unpacked) layers: first / skip / plain / out."""
    d0 = IN_FEATURES + 1 + LATENT_SIZE          # x0 = [coords | cov | emb]
    keys = jax.random.split(key, N_HIDDEN_LAYERS + 2)
    layers = [("first",) + _linear(keys[0], d0, HIDDEN)]
    for j in range(1, N_HIDDEN_LAYERS + 1):
        if j in LATENT_IN:
            layers.append(("skip",) + _linear(keys[j], HIDDEN + d0, HIDDEN))
        else:
            layers.append(("plain",) + _linear(keys[j], HIDDEN, HIDDEN))
    layers.append(("out",) + _linear(keys[-1], HIDDEN, DISP_DIM))
    return layers


def init_template_raw(key):
    keys = jax.random.split(key, N_HIDDEN_LAYERS + 2)
    layers = [_linear(keys[0], IN_FEATURES, HIDDEN)]
    for j in range(1, N_HIDDEN_LAYERS + 1):
        layers.append(_linear(keys[j], HIDDEN, HIDDEN))
    layers.append(_linear(keys[-1], HIDDEN, OUT_FEATURES))
    return layers


def _pack_disp_attr(raw_layers):
    """Pack one attribute's layers into 4-branch column-blocked weights.

    Branch (column-block) order: [a_emb, b_emb, a_zero, b_zero]
      a_* : covariate present, b_* : covariate zeroed
      *_emb : real embedding,  *_zero : embedding zero-padded.
    """
    H = HIDDEN
    packed = []

    def pack_x(wx):
        wc = wx[:IN_FEATURES]
        wcov = wx[IN_FEATURES:IN_FEATURES + 1]
        wemb = wx[IN_FEATURES + 1:]
        z3 = jnp.zeros_like(wc)
        z1 = jnp.zeros_like(wcov)
        zE = jnp.zeros_like(wemb)
        Wce = jnp.concatenate([wc, wc, z3, z3], axis=1)      # coords (emb branches)
        Wc0 = jnp.concatenate([z3, z3, wc, wc], axis=1)      # coords (zero-emb br.)
        Wcf = Wce + Wc0                                      # forward: same coords
        Wcov = jnp.concatenate([wcov, z1, wcov, z1], axis=1)  # cov -> a_* branches
        Wemb = jnp.concatenate([wemb, wemb, zE, zE], axis=1)  # emb -> *_emb branches
        return Wce, Wc0, Wcf, Wcov, Wemb

    for kind, w, b in raw_layers:
        if kind == "first":
            Wce, Wc0, Wcf, Wcov, Wemb = pack_x(w)
            packed += [Wce, Wc0, Wcf, Wcov, Wemb, jnp.tile(b, (1, NB))]
        elif kind == "skip":
            wh, wx = w[:H], w[H:]
            Wce, Wc0, Wcf, Wcov, Wemb = pack_x(wx)
            packed += [_block_diag(wh, NB), Wce, Wc0, Wcf, Wcov, Wemb,
                       jnp.tile(b, (1, NB))]
        elif kind == "plain":
            packed += [_block_diag(w, NB), jnp.tile(b, (1, NB))]
        else:  # "out": final bias cancels in mlp(xa)-mlp(xb); pack +/-W so the
            # matmul emits the difference directly: [disp_emb | disp_zero_emb]
            Wout = jnp.zeros((NB * H, 2 * DISP_DIM), jnp.float32)
            Wout = Wout.at[0:H, 0:DISP_DIM].set(w)
            Wout = Wout.at[H:2 * H, 0:DISP_DIM].set(-w)
            Wout = Wout.at[2 * H:3 * H, DISP_DIM:2 * DISP_DIM].set(w)
            Wout = Wout.at[3 * H:4 * H, DISP_DIM:2 * DISP_DIM].set(-w)
            packed.append(Wout)
    return packed


def _pack_template(raw):
    """Pack the template MLP for 3 lane-packed evaluations (block-diag)."""
    NE = N_TEMPLATE_EVALS
    packed = []
    w1, b1 = raw[0]
    for e in range(NE):
        We = jnp.zeros((IN_FEATURES, NE * HIDDEN), jnp.float32)
        We = We.at[:, e * HIDDEN:(e + 1) * HIDDEN].set(w1)
        packed.append(We)
    packed.append(jnp.tile(b1, (1, NE)))
    for w, b in raw[1:-1]:
        packed += [_block_diag(w, NE), jnp.tile(b, (1, NE))]
    wo, bo = raw[-1]
    packed.append(_block_diag(wo, NE))
    packed.append(jnp.tile(bo, (1, NE)))
    return packed


def init_params(key):
    keys = jax.random.split(key, len(ATTR_NAMES) + 1)
    return {
        "template": _pack_template(init_template_raw(keys[0])),
        "net_direction": {name: _pack_disp_attr(init_deepsdf_raw(keys[i + 1]))
                          for i, name in enumerate(ATTR_NAMES)},
    }


# ------------------------------ forward pass ---------------------------------
@jax.jit
def deep_naigsr_forward(coords, attributes, embedding, params):
    """coords: (B,N,3) f32, attributes: dict name->(B,1) f32,
    embedding: (B,N,LATENT_SIZE) f32.  Matches forward(testing=False,
    training=False)."""
    b, n, _ = coords.shape
    p = b * n

    arr_attri = jnp.concatenate(
        [attributes[name][:, None] for name in ATTR_NAMES], axis=-1)
    arr_attri = jnp.broadcast_to(arr_attri, (b, n, N_ATTR)).astype(jnp.float32)

    coords_f = coords.reshape(p, 3).astype(jnp.float32)
    emb_f = embedding.reshape(p, LATENT_SIZE).astype(jnp.float32)
    attri_f = arr_attri.reshape(p, N_ATTR)

    # tile sizing + row padding so arbitrary B*N is handled (no truncation)
    tile_p = min(MAX_TILE_P, _round_up(p, 8))
    p_pad = _round_up(p, tile_p)
    pad = p_pad - p
    if pad:
        coords_p = jnp.pad(coords_f, ((0, pad), (0, 0)))
        emb_p = jnp.pad(emb_f, ((0, pad), (0, 0)))
        attri_p = jnp.pad(attri_f, ((0, pad), (0, 0)))
    else:
        coords_p, emb_p, attri_p = coords_f, emb_f, attri_f

    all_weights = []
    for name in ATTR_NAMES:
        all_weights += params["net_direction"][name]
    all_weights += params["template"]

    # --- single fused launch: all displacements + inverses + template SDFs ---
    packed = fused_call(coords_p, emb_p, attri_p, all_weights, tile_p)[:p]

    vec_fields = {}
    col = 0
    for name in ATTR_NAMES:
        vec_fields[name] = packed[:, col:col + 3].reshape(b, n, 3)
        vec_fields[name + "_inv"] = packed[:, col + 3:col + 6].reshape(b, n, 3)
        vec_fields[name + "_z_padding"] = packed[:, col + 6:col + 9].reshape(b, n, 3)
        vec_fields[name + "_z_padding_inv"] = packed[:, col + 9:col + 12].reshape(b, n, 3)
        col += 12
    vec_fields["overall"] = packed[:, col:col + 3].reshape(b, n, 3)
    vec_fields["overall_z_padding"] = packed[:, col + 3:col + 6].reshape(b, n, 3)
    col += 6

    output = packed[:, col:col + OUT_FEATURES].reshape(b, n, OUT_FEATURES)
    output_z = packed[:, col + OUT_FEATURES:col + 2 * OUT_FEATURES].reshape(
        b, n, OUT_FEATURES)
    template_out = packed[:, col + 2 * OUT_FEATURES:col + 3 * OUT_FEATURES].reshape(
        b, n, OUT_FEATURES)

    return {
        "model_in": coords,
        "all_input": coords,
        "model_out": output,
        "vec_fields": vec_fields,
        "model_out_z_padding": output_z,
        "disentangle": {},
        "covariates": arr_attri,
        "embedding": embedding,
        "template": template_out,
    }


# ---------------------------------- main --------------------------------------
if __name__ == "__main__":
    root = jax.random.PRNGKey(0)
    k_params, k_coords, k_emb, k_a0, k_a1 = jax.random.split(root, 5)

    params = init_params(k_params)

    # primary small shape
    B, N = 2, 64
    coords = jax.random.normal(k_coords, (B, N, 3), jnp.float32)
    embedding = 0.1 * jax.random.normal(k_emb, (B, N, LATENT_SIZE), jnp.float32)
    attributes = {
        "weight": jax.random.normal(k_a0, (B, 1), jnp.float32),
        "age": jax.random.normal(k_a1, (B, 1), jnp.float32),
    }
    out = deep_naigsr_forward(coords, attributes, embedding, params)
    jax.block_until_ready(out["model_out"])
    jax.block_until_ready(out["model_out_z_padding"])
    jax.block_until_ready(out["template"])
    jax.block_until_ready(out["vec_fields"]["overall"])

    # ragged shape (B*N not a multiple of 8) to exercise the padding path
    B2, N2 = 2, 50
    coords2 = jax.random.normal(k_coords, (B2, N2, 3), jnp.float32)
    embedding2 = 0.1 * jax.random.normal(k_emb, (B2, N2, LATENT_SIZE), jnp.float32)
    out2 = deep_naigsr_forward(coords2, attributes, embedding2, params)
    jax.block_until_ready(out2["model_out"])

    print("KERNEL_OK")
</pallas_src>

<mosaic_0001>
module attributes {stable_mosaic.version = 11 : i64} {
  func.func @kernel(%arg0: i32, %arg1: memref<128x3xf32, #tpu.memory_space<vmem>>, %arg2: memref<128x16xf32, #tpu.memory_space<vmem>>, %arg3: memref<128x2xf32, #tpu.memory_space<vmem>>, %arg4: memref<3x128xf32, #tpu.memory_space<vmem>>, %arg5: memref<3x128xf32, #tpu.memory_space<vmem>>, %arg6: memref<3x128xf32, #tpu.memory_space<vmem>>, %arg7: memref<1x128xf32, #tpu.memory_space<vmem>>, %arg8: memref<16x128xf32, #tpu.memory_space<vmem>>, %arg9: memref<1x128xf32, #tpu.memory_space<vmem>>, %arg10: memref<128x128xf32, #tpu.memory_space<vmem>>, %arg11: memref<3x128xf32, #tpu.memory_space<vmem>>, %arg12: memref<3x128xf32, #tpu.memory_space<vmem>>, %arg13: memref<3x128xf32, #tpu.memory_space<vmem>>, %arg14: memref<1x128xf32, #tpu.memory_space<vmem>>, %arg15: memref<16x128xf32, #tpu.memory_space<vmem>>, %arg16: memref<1x128xf32, #tpu.memory_space<vmem>>, %arg17: memref<128x128xf32, #tpu.memory_space<vmem>>, %arg18: memref<1x128xf32, #tpu.memory_space<vmem>>, %arg19: memref<128x6xf32, #tpu.memory_space<vmem>>, %arg20: memref<3x128xf32, #tpu.memory_space<vmem>>, %arg21: memref<3x128xf32, #tpu.memory_space<vmem>>, %arg22: memref<3x128xf32, #tpu.memory_space<vmem>>, %arg23: memref<1x128xf32, #tpu.memory_space<vmem>>, %arg24: memref<16x128xf32, #tpu.memory_space<vmem>>, %arg25: memref<1x128xf32, #tpu.memory_space<vmem>>, %arg26: memref<128x128xf32, #tpu.memory_space<vmem>>, %arg27: memref<3x128xf32, #tpu.memory_space<vmem>>, %arg28: memref<3x128xf32, #tpu.memory_space<vmem>>, %arg29: memref<3x128xf32, #tpu.memory_space<vmem>>, %arg30: memref<1x128xf32, #tpu.memory_space<vmem>>, %arg31: memref<16x128xf32, #tpu.memory_space<vmem>>, %arg32: memref<1x128xf32, #tpu.memory_space<vmem>>, %arg33: memref<128x128xf32, #tpu.memory_space<vmem>>, %arg34: memref<1x128xf32, #tpu.memory_space<vmem>>, %arg35: memref<128x6xf32, #tpu.memory_space<vmem>>, %arg36: memref<3x96xf32, #tpu.memory_space<vmem>>, %arg37: memref<3x96xf32, #tpu.memory_space<vmem>>, %arg38: memref<3x96xf32, #tpu.memory_space<vmem>>, %arg39: memref<1x96xf32, #tpu.memory_space<vmem>>, %arg40: memref<96x96xf32, #tpu.memory_space<vmem>>, %arg41: memref<1x96xf32, #tpu.memory_space<vmem>>, %arg42: memref<96x96xf32, #tpu.memory_space<vmem>>, %arg43: memref<1x96xf32, #tpu.memory_space<vmem>>, %arg44: memref<96x3xf32, #tpu.memory_space<vmem>>, %arg45: memref<1x3xf32, #tpu.memory_space<vmem>>, %arg46: memref<128x33xf32, #tpu.memory_space<vmem>>) attributes {dimension_semantics = [#tpu.dimension_semantics<parallel>], iteration_bounds = array<i64: 1>, scalar_prefetch = 0 : i64, scratch_operands = 0 : i64, tpu.core_type = #tpu.core_type<tc>, window_params = [{transform_indices = @transform_0, window_bounds = array<i64: 128, 3>}, {transform_indices = @transform_1, window_bounds = array<i64: 128, 16>}, {transform_indices = @transform_2, window_bounds = array<i64: 128, 2>}, {pipeline_mode = #tpu.pipeline_mode<synchronous>, transform_indices = @transform_3, window_bounds = array<i64: 3, 128>}, {pipeline_mode = #tpu.pipeline_mode<synchronous>, transform_indices = @transform_4, window_bounds = array<i64: 3, 128>}, {pipeline_mode = #tpu.pipeline_mode<synchronous>, transform_indices = @transform_5, window_bounds = array<i64: 3, 128>}, {pipeline_mode = #tpu.pipeline_mode<synchronous>, transform_indices = @transform_6, window_bounds = array<i64: 1, 128>}, {pipeline_mode = #tpu.pipeline_mode<synchronous>, transform_indices = @transform_7, window_bounds = array<i64: 16, 128>}, {pipeline_mode = #tpu.pipeline_mode<synchronous>, transform_indices = @transform_8, window_bounds = array<i64: 1, 128>}, {pipeline_mode = #tpu.pipeline_mode<synchronous>, transform_indices = @transform_9, window_bounds = array<i64: 128, 128>}, {pipeline_mode = #tpu.pipeline_mode<synchronous>, transform_indices = @transform_10, window_bounds = array<i64: 3, 128>}, {pipeline_mode = #tpu.pipeline_mode<synchronous>, transform_indices = @transform_11, window_bounds = array<i64: 3, 128>}, {pipeline_mode = #tpu.pipeline_mode<synchronous>, transform_indices = @transform_12, window_bounds = array<i64: 3, 128>}, {pipeline_mode = #tpu.pipeline_mode<synchronous>, transform_indices = @transform_13, window_bounds = array<i64: 1, 128>}, {pipeline_mode = #tpu.pipeline_mode<synchronous>, transform_indices = @transform_14, window_bounds = array<i64: 16, 128>}, {pipeline_mode = #tpu.pipeline_mode<synchronous>, transform_indices = @transform_15, window_bounds = array<i64: 1, 128>}, {pipeline_mode = #tpu.pipeline_mode<synchronous>, transform_indices = @transform_16, window_bounds = array<i64: 128, 128>}, {pipeline_mode = #tpu.pipeline_mode<synchronous>, transform_indices = @transform_17, window_bounds = array<i64: 1, 128>}, {pipeline_mode = #tpu.pipeline_mode<synchronous>, transform_indices = @transform_18, window_bounds = array<i64: 128, 6>}, {pipeline_mode = #tpu.pipeline_mode<synchronous>, transform_indices = @transform_19, window_bounds = array<i64: 3, 128>}, {pipeline_mode = #tpu.pipeline_mode<synchronous>, transform_indices = @transform_20, window_bounds = array<i64: 3, 128>}, {pipeline_mode = #tpu.pipeline_mode<synchronous>, transform_indices = @transform_21, window_bounds = array<i64: 3, 128>}, {pipeline_mode = #tpu.pipeline_mode<synchronous>, transform_indices = @transform_22, window_bounds = array<i64: 1, 128>}, {pipeline_mode = #tpu.pipeline_mode<synchronous>, transform_indices = @transform_23, window_bounds = array<i64: 16, 128>}, {pipeline_mode = #tpu.pipeline_mode<synchronous>, transform_indices = @transform_24, window_bounds = array<i64: 1, 128>}, {pipeline_mode = #tpu.pipeline_mode<synchronous>, transform_indices = @transform_25, window_bounds = array<i64: 128, 128>}, {pipeline_mode = #tpu.pipeline_mode<synchronous>, transform_indices = @transform_26, window_bounds = array<i64: 3, 128>}, {pipeline_mode = #tpu.pipeline_mode<synchronous>, transform_indices = @transform_27, window_bounds = array<i64: 3, 128>}, {pipeline_mode = #tpu.pipeline_mode<synchronous>, transform_indices = @transform_28, window_bounds = array<i64: 3, 128>}, {pipeline_mode = #tpu.pipeline_mode<synchronous>, transform_indices = @transform_29, window_bounds = array<i64: 1, 128>}, {pipeline_mode = #tpu.pipeline_mode<synchronous>, transform_indices = @transform_30, window_bounds = array<i64: 16, 128>}, {pipeline_mode = #tpu.pipeline_mode<synchronous>, transform_indices = @transform_31, window_bounds = array<i64: 1, 128>}, {pipeline_mode = #tpu.pipeline_mode<synchronous>, transform_indices = @transform_32, window_bounds = array<i64: 128, 128>}, {pipeline_mode = #tpu.pipeline_mode<synchronous>, transform_indices = @transform_33, window_bounds = array<i64: 1, 128>}, {pipeline_mode = #tpu.pipeline_mode<synchronous>, transform_indices = @transform_34, window_bounds = array<i64: 128, 6>}, {pipeline_mode = #tpu.pipeline_mode<synchronous>, transform_indices = @transform_35, window_bounds = array<i64: 3, 96>}, {pipeline_mode = #tpu.pipeline_mode<synchronous>, transform_indices = @transform_36, window_bounds = array<i64: 3, 96>}, {pipeline_mode = #tpu.pipeline_mode<synchronous>, transform_indices = @transform_37, window_bounds = array<i64: 3, 96>}, {pipeline_mode = #tpu.pipeline_mode<synchronous>, transform_indices = @transform_38, window_bounds = array<i64: 1, 96>}, {pipeline_mode = #tpu.pipeline_mode<synchronous>, transform_indices = @transform_39, window_bounds = array<i64: 96, 96>}, {pipeline_mode = #tpu.pipeline_mode<synchronous>, transform_indices = @transform_40, window_bounds = array<i64: 1, 96>}, {pipeline_mode = #tpu.pipeline_mode<synchronous>, transform_indices = @transform_41, window_bounds = array<i64: 96, 96>}, {pipeline_mode = #tpu.pipeline_mode<synchronous>, transform_indices = @transform_42, window_bounds = array<i64: 1, 96>}, {pipeline_mode = #tpu.pipeline_mode<synchronous>, transform_indices = @transform_43, window_bounds = array<i64: 96, 3>}, {pipeline_mode = #tpu.pipeline_mode<synchronous>, transform_indices = @transform_44, window_bounds = array<i64: 1, 3>}, {transform_indices = @transform_45, window_bounds = array<i64: 128, 33>}]} {
    %c0 = arith.constant 0 : index
    %c0_0 = arith.constant 0 : index
    %0 = vector.load %arg1[%c0, %c0_0] : memref<128x3xf32, #tpu.memory_space<vmem>>, vector<128x3xf32>
    %c0_1 = arith.constant 0 : index
    %c0_2 = arith.constant 0 : index
    %1 = vector.load %arg2[%c0_1, %c0_2] : memref<128x16xf32, #tpu.memory_space<vmem>>, vector<128x16xf32>
    %c0_3 = arith.constant 0 : index
    %c0_4 = arith.constant 0 : index
    %2 = vector.load %arg3[%c0_3, %c0_4] : memref<128x2xf32, #tpu.memory_space<vmem>>, vector<128x1xf32>
    %c0_5 = arith.constant 0 : index
    %c0_6 = arith.constant 0 : index
    %3 = vector.load %arg7[%c0_5, %c0_6] : memref<1x128xf32, #tpu.memory_space<vmem>>, vector<1x128xf32>
    %4 = vector.broadcast %2 : vector<128x1xf32> to vector<128x128xf32>
    %5 = vector.broadcast %3 : vector<1x128xf32> to vector<128x128xf32>
    %6 = arith.mulf %4, %5 : vector<128x128xf32>
    %7 = arith.truncf %1 : vector<128x16xf32> to vector<128x16xbf16>
    %c0_7 = arith.constant 0 : index
    %c0_8 = arith.constant 0 : index
    %8 = vector.load %arg8[%c0_7, %c0_8] : memref<16x128xf32, #tpu.memory_space<vmem>>, vector<16x128xf32>
    %9 = arith.truncf %8 : vector<16x128xf32> to vector<16x128xbf16>
    %cst = arith.constant dense<0.000000e+00> : vector<128x128xf32>
    %10 = tpu.matmul %7, %9, %cst {dimension_numbers = #tpu.dot_dimension_numbers<[1], [0], [0], [1], [0, 0, 1, 1], [], []>} : vector<128x16xbf16>, vector<16x128xbf16>, vector<128x128xf32> -> vector<128x128xf32>
    %11 = arith.addf %6, %10 : vector<128x128xf32>
    %c0_9 = arith.constant 0 : index
    %c0_10 = arith.constant 0 : index
    %12 = vector.load %arg9[%c0_9, %c0_10] : memref<1x128xf32, #tpu.memory_space<vmem>>, vector<1x128xf32>
    %13 = vector.broadcast %12 : vector<1x128xf32> to vector<128x128xf32>
    %14 = arith.addf %11, %13 : vector<128x128xf32>
    %c0_11 = arith.constant 0 : index
    %c0_12 = arith.constant 0 : index
    %15 = vector.load %arg14[%c0_11, %c0_12] : memref<1x128xf32, #tpu.memory_space<vmem>>, vector<1x128xf32>
    %16 = vector.broadcast %2 : vector<128x1xf32> to vector<128x128xf32>
    %17 = vector.broadcast %15 : vector<1x128xf32> to vector<128x128xf32>
    %18 = arith.mulf %16, %17 : vector<128x128xf32>
    %19 = arith.truncf %1 : vector<128x16xf32> to vector<128x16xbf16>
    %c0_13 = arith.constant 0 : index
    %c0_14 = arith.constant 0 : index
    %20 = vector.load %arg15[%c0_13, %c0_14] : memref<16x128xf32, #tpu.memory_space<vmem>>, vector<16x128xf32>
    %21 = arith.truncf %20 : vector<16x128xf32> to vector<16x128xbf16>
    %cst_15 = arith.constant dense<0.000000e+00> : vector<128x128xf32>
    %22 = tpu.matmul %19, %21, %cst_15 {dimension_numbers = #tpu.dot_dimension_numbers<[1], [0], [0], [1], [0, 0, 1, 1], [], []>} : vector<128x16xbf16>, vector<16x128xbf16>, vector<128x128xf32> -> vector<128x128xf32>
    %23 = arith.addf %18, %22 : vector<128x128xf32>
    %c0_16 = arith.constant 0 : index
    %c0_17 = arith.constant 0 : index
    %24 = vector.load %arg16[%c0_16, %c0_17] : memref<1x128xf32, #tpu.memory_space<vmem>>, vector<1x128xf32>
    %25 = vector.broadcast %24 : vector<1x128xf32> to vector<128x128xf32>
    %26 = arith.addf %23, %25 : vector<128x128xf32>
    %27 = arith.truncf %0 : vector<128x3xf32> to vector<128x3xbf16>
    %c0_18 = arith.constant 0 : index
    %c0_19 = arith.constant 0 : index
    %28 = vector.load %arg6[%c0_18, %c0_19] : memref<3x128xf32, #tpu.memory_space<vmem>>, vector<3x128xf32>
    %29 = arith.truncf %28 : vector<3x128xf32> to vector<3x128xbf16>
    %cst_20 = arith.constant dense<0.000000e+00> : vector<128x128xf32>
    %30 = tpu.matmul %27, %29, %cst_20 {dimension_numbers = #tpu.dot_dimension_numbers<[1], [0], [0], [1], [0, 0, 1, 1], [], []>} : vector<128x3xbf16>, vector<3x128xbf16>, vector<128x128xf32> -> vector<128x128xf32>
    %31 = arith.addf %30, %14 : vector<128x128xf32>
    %cst_21 = arith.constant 0.000000e+00 : f32
    %32 = vector.broadcast %cst_21 : f32 to vector<128x128xf32>
    %33 = arith.maximumf %31, %32 : vector<128x128xf32>
    %34 = arith.truncf %0 : vector<128x3xf32> to vector<128x3xbf16>
    %c0_22 = arith.constant 0 : index
    %c0_23 = arith.constant 0 : index
    %35 = vector.load %arg13[%c0_22, %c0_23] : memref<3x128xf32, #tpu.memory_space<vmem>>, vector<3x128xf32>
    %36 = arith.truncf %35 : vector<3x128xf32> to vector<3x128xbf16>
    %cst_24 = arith.constant dense<0.000000e+00> : vector<128x128xf32>
    %37 = tpu.matmul %34, %36, %cst_24 {dimension_numbers = #tpu.dot_dimension_numbers<[1], [0], [0], [1], [0, 0, 1, 1], [], []>} : vector<128x3xbf16>, vector<3x128xbf16>, vector<128x128xf32> -> vector<128x128xf32>
    %38 = arith.truncf %33 : vector<128x128xf32> to vector<128x128xbf16>
    %c0_25 = arith.constant 0 : index
    %c0_26 = arith.constant 0 : index
    %39 = vector.load %arg10[%c0_25, %c0_26] : memref<128x128xf32, #tpu.memory_space<vmem>>, vector<128x128xf32>
    %40 = arith.truncf %39 : vector<128x128xf32> to vector<128x128xbf16>
    %cst_27 = arith.constant dense<0.000000e+00> : vector<128x128xf32>
    %41 = tpu.matmul %38, %40, %cst_27 {dimension_numbers = #tpu.dot_dimension_numbers<[1], [0], [0], [1], [0, 0, 1, 1], [], []>} : vector<128x128xbf16>, vector<128x128xbf16>, vector<128x128xf32> -> vector<128x128xf32>
    %42 = arith.addf %41, %37 : vector<128x128xf32>
    %43 = arith.addf %42, %26 : vector<128x128xf32>
    %cst_28 = arith.constant 0.000000e+00 : f32
    %44 = vector.broadcast %cst_28 : f32 to vector<128x128xf32>
    %45 = arith.maximumf %43, %44 : vector<128x128xf32>
    %46 = arith.truncf %45 : vector<128x128xf32> to vector<128x128xbf16>
    %c0_29 = arith.constant 0 : index
    %c0_30 = arith.constant 0 : index
    %47 = vector.load %arg17[%c0_29, %c0_30] : memref<128x128xf32, #tpu.memory_space<vmem>>, vector<128x128xf32>
    %48 = arith.truncf %47 : vector<128x128xf32> to vector<128x128xbf16>
    %cst_31 = arith.constant dense<0.000000e+00> : vector<128x128xf32>
    %49 = tpu.matmul %46, %48, %cst_31 {dimension_numbers = #tpu.dot_dimension_numbers<[1], [0], [0], [1], [0, 0, 1, 1], [], []>} : vector<128x128xbf16>, vector<128x128xbf16>, vector<128x128xf32> -> vector<128x128xf32>
    %c0_32 = arith.constant 0 : index
    %c0_33 = arith.constant 0 : index
    %50 = vector.load %arg18[%c0_32, %c0_33] : memref<1x128xf32, #tpu.memory_space<vmem>>, vector<1x128xf32>
    %51 = vector.broadcast %50 : vector<1x128xf32> to vector<128x128xf32>
    %52 = arith.addf %49, %51 : vector<128x128xf32>
    %cst_34 = arith.constant 0.000000e+00 : f32
    %53 = vector.broadcast %cst_34 : f32 to vector<128x128xf32>
    %54 = arith.maximumf %52, %53 : vector<128x128xf32>
    %55 = arith.truncf %54 : vector<128x128xf32> to vector<128x128xbf16>
    %c0_35 = arith.constant 0 : index
    %c0_36 = arith.constant 0 : index
    %56 = vector.load %arg19[%c0_35, %c0_36] : memref<128x6xf32, #tpu.memory_space<vmem>>, vector<128x6xf32>
    %57 = arith.truncf %56 : vector<128x6xf32> to vector<128x6xbf16>
    %cst_37 = arith.constant dense<0.000000e+00> : vector<128x6xf32>
    %58 = tpu.matmul %55, %57, %cst_37 {dimension_numbers = #tpu.dot_dimension_numbers<[1], [0], [0], [1], [0, 0, 1, 1], [], []>} : vector<128x128xbf16>, vector<128x6xbf16>, vector<128x6xf32> -> vector<128x6xf32>
    %59 = vector.extract_strided_slice %58 {offsets = [0, 0], sizes = [128, 3], strides = [1, 1]} : vector<128x6xf32> to vector<128x3xf32>
    %60 = vector.extract_strided_slice %58 {offsets = [0, 3], sizes = [128, 3], strides = [1, 1]} : vector<128x6xf32> to vector<128x3xf32>
    %61 = arith.addf %0, %59 : vector<128x3xf32>
    %62 = arith.addf %0, %60 : vector<128x3xf32>
    %63 = arith.truncf %61 : vector<128x3xf32> to vector<128x3xbf16>
    %c0_38 = arith.constant 0 : index
    %c0_39 = arith.constant 0 : index
    %64 = vector.load %arg4[%c0_38, %c0_39] : memref<3x128xf32, #tpu.memory_space<vmem>>, vector<3x128xf32>
    %65 = arith.truncf %64 : vector<3x128xf32> to vector<3x128xbf16>
    %cst_40 = arith.constant dense<0.000000e+00> : vector<128x128xf32>
    %66 = tpu.matmul %63, %65, %cst_40 {dimension_numbers = #tpu.dot_dimension_numbers<[1], [0], [0], [1], [0, 0, 1, 1], [], []>} : vector<128x3xbf16>, vector<3x128xbf16>, vector<128x128xf32> -> vector<128x128xf32>
    %67 = arith.truncf %62 : vector<128x3xf32> to vector<128x3xbf16>
    %c0_41 = arith.constant 0 : index
    %c0_42 = arith.constant 0 : index
    %68 = vector.load %arg5[%c0_41, %c0_42] : memref<3x128xf32, #tpu.memory_space<vmem>>, vector<3x128xf32>
    %69 = arith.truncf %68 : vector<3x128xf32> to vector<3x128xbf16>
    %cst_43 = arith.constant dense<0.000000e+00> : vector<128x128xf32>
    %70 = tpu.matmul %67, %69, %cst_43 {dimension_numbers = #tpu.dot_dimension_numbers<[1], [0], [0], [1], [0, 0, 1, 1], [], []>} : vector<128x3xbf16>, vector<3x128xbf16>, vector<128x128xf32> -> vector<128x128xf32>
    %71 = arith.addf %66, %70 : vector<128x128xf32>
    %72 = arith.addf %71, %14 : vector<128x128xf32>
    %cst_44 = arith.constant 0.000000e+00 : f32
    %73 = vector.broadcast %cst_44 : f32 to vector<128x128xf32>
    %74 = arith.maximumf %72, %73 : vector<128x128xf32>
    %75 = arith.truncf %61 : vector<128x3xf32> to vector<128x3xbf16>
    %c0_45 = arith.constant 0 : index
    %c0_46 = arith.constant 0 : index
    %76 = vector.load %arg11[%c0_45, %c0_46] : memref<3x128xf32, #tpu.memory_space<vmem>>, vector<3x128xf32>
    %77 = arith.truncf %76 : vector<3x128xf32> to vector<3x128xbf16>
    %cst_47 = arith.constant dense<0.000000e+00> : vector<128x128xf32>
    %78 = tpu.matmul %75, %77, %cst_47 {dimension_numbers = #tpu.dot_dimension_numbers<[1], [0], [0], [1], [0, 0, 1, 1], [], []>} : vector<128x3xbf16>, vector<3x128xbf16>, vector<128x128xf32> -> vector<128x128xf32>
    %79 = arith.truncf %62 : vector<128x3xf32> to vector<128x3xbf16>
    %c0_48 = arith.constant 0 : index
    %c0_49 = arith.constant 0 : index
    %80 = vector.load %arg12[%c0_48, %c0_49] : memref<3x128xf32, #tpu.memory_space<vmem>>, vector<3x128xf32>
    %81 = arith.truncf %80 : vector<3x128xf32> to vector<3x128xbf16>
    %cst_50 = arith.constant dense<0.000000e+00> : vector<128x128xf32>
    %82 = tpu.matmul %79, %81, %cst_50 {dimension_numbers = #tpu.dot_dimension_numbers<[1], [0], [0], [1], [0, 0, 1, 1], [], []>} : vector<128x3xbf16>, vector<3x128xbf16>, vector<128x128xf32> -> vector<128x128xf32>
    %83 = arith.addf %78, %82 : vector<128x128xf32>
    %84 = arith.truncf %74 : vector<128x128xf32> to vector<128x128xbf16>
    %c0_51 = arith.constant 0 : index
    %c0_52 = arith.constant 0 : index
    %85 = vector.load %arg10[%c0_51, %c0_52] : memref<128x128xf32, #tpu.memory_space<vmem>>, vector<128x128xf32>
    %86 = arith.truncf %85 : vector<128x128xf32> to vector<128x128xbf16>
    %cst_53 = arith.constant dense<0.000000e+00> : vector<128x128xf32>
    %87 = tpu.matmul %84, %86, %cst_53 {dimension_numbers = #tpu.dot_dimension_numbers<[1], [0], [0], [1], [0, 0, 1, 1], [], []>} : vector<128x128xbf16>, vector<128x128xbf16>, vector<128x128xf32> -> vector<128x128xf32>
    %88 = arith.addf %87, %83 : vector<128x128xf32>
    %89 = arith.addf %88, %26 : vector<128x128xf32>
    %cst_54 = arith.constant 0.000000e+00 : f32
    %90 = vector.broadcast %cst_54 : f32 to vector<128x128xf32>
    %91 = arith.maximumf %89, %90 : vector<128x128xf32>
    %92 = arith.truncf %91 : vector<128x128xf32> to vector<128x128xbf16>
    %c0_55 = arith.constant 0 : index
    %c0_56 = arith.constant 0 : index
    %93 = vector.load %arg17[%c0_55, %c0_56] : memref<128x128xf32, #tpu.memory_space<vmem>>, vector<128x128xf32>
    %94 = arith.truncf %93 : vector<128x128xf32> to vector<128x128xbf16>
    %cst_57 = arith.constant dense<0.000000e+00> : vector<128x128xf32>
    %95 = tpu.matmul %92, %94, %cst_57 {dimension_numbers = #tpu.dot_dimension_numbers<[1], [0], [0], [1], [0, 0, 1, 1], [], []>} : vector<128x128xbf16>, vector<128x128xbf16>, vector<128x128xf32> -> vector<128x128xf32>
    %c0_58 = arith.constant 0 : index
    %c0_59 = arith.constant 0 : index
    %96 = vector.load %arg18[%c0_58, %c0_59] : memref<1x128xf32, #tpu.memory_space<vmem>>, vector<1x128xf32>
    %97 = vector.broadcast %96 : vector<1x128xf32> to vector<128x128xf32>
    %98 = arith.addf %95, %97 : vector<128x128xf32>
    %cst_60 = arith.constant 0.000000e+00 : f32
    %99 = vector.broadcast %cst_60 : f32 to vector<128x128xf32>
    %100 = arith.maximumf %98, %99 : vector<128x128xf32>
    %101 = arith.truncf %100 : vector<128x128xf32> to vector<128x128xbf16>
    %c0_61 = arith.constant 0 : index
    %c0_62 = arith.constant 0 : index
    %102 = vector.load %arg19[%c0_61, %c0_62] : memref<128x6xf32, #tpu.memory_space<vmem>>, vector<128x6xf32>
    %103 = arith.truncf %102 : vector<128x6xf32> to vector<128x6xbf16>
    %cst_63 = arith.constant dense<0.000000e+00> : vector<128x6xf32>
    %104 = tpu.matmul %101, %103, %cst_63 {dimension_numbers = #tpu.dot_dimension_numbers<[1], [0], [0], [1], [0, 0, 1, 1], [], []>} : vector<128x128xbf16>, vector<128x6xbf16>, vector<128x6xf32> -> vector<128x6xf32>
    %105 = vector.extract_strided_slice %104 {offsets = [0, 0], sizes = [128, 3], strides = [1, 1]} : vector<128x6xf32> to vector<128x3xf32>
    %cst_64 = arith.constant 0.000000e+00 : f32
    %106 = vector.broadcast %cst_64 : f32 to vector<128x3xf32>
    %107 = arith.subf %106, %105 : vector<128x3xf32>
    %108 = vector.extract_strided_slice %104 {offsets = [0, 3], sizes = [128, 3], strides = [1, 1]} : vector<128x6xf32> to vector<128x3xf32>
    %cst_65 = arith.constant 0.000000e+00 : f32
    %109 = vector.broadcast %cst_65 : f32 to vector<128x3xf32>
    %110 = arith.subf %109, %108 : vector<128x3xf32>
    %c0_66 = arith.constant 0 : index
    %c0_67 = arith.constant 0 : index
    %111 = vector.load %arg46[%c0_66, %c0_67] : memref<128x33xf32, #tpu.memory_space<vmem>>, vector<128x3xf32>
    tpu.vector_store %arg46[%c0_66, %c0_67], %59 {strides = array<i32>} : memref<128x33xf32, #tpu.memory_space<vmem>>, vector<128x3xf32>,
    %c0_68 = arith.constant 0 : index
    %c3 = arith.constant 3 : index
    %112 = vector.load %arg46[%c0_68, %c3] : memref<128x33xf32, #tpu.memory_space<vmem>>, vector<128x3xf32>
    tpu.vector_store %arg46[%c0_68, %c3], %107 {strides = array<i32>} : memref<128x33xf32, #tpu.memory_space<vmem>>, vector<128x3xf32>,
    %c0_69 = arith.constant 0 : index
    %c6 = arith.constant 6 : index
    %113 = vector.load %arg46[%c0_69, %c6] : memref<128x33xf32, #tpu.memory_space<vmem>>, vector<128x3xf32>
    tpu.vector_store %arg46[%c0_69, %c6], %60 {strides = array<i32>} : memref<128x33xf32, #tpu.memory_space<vmem>>, vector<128x3xf32>,
    %c0_70 = arith.constant 0 : index
    %c9 = arith.constant 9 : index
    %114 = vector.load %arg46[%c0_70, %c9] : memref<128x33xf32, #tpu.memory_space<vmem>>, vector<128x3xf32>
    tpu.vector_store %arg46[%c0_70, %c9], %110 {strides = array<i32>} : memref<128x33xf32, #tpu.memory_space<vmem>>, vector<128x3xf32>,
    %c0_71 = arith.constant 0 : index
    %c1 = arith.constant 1 : index
    %115 = vector.load %arg3[%c0_71, %c1] : memref<128x2xf32, #tpu.memory_space<vmem>>, vector<128x1xf32>
    %c0_72 = arith.constant 0 : index
    %c0_73 = arith.constant 0 : index
    %116 = vector.load %arg23[%c0_72, %c0_73] : memref<1x128xf32, #tpu.memory_space<vmem>>, vector<1x128xf32>
    %117 = vector.broadcast %115 : vector<128x1xf32> to vector<128x128xf32>
    %118 = vector.broadcast %116 : vector<1x128xf32> to vector<128x128xf32>
    %119 = arith.mulf %117, %118 : vector<128x128xf32>
    %120 = arith.truncf %1 : vector<128x16xf32> to vector<128x16xbf16>
    %c0_74 = arith.constant 0 : index
    %c0_75 = arith.constant 0 : index
    %121 = vector.load %arg24[%c0_74, %c0_75] : memref<16x128xf32, #tpu.memory_space<vmem>>, vector<16x128xf32>
    %122 = arith.truncf %121 : vector<16x128xf32> to vector<16x128xbf16>
    %cst_76 = arith.constant dense<0.000000e+00> : vector<128x128xf32>
    %123 = tpu.matmul %120, %122, %cst_76 {dimension_numbers = #tpu.dot_dimension_numbers<[1], [0], [0], [1], [0, 0, 1, 1], [], []>} : vector<128x16xbf16>, vector<16x128xbf16>, vector<128x128xf32> -> vector<128x128xf32>
    %124 = arith.addf %119, %123 : vector<128x128xf32>
    %c0_77 = arith.constant 0 : index
    %c0_78 = arith.constant 0 : index
    %125 = vector.load %arg25[%c0_77, %c0_78] : memref<1x128xf32, #tpu.memory_space<vmem>>, vector<1x128xf32>
    %126 = vector.broadcast %125 : vector<1x128xf32> to vector<128x128xf32>
    %127 = arith.addf %124, %126 : vector<128x128xf32>
    %c0_79 = arith.constant 0 : index
    %c0_80 = arith.constant 0 : index
    %128 = vector.load %arg30[%c0_79, %c0_80] : memref<1x128xf32, #tpu.memory_space<vmem>>, vector<1x128xf32>
    %129 = vector.broadcast %115 : vector<128x1xf32> to vector<128x128xf32>
    %130 = vector.broadcast %128 : vector<1x128xf32> to vector<128x128xf32>
    %131 = arith.mulf %129, %130 : vector<128x128xf32>
    %132 = arith.truncf %1 : vector<128x16xf32> to vector<128x16xbf16>
    %c0_81 = arith.constant 0 : index
    %c0_82 = arith.constant 0 : index
    %133 = vector.load %arg31[%c0_81, %c0_82] : memref<16x128xf32, #tpu.memory_space<vmem>>, vector<16x128xf32>
    %134 = arith.truncf %133 : vector<16x128xf32> to vector<16x128xbf16>
    %cst_83 = arith.constant dense<0.000000e+00> : vector<128x128xf32>
    %135 = tpu.matmul %132, %134, %cst_83 {dimension_numbers = #tpu.dot_dimension_numbers<[1], [0], [0], [1], [0, 0, 1, 1], [], []>} : vector<128x16xbf16>, vector<16x128xbf16>, vector<128x128xf32> -> vector<128x128xf32>
    %136 = arith.addf %131, %135 : vector<128x128xf32>
    %c0_84 = arith.constant 0 : index
    %c0_85 = arith.constant 0 : index
    %137 = vector.load %arg32[%c0_84, %c0_85] : memref<1x128xf32, #tpu.memory_space<vmem>>, vector<1x128xf32>
    %138 = vector.broadcast %137 : vector<1x128xf32> to vector<128x128xf32>
    %139 = arith.addf %136, %138 : vector<128x128xf32>
    %140 = arith.truncf %0 : vector<128x3xf32> to vector<128x3xbf16>
    %c0_86 = arith.constant 0 : index
    %c0_87 = arith.constant 0 : index
    %141 = vector.load %arg22[%c0_86, %c0_87] : memref<3x128xf32, #tpu.memory_space<vmem>>, vector<3x128xf32>
    %142 = arith.truncf %141 : vector<3x128xf32> to vector<3x128xbf16>
    %cst_88 = arith.constant dense<0.000000e+00> : vector<128x128xf32>
    %143 = tpu.matmul %140, %142, %cst_88 {dimension_numbers = #tpu.dot_dimension_numbers<[1], [0], [0], [1], [0, 0, 1, 1], [], []>} : vector<128x3xbf16>, vector<3x128xbf16>, vector<128x128xf32> -> vector<128x128xf32>
    %144 = arith.addf %143, %127 : vector<128x128xf32>
    %cst_89 = arith.constant 0.000000e+00 : f32
    %145 = vector.broadcast %cst_89 : f32 to vector<128x128xf32>
    %146 = arith.maximumf %144, %145 : vector<128x128xf32>
    %147 = arith.truncf %0 : vector<128x3xf32> to vector<128x3xbf16>
    %c0_90 = arith.constant 0 : index
    %c0_91 = arith.constant 0 : index
    %148 = vector.load %arg29[%c0_90, %c0_91] : memref<3x128xf32, #tpu.memory_space<vmem>>, vector<3x128xf32>
    %149 = arith.truncf %148 : vector<3x128xf32> to vector<3x128xbf16>
    %cst_92 = arith.constant dense<0.000000e+00> : vector<128x128xf32>
    %150 = tpu.matmul %147, %149, %cst_92 {dimension_numbers = #tpu.dot_dimension_numbers<[1], [0], [0], [1], [0, 0, 1, 1], [], []>} : vector<128x3xbf16>, vector<3x128xbf16>, vector<128x128xf32> -> vector<128x128xf32>
    %151 = arith.truncf %146 : vector<128x128xf32> to vector<128x128xbf16>
    %c0_93 = arith.constant 0 : index
    %c0_94 = arith.constant 0 : index
    %152 = vector.load %arg26[%c0_93, %c0_94] : memref<128x128xf32, #tpu.memory_space<vmem>>, vector<128x128xf32>
    %153 = arith.truncf %152 : vector<128x128xf32> to vector<128x128xbf16>
    %cst_95 = arith.constant dense<0.000000e+00> : vector<128x128xf32>
    %154 = tpu.matmul %151, %153, %cst_95 {dimension_numbers = #tpu.dot_dimension_numbers<[1], [0], [0], [1], [0, 0, 1, 1], [], []>} : vector<128x128xbf16>, vector<128x128xbf16>, vector<128x128xf32> -> vector<128x128xf32>
    %155 = arith.addf %154, %150 : vector<128x128xf32>
    %156 = arith.addf %155, %139 : vector<128x128xf32>
    %cst_96 = arith.constant 0.000000e+00 : f32
    %157 = vector.broadcast %cst_96 : f32 to vector<128x128xf32>
    %158 = arith.maximumf %156, %157 : vector<128x128xf32>
    %159 = arith.truncf %158 : vector<128x128xf32> to vector<128x128xbf16>
    %c0_97 = arith.constant 0 : index
    %c0_98 = arith.constant 0 : index
    %160 = vector.load %arg33[%c0_97, %c0_98] : memref<128x128xf32, #tpu.memory_space<vmem>>, vector<128x128xf32>
    %161 = arith.truncf %160 : vector<128x128xf32> to vector<128x128xbf16>
    %cst_99 = arith.constant dense<0.000000e+00> : vector<128x128xf32>
    %162 = tpu.matmul %159, %161, %cst_99 {dimension_numbers = #tpu.dot_dimension_numbers<[1], [0], [0], [1], [0, 0, 1, 1], [], []>} : vector<128x128xbf16>, vector<128x128xbf16>, vector<128x128xf32> -> vector<128x128xf32>
    %c0_100 = arith.constant 0 : index
    %c0_101 = arith.constant 0 : index
    %163 = vector.load %arg34[%c0_100, %c0_101] : memref<1x128xf32, #tpu.memory_space<vmem>>, vector<1x128xf32>
    %164 = vector.broadcast %163 : vector<1x128xf32> to vector<128x128xf32>
    %165 = arith.addf %162, %164 : vector<128x128xf32>
    %cst_102 = arith.constant 0.000000e+00 : f32
    %166 = vector.broadcast %cst_102 : f32 to vector<128x128xf32>
    %167 = arith.maximumf %165, %166 : vector<128x128xf32>
    %168 = arith.truncf %167 : vector<128x128xf32> to vector<128x128xbf16>
    %c0_103 = arith.constant 0 : index
    %c0_104 = arith.constant 0 : index
    %169 = vector.load %arg35[%c0_103, %c0_104] : memref<128x6xf32, #tpu.memory_space<vmem>>, vector<128x6xf32>
    %170 = arith.truncf %169 : vector<128x6xf32> to vector<128x6xbf16>
    %cst_105 = arith.constant dense<0.000000e+00> : vector<128x6xf32>
    %171 = tpu.matmul %168, %170, %cst_105 {dimension_numbers = #tpu.dot_dimension_numbers<[1], [0], [0], [1], [0, 0, 1, 1], [], []>} : vector<128x128xbf16>, vector<128x6xbf16>, vector<128x6xf32> -> vector<128x6xf32>
    %172 = vector.extract_strided_slice %171 {offsets = [0, 0], sizes = [128, 3], strides = [1, 1]} : vector<128x6xf32> to vector<128x3xf32>
    %173 = vector.extract_strided_slice %171 {offsets = [0, 3], sizes = [128, 3], strides = [1, 1]} : vector<128x6xf32> to vector<128x3xf32>
    %174 = arith.addf %0, %172 : vector<128x3xf32>
    %175 = arith.addf %0, %173 : vector<128x3xf32>
    %176 = arith.truncf %174 : vector<128x3xf32> to vector<128x3xbf16>
    %c0_106 = arith.constant 0 : index
    %c0_107 = arith.constant 0 : index
    %177 = vector.load %arg20[%c0_106, %c0_107] : memref<3x128xf32, #tpu.memory_space<vmem>>, vector<3x128xf32>
    %178 = arith.truncf %177 : vector<3x128xf32> to vector<3x128xbf16>
    %cst_108 = arith.constant dense<0.000000e+00> : vector<128x128xf32>
    %179 = tpu.matmul %176, %178, %cst_108 {dimension_numbers = #tpu.dot_dimension_numbers<[1], [0], [0], [1], [0, 0, 1, 1], [], []>} : vector<128x3xbf16>, vector<3x128xbf16>, vector<128x128xf32> -> vector<128x128xf32>
    %180 = arith.truncf %175 : vector<128x3xf32> to vector<128x3xbf16>
    %c0_109 = arith.constant 0 : index
    %c0_110 = arith.constant 0 : index
    %181 = vector.load %arg21[%c0_109, %c0_110] : memref<3x128xf32, #tpu.memory_space<vmem>>, vector<3x128xf32>
    %182 = arith.truncf %181 : vector<3x128xf32> to vector<3x128xbf16>
    %cst_111 = arith.constant dense<0.000000e+00> : vector<128x128xf32>
    %183 = tpu.matmul %180, %182, %cst_111 {dimension_numbers = #tpu.dot_dimension_numbers<[1], [0], [0], [1], [0, 0, 1, 1], [], []>} : vector<128x3xbf16>, vector<3x128xbf16>, vector<128x128xf32> -> vector<128x128xf32>
    %184 = arith.addf %179, %183 : vector<128x128xf32>
    %185 = arith.addf %184, %127 : vector<128x128xf32>
    %cst_112 = arith.constant 0.000000e+00 : f32
    %186 = vector.broadcast %cst_112 : f32 to vector<128x128xf32>
    %187 = arith.maximumf %185, %186 : vector<128x128xf32>
    %188 = arith.truncf %174 : vector<128x3xf32> to vector<128x3xbf16>
    %c0_113 = arith.constant 0 : index
    %c0_114 = arith.constant 0 : index
    %189 = vector.load %arg27[%c0_113, %c0_114] : memref<3x128xf32, #tpu.memory_space<vmem>>, vector<3x128xf32>
    %190 = arith.truncf %189 : vector<3x128xf32> to vector<3x128xbf16>
    %cst_115 = arith.constant dense<0.000000e+00> : vector<128x128xf32>
    %191 = tpu.matmul %188, %190, %cst_115 {dimension_numbers = #tpu.dot_dimension_numbers<[1], [0], [0], [1], [0, 0, 1, 1], [], []>} : vector<128x3xbf16>, vector<3x128xbf16>, vector<128x128xf32> -> vector<128x128xf32>
    %192 = arith.truncf %175 : vector<128x3xf32> to vector<128x3xbf16>
    %c0_116 = arith.constant 0 : index
    %c0_117 = arith.constant 0 : index
    %193 = vector.load %arg28[%c0_116, %c0_117] : memref<3x128xf32, #tpu.memory_space<vmem>>, vector<3x128xf32>
    %194 = arith.truncf %193 : vector<3x128xf32> to vector<3x128xbf16>
    %cst_118 = arith.constant dense<0.000000e+00> : vector<128x128xf32>
    %195 = tpu.matmul %192, %194, %cst_118 {dimension_numbers = #tpu.dot_dimension_numbers<[1], [0], [0], [1], [0, 0, 1, 1], [], []>} : vector<128x3xbf16>, vector<3x128xbf16>, vector<128x128xf32> -> vector<128x128xf32>
    %196 = arith.addf %191, %195 : vector<128x128xf32>
    %197 = arith.truncf %187 : vector<128x128xf32> to vector<128x128xbf16>
    %c0_119 = arith.constant 0 : index
    %c0_120 = arith.constant 0 : index
    %198 = vector.load %arg26[%c0_119, %c0_120] : memref<128x128xf32, #tpu.memory_space<vmem>>, vector<128x128xf32>
    %199 = arith.truncf %198 : vector<128x128xf32> to vector<128x128xbf16>
    %cst_121 = arith.constant dense<0.000000e+00> : vector<128x128xf32>
    %200 = tpu.matmul %197, %199, %cst_121 {dimension_numbers = #tpu.dot_dimension_numbers<[1], [0], [0], [1], [0, 0, 1, 1], [], []>} : vector<128x128xbf16>, vector<128x128xbf16>, vector<128x128xf32> -> vector<128x128xf32>
    %201 = arith.addf %200, %196 : vector<128x128xf32>
    %202 = arith.addf %201, %139 : vector<128x128xf32>
    %cst_122 = arith.constant 0.000000e+00 : f32
    %203 = vector.broadcast %cst_122 : f32 to vector<128x128xf32>
    %204 = arith.maximumf %202, %203 : vector<128x128xf32>
    %205 = arith.truncf %204 : vector<128x128xf32> to vector<128x128xbf16>
    %c0_123 = arith.constant 0 : index
    %c0_124 = arith.constant 0 : index
    %206 = vector.load %arg33[%c0_123, %c0_124] : memref<128x128xf32, #tpu.memory_space<vmem>>, vector<128x128xf32>
    %207 = arith.truncf %206 : vector<128x128xf32> to vector<128x128xbf16>
    %cst_125 = arith.constant dense<0.000000e+00> : vector<128x128xf32>
    %208 = tpu.matmul %205, %207, %cst_125 {dimension_numbers = #tpu.dot_dimension_numbers<[1], [0], [0], [1], [0, 0, 1, 1], [], []>} : vector<128x128xbf16>, vector<128x128xbf16>, vector<128x128xf32> -> vector<128x128xf32>
    %c0_126 = arith.constant 0 : index
    %c0_127 = arith.constant 0 : index
    %209 = vector.load %arg34[%c0_126, %c0_127] : memref<1x128xf32, #tpu.memory_space<vmem>>, vector<1x128xf32>
    %210 = vector.broadcast %209 : vector<1x128xf32> to vector<128x128xf32>
    %211 = arith.addf %208, %210 : vector<128x128xf32>
    %cst_128 = arith.constant 0.000000e+00 : f32
    %212 = vector.broadcast %cst_128 : f32 to vector<128x128xf32>
    %213 = arith.maximumf %211, %212 : vector<128x128xf32>
    %214 = arith.truncf %213 : vector<128x128xf32> to vector<128x128xbf16>
    %c0_129 = arith.constant 0 : index
    %c0_130 = arith.constant 0 : index
    %215 = vector.load %arg35[%c0_129, %c0_130] : memref<128x6xf32, #tpu.memory_space<vmem>>, vector<128x6xf32>
    %216 = arith.truncf %215 : vector<128x6xf32> to vector<128x6xbf16>
    %cst_131 = arith.constant dense<0.000000e+00> : vector<128x6xf32>
    %217 = tpu.matmul %214, %216, %cst_131 {dimension_numbers = #tpu.dot_dimension_numbers<[1], [0], [0], [1], [0, 0, 1, 1], [], []>} : vector<128x128xbf16>, vector<128x6xbf16>, vector<128x6xf32> -> vector<128x6xf32>
    %218 = vector.extract_strided_slice %217 {offsets = [0, 0], sizes = [128, 3], strides = [1, 1]} : vector<128x6xf32> to vector<128x3xf32>
    %cst_132 = arith.constant 0.000000e+00 : f32
    %219 = vector.broadcast %cst_132 : f32 to vector<128x3xf32>
    %220 = arith.subf %219, %218 : vector<128x3xf32>
    %221 = vector.extract_strided_slice %217 {offsets = [0, 3], sizes = [128, 3], strides = [1, 1]} : vector<128x6xf32> to vector<128x3xf32>
    %cst_133 = arith.constant 0.000000e+00 : f32
    %222 = vector.broadcast %cst_133 : f32 to vector<128x3xf32>
    %223 = arith.subf %222, %221 : vector<128x3xf32>
    %c0_134 = arith.constant 0 : index
    %c12 = arith.constant 12 : index
    %224 = vector.load %arg46[%c0_134, %c12] : memref<128x33xf32, #tpu.memory_space<vmem>>, vector<128x3xf32>
    tpu.vector_store %arg46[%c0_134, %c12], %172 {strides = array<i32>} : memref<128x33xf32, #tpu.memory_space<vmem>>, vector<128x3xf32>,
    %c0_135 = arith.constant 0 : index
    %c15 = arith.constant 15 : index
    %225 = vector.load %arg46[%c0_135, %c15] : memref<128x33xf32, #tpu.memory_space<vmem>>, vector<128x3xf32>
    tpu.vector_store %arg46[%c0_135, %c15], %220 {strides = array<i32>} : memref<128x33xf32, #tpu.memory_space<vmem>>, vector<128x3xf32>,
    %c0_136 = arith.constant 0 : index
    %c18 = arith.constant 18 : index
    %226 = vector.load %arg46[%c0_136, %c18] : memref<128x33xf32, #tpu.memory_space<vmem>>, vector<128x3xf32>
    tpu.vector_store %arg46[%c0_136, %c18], %173 {strides = array<i32>} : memref<128x33xf32, #tpu.memory_space<vmem>>, vector<128x3xf32>,
    %c0_137 = arith.constant 0 : index
    %c21 = arith.constant 21 : index
    %227 = vector.load %arg46[%c0_137, %c21] : memref<128x33xf32, #tpu.memory_space<vmem>>, vector<128x3xf32>
    tpu.vector_store %arg46[%c0_137, %c21], %223 {strides = array<i32>} : memref<128x33xf32, #tpu.memory_space<vmem>>, vector<128x3xf32>,
    %228 = arith.addf %59, %172 : vector<128x3xf32>
    %229 = arith.addf %60, %173 : vector<128x3xf32>
    %c0_138 = arith.constant 0 : index
    %c24 = arith.constant 24 : index
    %230 = vector.load %arg46[%c0_138, %c24] : memref<128x33xf32, #tpu.memory_space<vmem>>, vector<128x3xf32>
    tpu.vector_store %arg46[%c0_138, %c24], %228 {strides = array<i32>} : memref<128x33xf32, #tpu.memory_space<vmem>>, vector<128x3xf32>,
    %c0_139 = arith.constant 0 : index
    %c27 = arith.constant 27 : index
    %231 = vector.load %arg46[%c0_139, %c27] : memref<128x33xf32, #tpu.memory_space<vmem>>, vector<128x3xf32>
    tpu.vector_store %arg46[%c0_139, %c27], %229 {strides = array<i32>} : memref<128x33xf32, #tpu.memory_space<vmem>>, vector<128x3xf32>,
    %232 = arith.addf %228, %0 : vector<128x3xf32>
    %233 = arith.truncf %232 : vector<128x3xf32> to vector<128x3xbf16>
    %c0_140 = arith.constant 0 : index
    %c0_141 = arith.constant 0 : index
    %234 = vector.load %arg36[%c0_140, %c0_141] : memref<3x96xf32, #tpu.memory_space<vmem>>, vector<3x96xf32>
    %235 = arith.truncf %234 : vector<3x96xf32> to vector<3x96xbf16>
    %cst_142 = arith.constant dense<0.000000e+00> : vector<128x96xf32>
    %236 = tpu.matmul %233, %235, %cst_142 {dimension_numbers = #tpu.dot_dimension_numbers<[1], [0], [0], [1], [0, 0, 1, 1], [], []>} : vector<128x3xbf16>, vector<3x96xbf16>, vector<128x96xf32> -> vector<128x96xf32>
    %237 = arith.addf %229, %0 : vector<128x3xf32>
    %238 = arith.truncf %237 : vector<128x3xf32> to vector<128x3xbf16>
    %c0_143 = arith.constant 0 : index
    %c0_144 = arith.constant 0 : index
    %239 = vector.load %arg37[%c0_143, %c0_144] : memref<3x96xf32, #tpu.memory_space<vmem>>, vector<3x96xf32>
    %240 = arith.truncf %239 : vector<3x96xf32> to vector<3x96xbf16>
    %cst_145 = arith.constant dense<0.000000e+00> : vector<128x96xf32>
    %241 = tpu.matmul %238, %240, %cst_145 {dimension_numbers = #tpu.dot_dimension_numbers<[1], [0], [0], [1], [0, 0, 1, 1], [], []>} : vector<128x3xbf16>, vector<3x96xbf16>, vector<128x96xf32> -> vector<128x96xf32>
    %242 = arith.addf %236, %241 : vector<128x96xf32>
    %243 = arith.truncf %0 : vector<128x3xf32> to vector<128x3xbf16>
    %c0_146 = arith.constant 0 : index
    %c0_147 = arith.constant 0 : index
    %244 = vector.load %arg38[%c0_146, %c0_147] : memref<3x96xf32, #tpu.memory_space<vmem>>, vector<3x96xf32>
    %245 = arith.truncf %244 : vector<3x96xf32> to vector<3x96xbf16>
    %cst_148 = arith.constant dense<0.000000e+00> : vector<128x96xf32>
    %246 = tpu.matmul %243, %245, %cst_148 {dimension_numbers = #tpu.dot_dimension_numbers<[1], [0], [0], [1], [0, 0, 1, 1], [], []>} : vector<128x3xbf16>, vector<3x96xbf16>, vector<128x96xf32> -> vector<128x96xf32>
    %247 = arith.addf %242, %246 : vector<128x96xf32>
    %c0_149 = arith.constant 0 : index
    %c0_150 = arith.constant 0 : index
    %248 = vector.load %arg39[%c0_149, %c0_150] : memref<1x96xf32, #tpu.memory_space<vmem>>, vector<1x96xf32>
    %249 = vector.broadcast %248 : vector<1x96xf32> to vector<128x96xf32>
    %250 = arith.addf %247, %249 : vector<128x96xf32>
    %cst_151 = arith.constant 0.000000e+00 : f32
    %251 = vector.broadcast %cst_151 : f32 to vector<128x96xf32>
    %252 = arith.maximumf %250, %251 : vector<128x96xf32>
    %253 = arith.truncf %252 : vector<128x96xf32> to vector<128x96xbf16>
    %c0_152 = arith.constant 0 : index
    %c0_153 = arith.constant 0 : index
    %254 = vector.load %arg40[%c0_152, %c0_153] : memref<96x96xf32, #tpu.memory_space<vmem>>, vector<96x96xf32>
    %255 = arith.truncf %254 : vector<96x96xf32> to vector<96x96xbf16>
    %cst_154 = arith.constant dense<0.000000e+00> : vector<128x96xf32>
    %256 = tpu.matmul %253, %255, %cst_154 {dimension_numbers = #tpu.dot_dimension_numbers<[1], [0], [0], [1], [0, 0, 1, 1], [], []>} : vector<128x96xbf16>, vector<96x96xbf16>, vector<128x96xf32> -> vector<128x96xf32>
    %c0_155 = arith.constant 0 : index
    %c0_156 = arith.constant 0 : index
    %257 = vector.load %arg41[%c0_155, %c0_156] : memref<1x96xf32, #tpu.memory_space<vmem>>, vector<1x96xf32>
    %258 = vector.broadcast %257 : vector<1x96xf32> to vector<128x96xf32>
    %259 = arith.addf %256, %258 : vector<128x96xf32>
    %cst_157 = arith.constant 0.000000e+00 : f32
    %260 = vector.broadcast %cst_157 : f32 to vector<128x96xf32>
    %261 = arith.maximumf %259, %260 : vector<128x96xf32>
    %262 = arith.truncf %261 : vector<128x96xf32> to vector<128x96xbf16>
    %c0_158 = arith.constant 0 : index
    %c0_159 = arith.constant 0 : index
    %263 = vector.load %arg42[%c0_158, %c0_159] : memref<96x96xf32, #tpu.memory_space<vmem>>, vector<96x96xf32>
    %264 = arith.truncf %263 : vector<96x96xf32> to vector<96x96xbf16>
    %cst_160 = arith.constant dense<0.000000e+00> : vector<128x96xf32>
    %265 = tpu.matmul %262, %264, %cst_160 {dimension_numbers = #tpu.dot_dimension_numbers<[1], [0], [0], [1], [0, 0, 1, 1], [], []>} : vector<128x96xbf16>, vector<96x96xbf16>, vector<128x96xf32> -> vector<128x96xf32>
    %c0_161 = arith.constant 0 : index
    %c0_162 = arith.constant 0 : index
    %266 = vector.load %arg43[%c0_161, %c0_162] : memref<1x96xf32, #tpu.memory_space<vmem>>, vector<1x96xf32>
    %267 = vector.broadcast %266 : vector<1x96xf32> to vector<128x96xf32>
    %268 = arith.addf %265, %267 : vector<128x96xf32>
    %cst_163 = arith.constant 0.000000e+00 : f32
    %269 = vector.broadcast %cst_163 : f32 to vector<128x96xf32>
    %270 = arith.maximumf %268, %269 : vector<128x96xf32>
    %271 = arith.truncf %270 : vector<128x96xf32> to vector<128x96xbf16>
    %c0_164 = arith.constant 0 : index
    %c0_165 = arith.constant 0 : index
    %272 = vector.load %arg44[%c0_164, %c0_165] : memref<96x3xf32, #tpu.memory_space<vmem>>, vector<96x3xf32>
    %273 = arith.truncf %272 : vector<96x3xf32> to vector<96x3xbf16>
    %cst_166 = arith.constant dense<0.000000e+00> : vector<128x3xf32>
    %274 = tpu.matmul %271, %273, %cst_166 {dimension_numbers = #tpu.dot_dimension_numbers<[1], [0], [0], [1], [0, 0, 1, 1], [], []>} : vector<128x96xbf16>, vector<96x3xbf16>, vector<128x3xf32> -> vector<128x3xf32>
    %c0_167 = arith.constant 0 : index
    %c0_168 = arith.constant 0 : index
    %275 = vector.load %arg45[%c0_167, %c0_168] : memref<1x3xf32, #tpu.memory_space<vmem>>, vector<1x3xf32>
    %276 = vector.broadcast %275 : vector<1x3xf32> to vector<128x3xf32>
    %277 = arith.addf %274, %276 : vector<128x3xf32>
    %cst_169 = arith.constant 0.000000e+00 : f32
    %278 = vector.broadcast %cst_169 : f32 to vector<128x3xf32>
    %279 = arith.maximumf %277, %278 : vector<128x3xf32>
    %c0_170 = arith.constant 0 : index
    %c30 = arith.constant 30 : index
    %280 = vector.load %arg46[%c0_170, %c30] : memref<128x33xf32, #tpu.memory_space<vmem>>, vector<128x3xf32>
    tpu.vector_store %arg46[%c0_170, %c30], %279 {strides = array<i32>} : memref<128x33xf32, #tpu.memory_space<vmem>>, vector<128x3xf32>,
    return
  }
  func.func @transform_0(%arg0: i32) -> (i32, i32) {
    %c0_i32 = arith.constant 0 : i32
    %c0_i32_0 = arith.constant 0 : i32
    return %arg0, %c0_i32 : i32, i32
  }
  func.func @transform_1(%arg0: i32) -> (i32, i32) {
    %c0_i32 = arith.constant 0 : i32
    %c0_i32_0 = arith.constant 0 : i32
    return %arg0, %c0_i32 : i32, i32
  }
  func.func @transform_2(%arg0: i32) -> (i32, i32) {
    %c0_i32 = arith.constant 0 : i32
    %c0_i32_0 = arith.constant 0 : i32
    return %arg0, %c0_i32 : i32, i32
  }
  func.func @transform_3(%arg0: i32) -> (i32, i32) {
    %c0_i32 = arith.constant 0 : i32
    %c0_i32_0 = arith.constant 0 : i32
    %c0_i32_1 = arith.constant 0 : i32
    return %c0_i32, %c0_i32_0 : i32, i32
  }
  func.func @transform_4(%arg0: i32) -> (i32, i32) {
    %c0_i32 = arith.constant 0 : i32
    %c0_i32_0 = arith.constant 0 : i32
    %c0_i32_1 = arith.constant 0 : i32
    return %c0_i32, %c0_i32_0 : i32, i32
  }
  func.func @transform_5(%arg0: i32) -> (i32, i32) {
    %c0_i32 = arith.constant 0 : i32
    %c0_i32_0 = arith.constant 0 : i32
    %c0_i32_1 = arith.constant 0 : i32
    return %c0_i32, %c0_i32_0 : i32, i32
  }
  func.func @transform_6(%arg0: i32) -> (i32, i32) {
    %c0_i32 = arith.constant 0 : i32
    %c0_i32_0 = arith.constant 0 : i32
    %c0_i32_1 = arith.constant 0 : i32
    return %c0_i32, %c0_i32_0 : i32, i32
  }
  func.func @transform_7(%arg0: i32) -> (i32, i32) {
    %c0_i32 = arith.constant 0 : i32
    %c0_i32_0 = arith.constant 0 : i32
    %c0_i32_1 = arith.constant 0 : i32
    return %c0_i32, %c0_i32_0 : i32, i32
  }
  func.func @transform_8(%arg0: i32) -> (i32, i32) {
    %c0_i32 = arith.constant 0 : i32
    %c0_i32_0 = arith.constant 0 : i32
    %c0_i32_1 = arith.constant 0 : i32
    return %c0_i32, %c0_i32_0 : i32, i32
  }
  func.func @transform_9(%arg0: i32) -> (i32, i32) {
    %c0_i32 = arith.constant 0 : i32
    %c0_i32_0 = arith.constant 0 : i32
    %c0_i32_1 = arith.constant 0 : i32
    return %c0_i32, %c0_i32_0 : i32, i32
  }
  func.func @transform_10(%arg0: i32) -> (i32, i32) {
    %c0_i32 = arith.constant 0 : i32
    %c0_i32_0 = arith.constant 0 : i32
    %c0_i32_1 = arith.constant 0 : i32
    return %c0_i32, %c0_i32_0 : i32, i32
  }
  func.func @transform_11(%arg0: i32) -> (i32, i32) {
    %c0_i32 = arith.constant 0 : i32
    %c0_i32_0 = arith.constant 0 : i32
    %c0_i32_1 = arith.constant 0 : i32
    return %c0_i32, %c0_i32_0 : i32, i32
  }
  func.func @transform_12(%arg0: i32) -> (i32, i32) {
    %c0_i32 = arith.constant 0 : i32
    %c0_i32_0 = arith.constant 0 : i32
    %c0_i32_1 = arith.constant 0 : i32
    return %c0_i32, %c0_i32_0 : i32, i32
  }
  func.func @transform_13(%arg0: i32) -> (i32, i32) {
    %c0_i32 = arith.constant 0 : i32
    %c0_i32_0 = arith.constant 0 : i32
    %c0_i32_1 = arith.constant 0 : i32
    return %c0_i32, %c0_i32_0 : i32, i32
  }
  func.func @transform_14(%arg0: i32) -> (i32, i32) {
    %c0_i32 = arith.constant 0 : i32
    %c0_i32_0 = arith.constant 0 : i32
    %c0_i32_1 = arith.constant 0 : i32
    return %c0_i32, %c0_i32_0 : i32, i32
  }
  func.func @transform_15(%arg0: i32) -> (i32, i32) {
    %c0_i32 = arith.constant 0 : i32
    %c0_i32_0 = arith.constant 0 : i32
    %c0_i32_1 = arith.constant 0 : i32
    return %c0_i32, %c0_i32_0 : i32, i32
  }
  func.func @transform_16(%arg0: i32) -> (i32, i32) {
    %c0_i32 = arith.constant 0 : i32
    %c0_i32_0 = arith.constant 0 : i32
    %c0_i32_1 = arith.constant 0 : i32
    return %c0_i32, %c0_i32_0 : i32, i32
  }
  func.func @transform_17(%arg0: i32) -> (i32, i32) {
    %c0_i32 = arith.constant 0 : i32
    %c0_i32_0 = arith.constant 0 : i32
    %c0_i32_1 = arith.constant 0 : i32
    return %c0_i32, %c0_i32_0 : i32, i32
  }
  func.func @transform_18(%arg0: i32) -> (i32, i32) {
    %c0_i32 = arith.constant 0 : i32
    %c0_i32_0 = arith.constant 0 : i32
    %c0_i32_1 = arith.constant 0 : i32
    return %c0_i32, %c0_i32_0 : i32, i32
  }
  func.func @transform_19(%arg0: i32) -> (i32, i32) {
    %c0_i32 = arith.constant 0 : i32
    %c0_i32_0 = arith.constant 0 : i32
    %c0_i32_1 = arith.constant 0 : i32
    return %c0_i32, %c0_i32_0 : i32, i32
  }
  func.func @transform_20(%arg0: i32) -> (i32, i32) {
    %c0_i32 = arith.constant 0 : i32
    %c0_i32_0 = arith.constant 0 : i32
    %c0_i32_1 = arith.constant 0 : i32
    return %c0_i32, %c0_i32_0 : i32, i32
  }
  func.func @transform_21(%arg0: i32) -> (i32, i32) {
    %c0_i32 = arith.constant 0 : i32
    %c0_i32_0 = arith.constant 0 : i32
    %c0_i32_1 = arith.constant 0 : i32
    return %c0_i32, %c0_i32_0 : i32, i32
  }
  func.func @transform_22(%arg0: i32) -> (i32, i32) {
    %c0_i32 = arith.constant 0 : i32
    %c0_i32_0 = arith.constant 0 : i32
    %c0_i32_1 = arith.constant 0 : i32
    return %c0_i32, %c0_i32_0 : i32, i32
  }
  func.func @transform_23(%arg0: i32) -> (i32, i32) {
    %c0_i32 = arith.constant 0 : i32
    %c0_i32_0 = arith.constant 0 : i32
    %c0_i32_1 = arith.constant 0 : i32
    return %c0_i32, %c0_i32_0 : i32, i32
  }
  func.func @transform_24(%arg0: i32) -> (i32, i32) {
    %c0_i32 = arith.constant 0 : i32
    %c0_i32_0 = arith.constant 0 : i32
    %c0_i32_1 = arith.constant 0 : i32
    return %c0_i32, %c0_i32_0 : i32, i32
  }
  func.func @transform_25(%arg0: i32) -> (i32, i32) {
    %c0_i32 = arith.constant 0 : i32
    %c0_i32_0 = arith.constant 0 : i32
    %c0_i32_1 = arith.constant 0 : i32
    return %c0_i32, %c0_i32_0 : i32, i32
  }
  func.func @transform_26(%arg0: i32) -> (i32, i32) {
    %c0_i32 = arith.constant 0 : i32
    %c0_i32_0 = arith.constant 0 : i32
    %c0_i32_1 = arith.constant 0 : i32
    return %c0_i32, %c0_i32_0 : i32, i32
  }
  func.func @transform_27(%arg0: i32) -> (i32, i32) {
    %c0_i32 = arith.constant 0 : i32
    %c0_i32_0 = arith.constant 0 : i32
    %c0_i32_1 = arith.constant 0 : i32
    return %c0_i32, %c0_i32_0 : i32, i32
  }
  func.func @transform_28(%arg0: i32) -> (i32, i32) {
    %c0_i32 = arith.constant 0 : i32
    %c0_i32_0 = arith.constant 0 : i32
    %c0_i32_1 = arith.constant 0 : i32
    return %c0_i32, %c0_i32_0 : i32, i32
  }
  func.func @transform_29(%arg0: i32) -> (i32, i32) {
    %c0_i32 = arith.constant 0 : i32
    %c0_i32_0 = arith.constant 0 : i32
    %c0_i32_1 = arith.constant 0 : i32
    return %c0_i32, %c0_i32_0 : i32, i32
  }
  func.func @transform_30(%arg0: i32) -> (i32, i32) {
    %c0_i32 = arith.constant 0 : i32
    %c0_i32_0 = arith.constant 0 : i32
    %c0_i32_1 = arith.constant 0 : i32
    return %c0_i32, %c0_i32_0 : i32, i32
  }
  func.func @transform_31(%arg0: i32) -> (i32, i32) {
    %c0_i32 = arith.constant 0 : i32
    %c0_i32_0 = arith.constant 0 : i32
    %c0_i32_1 = arith.constant 0 : i32
    return %c0_i32, %c0_i32_0 : i32, i32
  }
  func.func @transform_32(%arg0: i32) -> (i32, i32) {
    %c0_i32 = arith.constant 0 : i32
    %c0_i32_0 = arith.constant 0 : i32
    %c0_i32_1 = arith.constant 0 : i32
    return %c0_i32, %c0_i32_0 : i32, i32
  }
  func.func @transform_33(%arg0: i32) -> (i32, i32) {
    %c0_i32 = arith.constant 0 : i32
    %c0_i32_0 = arith.constant 0 : i32
    %c0_i32_1 = arith.constant 0 : i32
    return %c0_i32, %c0_i32_0 : i32, i32
  }
  func.func @transform_34(%arg0: i32) -> (i32, i32) {
    %c0_i32 = arith.constant 0 : i32
    %c0_i32_0 = arith.constant 0 : i32
    %c0_i32_1 = arith.constant 0 : i32
    return %c0_i32, %c0_i32_0 : i32, i32
  }
  func.func @transform_35(%arg0: i32) -> (i32, i32) {
    %c0_i32 = arith.constant 0 : i32
    %c0_i32_0 = arith.constant 0 : i32
    %c0_i32_1 = arith.constant 0 : i32
    return %c0_i32, %c0_i32_0 : i32, i32
  }
  func.func @transform_36(%arg0: i32) -> (i32, i32) {
    %c0_i32 = arith.constant 0 : i32
    %c0_i32_0 = arith.constant 0 : i32
    %c0_i32_1 = arith.constant 0 : i32
    return %c0_i32, %c0_i32_0 : i32, i32
  }
  func.func @transform_37(%arg0: i32) -> (i32, i32) {
    %c0_i32 = arith.constant 0 : i32
    %c0_i32_0 = arith.constant 0 : i32
    %c0_i32_1 = arith.constant 0 : i32
    return %c0_i32, %c0_i32_0 : i32, i32
  }
  func.func @transform_38(%arg0: i32) -> (i32, i32) {
    %c0_i32 = arith.constant 0 : i32
    %c0_i32_0 = arith.constant 0 : i32
    %c0_i32_1 = arith.constant 0 : i32
    return %c0_i32, %c0_i32_0 : i32, i32
  }
  func.func @transform_39(%arg0: i32) -> (i32, i32) {
    %c0_i32 = arith.constant 0 : i32
    %c0_i32_0 = arith.constant 0 : i32
    %c0_i32_1 = arith.constant 0 : i32
    return %c0_i32, %c0_i32_0 : i32, i32
  }
  func.func @transform_40(%arg0: i32) -> (i32, i32) {
    %c0_i32 = arith.constant 0 : i32
    %c0_i32_0 = arith.constant 0 : i32
    %c0_i32_1 = arith.constant 0 : i32
    return %c0_i32, %c0_i32_0 : i32, i32
  }
  func.func @transform_41(%arg0: i32) -> (i32, i32) {
    %c0_i32 = arith.constant 0 : i32
    %c0_i32_0 = arith.constant 0 : i32
    %c0_i32_1 = arith.constant 0 : i32
    return %c0_i32, %c0_i32_0 : i32, i32
  }
  func.func @transform_42(%arg0: i32) -> (i32, i32) {
    %c0_i32 = arith.constant 0 : i32
    %c0_i32_0 = arith.constant 0 : i32
    %c0_i32_1 = arith.constant 0 : i32
    return %c0_i32, %c0_i32_0 : i32, i32
  }
  func.func @transform_43(%arg0: i32) -> (i32, i32) {
    %c0_i32 = arith.constant 0 : i32
    %c0_i32_0 = arith.constant 0 : i32
    %c0_i32_1 = arith.constant 0 : i32
    return %c0_i32, %c0_i32_0 : i32, i32
  }
  func.func @transform_44(%arg0: i32) -> (i32, i32) {
    %c0_i32 = arith.constant 0 : i32
    %c0_i32_0 = arith.constant 0 : i32
    %c0_i32_1 = arith.constant 0 : i32
    return %c0_i32, %c0_i32_0 : i32, i32
  }
  func.func @transform_45(%arg0: i32) -> (i32, i32) {
    %c0_i32 = arith.constant 0 : i32
    %c0_i32_0 = arith.constant 0 : i32
    return %arg0, %c0_i32 : i32, i32
  }
}

</mosaic_0001>

<llo_original>
// kernel: deep_naigsr_forward.1
$region0: #{deep_naigsr_forward.1}
  #allocation0 [shape = 'u32[]', space=smem, size = 0x4, offset = 0x4, fixed_abs, tag = 'smem constant byte address 0x4 - core index']
  #allocation1 [shape = 'u32[72,128]{1,0:T(1,128)}', space=vmem, size = 0x9000, scoped, tag = 'internal scratch']
  %s0 = inlined_call_operand.smem [shape: u32[46], index: -1, kind: input, shape index: {}]
  %s1 = sld [smem:[%s0]]
  %s2 = scalar_lea.smem %s0, 1
  %s3 = sld [smem:[%s2]]
  %s4 = scalar_lea.smem %s0, 2
  %s5 = sld [smem:[%s4]]
  %s6 = scalar_lea.smem %s0, 3
  %s7 = sld [smem:[%s6]]
  %s8 = scalar_lea.smem %s0, 4
  %s9 = sld [smem:[%s8]]
  %s10 = scalar_lea.smem %s0, 5
  %s11 = sld [smem:[%s10]]
  %s12 = scalar_lea.smem %s0, 6
  %s13 = sld [smem:[%s12]]
  %s14 = scalar_lea.smem %s0, 7
  %s15 = sld [smem:[%s14]]
  %s16 = scalar_lea.smem %s0, 8
  %s17 = sld [smem:[%s16]]
  %s18 = scalar_lea.smem %s0, 9
  %s19 = sld [smem:[%s18]]
  %s20 = scalar_lea.smem %s0, 10
  %s21 = sld [smem:[%s20]]
  %s22 = scalar_lea.smem %s0, 11
  %s23 = sld [smem:[%s22]]
  %s24 = scalar_lea.smem %s0, 12
  %s25 = sld [smem:[%s24]]
  %s26 = scalar_lea.smem %s0, 13
  %s27 = sld [smem:[%s26]]
  %s28 = scalar_lea.smem %s0, 14
  %s29 = sld [smem:[%s28]]
  %s30 = scalar_lea.smem %s0, 15
  %s31 = sld [smem:[%s30]]
  %s32 = scalar_lea.smem %s0, 16
  %s33 = sld [smem:[%s32]]
  %s34 = scalar_lea.smem %s0, 17
  %s35 = sld [smem:[%s34]]
  %s36 = scalar_lea.smem %s0, 18
  %s37 = sld [smem:[%s36]]
  %s38 = scalar_lea.smem %s0, 19
  %s39 = sld [smem:[%s38]]
  %s40 = scalar_lea.smem %s0, 20
  %s41 = sld [smem:[%s40]]
  %s42 = scalar_lea.smem %s0, 21
  %s43 = sld [smem:[%s42]]
  %s44 = scalar_lea.smem %s0, 22
  %s45 = sld [smem:[%s44]]
  %s46 = scalar_lea.smem %s0, 23
  %s47 = sld [smem:[%s46]]
  %s48 = scalar_lea.smem %s0, 24
  %s49 = sld [smem:[%s48]]
  %s50 = scalar_lea.smem %s0, 25
  %s51 = sld [smem:[%s50]]
  %s52 = scalar_lea.smem %s0, 26
  %s53 = sld [smem:[%s52]]
  %s54 = scalar_lea.smem %s0, 27
  %s55 = sld [smem:[%s54]]
  %s56 = scalar_lea.smem %s0, 28
  %s57 = sld [smem:[%s56]]
  %s58 = scalar_lea.smem %s0, 29
  %s59 = sld [smem:[%s58]]
  %s60 = scalar_lea.smem %s0, 30
  %s61 = sld [smem:[%s60]]
  %s62 = scalar_lea.smem %s0, 31
  %s63 = sld [smem:[%s62]]
  %s64 = scalar_lea.smem %s0, 32
  %s65 = sld [smem:[%s64]]
  %s66 = scalar_lea.smem %s0, 33
  %s67 = sld [smem:[%s66]]
  %s68 = scalar_lea.smem %s0, 34
  %s69 = sld [smem:[%s68]]
  %s70 = scalar_lea.smem %s0, 35
  %s71 = sld [smem:[%s70]]
  %s72 = scalar_lea.smem %s0, 36
  %s73 = sld [smem:[%s72]]
  %s74 = scalar_lea.smem %s0, 37
  %s75 = sld [smem:[%s74]]
  %s76 = scalar_lea.smem %s0, 38
  %s77 = sld [smem:[%s76]]
  %s78 = scalar_lea.smem %s0, 39
  %s79 = sld [smem:[%s78]]
  %s80 = scalar_lea.smem %s0, 40
  %s81 = sld [smem:[%s80]]
  %s82 = scalar_lea.smem %s0, 41
  %s83 = sld [smem:[%s82]]
  %s84 = scalar_lea.smem %s0, 42
  %s85 = sld [smem:[%s84]]
  %s86 = scalar_lea.smem %s0, 43
  %s87 = sld [smem:[%s86]]
  %s88 = scalar_lea.smem %s0, 44
  %s89 = sld [smem:[%s88]]
  %s90 = scalar_lea.smem %s0, 45
  %s91 = sld [smem:[%s90]]
  %s92 = sld [smem:[#allocation0]]
  $region282: #{deep_naigsr_forward.1} parent=0
    _
  %s94 = ssub.s32 1, %s92
  %s95 = scalar_select 0, %s94, %s92
  $region1: #{deep_naigsr_forward.1} parent=0
    #allocation2 [shape = 'u8[2048]{0}', space=vmem, size = 0x800, scoped, tag = 'input window, operand 10, single buffered']
    #allocation3 [shape = 's32[1]{0}', space=sflag, size = 0x4, scoped, tag = 'scoped memory for deep_naigsr_forward.1']
    #allocation4 [shape = 'u8[2048]{0}', space=vmem, size = 0x800, scoped, tag = 'input window, operand 11, single buffered']
    #allocation5 [shape = 's32[1]{0}', space=sflag, size = 0x4, scoped, tag = 'scoped memory for deep_naigsr_forward.1']
    #allocation6 [shape = 'u8[2048]{0}', space=vmem, size = 0x800, scoped, tag = 'input window, operand 12, single buffered']
    #allocation7 [shape = 'u8[512]{0}', space=vmem, size = 0x400, scoped, tag = 'input window, operand 15, single buffered']
    #allocation8 [shape = 's32[1]{0}', space=sflag, size = 0x4, scoped, tag = 'scoped memory for deep_naigsr_forward.1']
    #allocation9 [shape = 'u8[512]{0}', space=vmem, size = 0x400, scoped, tag = 'input window, operand 17, single buffered']
    #allocation10 [shape = 'u8[2048]{0}', space=vmem, size = 0x800, scoped, tag = 'input window, operand 19, single buffered']
    #allocation11 [shape = 's32[1]{0}', space=sflag, size = 0x4, scoped, tag = 'scoped memory for deep_naigsr_forward.1']
    #allocation12 [shape = 'u8[2048]{0}', space=vmem, size = 0x800, scoped, tag = 'input window, operand 20, single buffered']
    #allocation13 [shape = 'u8[2048]{0}', space=vmem, size = 0x800, scoped, tag = 'input window, operand 21, single buffered']
    #allocation14 [shape = 's32[1]{0}', space=sflag, size = 0x4, scoped, tag = 'scoped memory for deep_naigsr_forward.1']
    #allocation15 [shape = 'u8[512]{0}', space=vmem, size = 0x400, scoped, tag = 'input window, operand 22, single buffered']
    #allocation16 [shape = 'u8[512]{0}', space=vmem, size = 0x400, scoped, tag = 'input window, operand 24, single buffered']
    #allocation17 [shape = 's32[1]{0}', space=sflag, size = 0x4, scoped, tag = 'scoped memory for deep_naigsr_forward.1']
    #allocation18 [shape = 'u8[2048]{0}', space=vmem, size = 0x800, scoped, tag = 'input window, operand 26, single buffered']
    #allocation19 [shape = 'u8[2048]{0}', space=vmem, size = 0x800, scoped, tag = 'input window, operand 27, single buffered']
    #allocation20 [shape = 's32[1]{0}', space=sflag, size = 0x4, scoped, tag = 'scoped memory for deep_naigsr_forward.1']
    #allocation21 [shape = 'u8[2048]{0}', space=vmem, size = 0x800, scoped, tag = 'input window, operand 28, single buffered']
    #allocation22 [shape = 'u8[512]{0}', space=vmem, size = 0x400, scoped, tag = 'input window, operand 29, single buffered']
    #allocation23 [shape = 's32[1]{0}', space=sflag, size = 0x4, scoped, tag = 'scoped memory for deep_naigsr_forward.1']
    #allocation24 [shape = 'u8[512]{0}', space=vmem, size = 0x400, scoped, tag = 'input window, operand 31, single buffered']
    #allocation25 [shape = 'u8[512]{0}', space=vmem, size = 0x400, scoped, tag = 'input window, operand 33, single buffered']
    #allocation26 [shape = 's32[1]{0}', space=sflag, size = 0x4, scoped, tag = 'scoped memory for deep_naigsr_forward.1']
    #allocation27 [shape = 'u8[2048]{0}', space=vmem, size = 0x800, scoped, tag = 'input window, operand 35, single buffered']
    #allocation28 [shape = 'u8[2048]{0}', space=vmem, size = 0x800, scoped, tag = 'input window, operand 36, single buffered']
    #allocation29 [shape = 's32[1]{0}', space=sflag, size = 0x4, scoped, tag = 'scoped memory for deep_naigsr_forward.1']
    #allocation30 [shape = 'u8[2048]{0}', space=vmem, size = 0x800, scoped, tag = 'input window, operand 37, single buffered']
    #allocation31 [shape = 'u8[512]{0}', space=vmem, size = 0x400, scoped, tag = 'input window, operand 38, single buffered']
    #allocation32 [shape = 's32[1]{0}', space=sflag, size = 0x4, scoped, tag = 'scoped memory for deep_naigsr_forward.1']
    #allocation33 [shape = 'u8[512]{0}', space=vmem, size = 0x400, scoped, tag = 'input window, operand 40, single buffered']
    #allocation34 [shape = 'u8[512]{0}', space=vmem, size = 0x400, scoped, tag = 'input window, operand 42, single buffered']
    #allocation35 [shape = 's32[1]{0}', space=sflag, size = 0x4, scoped, tag = 'scoped memory for deep_naigsr_forward.1']
    #allocation36 [shape = 'u8[512]{0}', space=vmem, size = 0x400, scoped, tag = 'input window, operand 44, single buffered']
    %96 = vsyncpa [#allocation3], 0
    %97 = vsyncpa [#allocation5], 0
    %98 = vsyncpa [#allocation8], 0
    %99 = vsyncpa [#allocation11], 0
    %100 = vsyncpa [#allocation14], 0
    %101 = vsyncpa [#allocation17], 0
    %102 = vsyncpa [#allocation20], 0
    %103 = vsyncpa [#allocation23], 0
    %104 = vsyncpa [#allocation26], 0
    %105 = vsyncpa [#allocation29], 0
    %106 = vsyncpa [#allocation32], 0
    %107 = vsyncpa [#allocation35], 0
    // Predicated region
    $region2: #{deep_naigsr_forward.1} parent=1 // pred_check
      _
    $region3: #{deep_naigsr_forward.1} parent=1 // pred_check_branch
      %109 = sbr.rel (0) target = $region5
    $region4: #{deep_naigsr_forward.1} parent=1 // pred_region
      _
    $region5: #{deep_naigsr_forward.1} parent=1 // pred_fallthru
      _
    // Predicated region
    $region6: #{deep_naigsr_forward.1} parent=1 // pred_check
      _
    $region7: #{deep_naigsr_forward.1} parent=1 // pred_check_branch
      %111 = sbr.rel (0) target = $region9
    $region8: #{deep_naigsr_forward.1} parent=1 // pred_region
      _
    $region9: #{deep_naigsr_forward.1} parent=1 // pred_fallthru
      _
    // Predicated region
    $region10: #{deep_naigsr_forward.1} parent=1 // pred_check
      _
    $region11: #{deep_naigsr_forward.1} parent=1 // pred_check_branch
      %113 = sbr.rel (0) target = $region13
    $region12: #{deep_naigsr_forward.1} parent=1 // pred_region
      _
    $region13: #{deep_naigsr_forward.1} parent=1 // pred_fallthru
      _
    // Predicated region
    $region14: #{deep_naigsr_forward.1} parent=1 // pred_check
      _
    $region15: #{deep_naigsr_forward.1} parent=1 // pred_check_branch
      %115 = sbr.rel (0) target = $region17
    $region16: #{deep_naigsr_forward.1} parent=1 // pred_region
      _
    $region17: #{deep_naigsr_forward.1} parent=1 // pred_fallthru
      _
    // Predicated region
    $region18: #{deep_naigsr_forward.1} parent=1 // pred_check
      _
    $region19: #{deep_naigsr_forward.1} parent=1 // pred_check_branch
      %117 = sbr.rel (0) target = $region21
    $region20: #{deep_naigsr_forward.1} parent=1 // pred_region
      _
    $region21: #{deep_naigsr_forward.1} parent=1 // pred_fallthru
      _
    // Predicated region
    $region22: #{deep_naigsr_forward.1} parent=1 // pred_check
      _
    $region23: #{deep_naigsr_forward.1} parent=1 // pred_check_branch
      %119 = sbr.rel (0) target = $region25
    $region24: #{deep_naigsr_forward.1} parent=1 // pred_region
      _
    $region25: #{deep_naigsr_forward.1} parent=1 // pred_fallthru
      _
    // Predicated region
    $region26: #{deep_naigsr_forward.1} parent=1 // pred_check
      _
    $region27: #{deep_naigsr_forward.1} parent=1 // pred_check_branch
      %121 = sbr.rel (0) target = $region29
    $region28: #{deep_naigsr_forward.1} parent=1 // pred_region
      _
    $region29: #{deep_naigsr_forward.1} parent=1 // pred_fallthru
      _
    // Predicated region
    $region30: #{deep_naigsr_forward.1} parent=1 // pred_check
      _
    $region31: #{deep_naigsr_forward.1} parent=1 // pred_check_branch
      %123 = sbr.rel (0) target = $region33
    $region32: #{deep_naigsr_forward.1} parent=1 // pred_region
      _
    $region33: #{deep_naigsr_forward.1} parent=1 // pred_fallthru
      _
    // Predicated region
    $region34: #{deep_naigsr_forward.1} parent=1 // pred_check
      _
    $region35: #{deep_naigsr_forward.1} parent=1 // pred_check_branch
      %125 = sbr.rel (0) target = $region37
    $region36: #{deep_naigsr_forward.1} parent=1 // pred_region
      _
    $region37: #{deep_naigsr_forward.1} parent=1 // pred_fallthru
      _
    // Predicated region
    $region38: #{deep_naigsr_forward.1} parent=1 // pred_check
      _
    $region39: #{deep_naigsr_forward.1} parent=1 // pred_check_branch
      %127 = sbr.rel (0) target = $region41
    $region40: #{deep_naigsr_forward.1} parent=1 // pred_region
      _
    $region41: #{deep_naigsr_forward.1} parent=1 // pred_fallthru
      _
    // Predicated region
    $region42: #{deep_naigsr_forward.1} parent=1 // pred_check
      _
    $region43: #{deep_naigsr_forward.1} parent=1 // pred_check_branch
      %129 = sbr.rel (0) target = $region45
    $region44: #{deep_naigsr_forward.1} parent=1 // pred_region
      %131 = vsyncadd [#allocation3], 0
      %s133 = sshll.u32 %s21, 4
      %s134 = int_to_ptr.hbm [resolvable:$true] %s133
      %s135 = sshll.u32 [#allocation2], 4
      %s136 = int_to_ptr.vmem [resolvable:$true] %s135
      %138 = dma.hbm_to_vmem [thread:$0]  %s134, 64, %s136, [#allocation3]
    $region45: #{deep_naigsr_forward.1} parent=1 // pred_fallthru
      _
    // Predicated region
    $region46: #{deep_naigsr_forward.1} parent=1 // pred_check
      _
    $region47: #{deep_naigsr_forward.1} parent=1 // pred_check_branch
      %140 = sbr.rel (0) target = $region49
    $region48: #{deep_naigsr_forward.1} parent=1 // pred_region
      %142 = vsyncadd [#allocation5], 0
      %s144 = sshll.u32 %s23, 4
      %s145 = int_to_ptr.hbm [resolvable:$true] %s144
      %s146 = sshll.u32 [#allocation4], 4
      %s147 = int_to_ptr.vmem [resolvable:$true] %s146
      %149 = dma.hbm_to_vmem [thread:$0]  %s145, 64, %s147, [#allocation5]
    $region49: #{deep_naigsr_forward.1} parent=1 // pred_fallthru
      _
    // Predicated region
    $region50: #{deep_naigsr_forward.1} parent=1 // pred_check
      _
    $region51: #{deep_naigsr_forward.1} parent=1 // pred_check_branch
      %151 = sbr.rel (0) target = $region53
    $region52: #{deep_naigsr_forward.1} parent=1 // pred_region
      %153 = vsyncadd [#allocation5], 0
      %s155 = sshll.u32 %s25, 4
      %s156 = int_to_ptr.hbm [resolvable:$true] %s155
      %s157 = sshll.u32 [#allocation6], 4
      %s158 = int_to_ptr.vmem [resolvable:$true] %s157
      %160 = dma.hbm_to_vmem [thread:$0]  %s156, 64, %s158, [#allocation5]
    $region53: #{deep_naigsr_forward.1} parent=1 // pred_fallthru
      _
    // Predicated region
    $region54: #{deep_naigsr_forward.1} parent=1 // pred_check
      _
    $region55: #{deep_naigsr_forward.1} parent=1 // pred_check_branch
      %162 = sbr.rel (0) target = $region57
    $region56: #{deep_naigsr_forward.1} parent=1 // pred_region
      _
    $region57: #{deep_naigsr_forward.1} parent=1 // pred_fallthru
      _
    // Predicated region
    $region58: #{deep_naigsr_forward.1} parent=1 // pred_check
      _
    $region59: #{deep_naigsr_forward.1} parent=1 // pred_check_branch
      %164 = sbr.rel (0) target = $region61
    $region60: #{deep_naigsr_forward.1} parent=1 // pred_region
      _
    $region61: #{deep_naigsr_forward.1} parent=1 // pred_fallthru
      _
    // Predicated region
    $region62: #{deep_naigsr_forward.1} parent=1 // pred_check
      _
    $region63: #{deep_naigsr_forward.1} parent=1 // pred_check_branch
      %166 = sbr.rel (0) target = $region65
    $region64: #{deep_naigsr_forward.1} parent=1 // pred_region
      %168 = vsyncadd [#allocation8], 0
      %s170 = sshll.u32 %s31, 4
      %s171 = int_to_ptr.hbm [resolvable:$true] %s170
      %s172 = sshll.u32 [#allocation7], 4
      %s173 = int_to_ptr.vmem [resolvable:$true] %s172
      %175 = dma.hbm_to_vmem [thread:$0]  %s171, 16, %s173, [#allocation8]
    $region65: #{deep_naigsr_forward.1} parent=1 // pred_fallthru
      _
    // Predicated region
    $region66: #{deep_naigsr_forward.1} parent=1 // pred_check
      _
    $region67: #{deep_naigsr_forward.1} parent=1 // pred_check_branch
      %177 = sbr.rel (0) target = $region69
    $region68: #{deep_naigsr_forward.1} parent=1 // pred_region
      _
    $region69: #{deep_naigsr_forward.1} parent=1 // pred_fallthru
      _
    // Predicated region
    $region70: #{deep_naigsr_forward.1} parent=1 // pred_check
      _
    $region71: #{deep_naigsr_forward.1} parent=1 // pred_check_branch
      %179 = sbr.rel (0) target = $region73
    $region72: #{deep_naigsr_forward.1} parent=1 // pred_region
      %181 = vsyncadd [#allocation8], 0
      %s183 = sshll.u32 %s35, 4
      %s184 = int_to_ptr.hbm [resolvable:$true] %s183
      %s185 = sshll.u32 [#allocation9], 4
      %s186 = int_to_ptr.vmem [resolvable:$true] %s185
      %188 = dma.hbm_to_vmem [thread:$0]  %s184, 16, %s186, [#allocation8]
    $region73: #{deep_naigsr_forward.1} parent=1 // pred_fallthru
      _
    // Predicated region
    $region74: #{deep_naigsr_forward.1} parent=1 // pred_check
      _
    $region75: #{deep_naigsr_forward.1} parent=1 // pred_check_branch
      %190 = sbr.rel (0) target = $region77
    $region76: #{deep_naigsr_forward.1} parent=1 // pred_region
      _
    $region77: #{deep_naigsr_forward.1} parent=1 // pred_fallthru
      _
    // Predicated region
    $region78: #{deep_naigsr_forward.1} parent=1 // pred_check
      _
    $region79: #{deep_naigsr_forward.1} parent=1 // pred_check_branch
      %192 = sbr.rel (0) target = $region81
    $region80: #{deep_naigsr_forward.1} parent=1 // pred_region
      %194 = vsyncadd [#allocation11], 0
      %s196 = sshll.u32 %s39, 4
      %s197 = int_to_ptr.hbm [resolvable:$true] %s196
      %s198 = sshll.u32 [#allocation10], 4
      %s199 = int_to_ptr.vmem [resolvable:$true] %s198
      %201 = dma.hbm_to_vmem [thread:$0]  %s197, 64, %s199, [#allocation11]
    $region81: #{deep_naigsr_forward.1} parent=1 // pred_fallthru
      _
    // Predicated region
    $region82: #{deep_naigsr_forward.1} parent=1 // pred_check
      _
    $region83: #{deep_naigsr_forward.1} parent=1 // pred_check_branch
      %203 = sbr.rel (0) target = $region85
    $region84: #{deep_naigsr_forward.1} parent=1 // pred_region
      %205 = vsyncadd [#allocation11], 0
      %s207 = sshll.u32 %s41, 4
      %s208 = int_to_ptr.hbm [resolvable:$true] %s207
      %s209 = sshll.u32 [#allocation12], 4
      %s210 = int_to_ptr.vmem [resolvable:$true] %s209
      %212 = dma.hbm_to_vmem [thread:$0]  %s208, 64, %s210, [#allocation11]
    $region85: #{deep_naigsr_forward.1} parent=1 // pred_fallthru
      _
    // Predicated region
    $region86: #{deep_naigsr_forward.1} parent=1 // pred_check
      _
    $region87: #{deep_naigsr_forward.1} parent=1 // pred_check_branch
      %214 = sbr.rel (0) target = $region89
    $region88: #{deep_naigsr_forward.1} parent=1 // pred_region
      %216 = vsyncadd [#allocation14], 0
      %s218 = sshll.u32 %s43, 4
      %s219 = int_to_ptr.hbm [resolvable:$true] %s218
      %s220 = sshll.u32 [#allocation13], 4
      %s221 = int_to_ptr.vmem [resolvable:$true] %s220
      %223 = dma.hbm_to_vmem [thread:$0]  %s219, 64, %s221, [#allocation14]
    $region89: #{deep_naigsr_forward.1} parent=1 // pred_fallthru
      _
    // Predicated region
    $region90: #{deep_naigsr_forward.1} parent=1 // pred_check
      _
    $region91: #{deep_naigsr_forward.1} parent=1 // pred_check_branch
      %225 = sbr.rel (0) target = $region93
    $region92: #{deep_naigsr_forward.1} parent=1 // pred_region
      %227 = vsyncadd [#allocation14], 0
      %s229 = sshll.u32 %s45, 4
      %s230 = int_to_ptr.hbm [resolvable:$true] %s229
      %s231 = sshll.u32 [#allocation15], 4
      %s232 = int_to_ptr.vmem [resolvable:$true] %s231
      %234 = dma.hbm_to_vmem [thread:$0]  %s230, 16, %s232, [#allocation14]
    $region93: #{deep_naigsr_forward.1} parent=1 // pred_fallthru
      _
    // Predicated region
    $region94: #{deep_naigsr_forward.1} parent=1 // pred_check
      _
    $region95: #{deep_naigsr_forward.1} parent=1 // pred_check_branch
      %236 = sbr.rel (0) target = $region97
    $region96: #{deep_naigsr_forward.1} parent=1 // pred_region
      _
    $region97: #{deep_naigsr_forward.1} parent=1 // pred_fallthru
      _
    // Predicated region
    $region98: #{deep_naigsr_forward.1} parent=1 // pred_check
      _
    $region99: #{deep_naigsr_forward.1} parent=1 // pred_check_branch
      %238 = sbr.rel (0) target = $region101
    $region100: #{deep_naigsr_forward.1} parent=1 // pred_region
      %240 = vsyncadd [#allocation17], 0
      %s242 = sshll.u32 %s49, 4
      %s243 = int_to_ptr.hbm [resolvable:$true] %s242
      %s244 = sshll.u32 [#allocation16], 4
      %s245 = int_to_ptr.vmem [resolvable:$true] %s244
      %247 = dma.hbm_to_vmem [thread:$0]  %s243, 16, %s245, [#allocation17]
    $region101: #{deep_naigsr_forward.1} parent=1 // pred_fallthru
      _
    // Predicated region
    $region102: #{deep_naigsr_forward.1} parent=1 // pred_check
      _
    $region103: #{deep_naigsr_forward.1} parent=1 // pred_check_branch
      %249 = sbr.rel (0) target = $region105
    $region104: #{deep_naigsr_forward.1} parent=1 // pred_region
      _
    $region105: #{deep_naigsr_forward.1} parent=1 // pred_fallthru
      _
    // Predicated region
    $region106: #{deep_naigsr_forward.1} parent=1 // pred_check
      _
    $region107: #{deep_naigsr_forward.1} parent=1 // pred_check_branch
      %251 = sbr.rel (0) target = $region109
    $region108: #{deep_naigsr_forward.1} parent=1 // pred_region
      %253 = vsyncadd [#allocation17], 0
      %s255 = sshll.u32 %s53, 4
      %s256 = int_to_ptr.hbm [resolvable:$true] %s255
      %s257 = sshll.u32 [#allocation18], 4
      %s258 = int_to_ptr.vmem [resolvable:$true] %s257
      %260 = dma.hbm_to_vmem [thread:$0]  %s256, 64, %s258, [#allocation17]
    $region109: #{deep_naigsr_forward.1} parent=1 // pred_fallthru
      _
    // Predicated region
    $region110: #{deep_naigsr_forward.1} parent=1 // pred_check
      _
    $region111: #{deep_naigsr_forward.1} parent=1 // pred_check_branch
      %262 = sbr.rel (0) target = $region113
    $region112: #{deep_naigsr_forward.1} parent=1 // pred_region
      %264 = vsyncadd [#allocation20], 0
      %s266 = sshll.u32 %s55, 4
      %s267 = int_to_ptr.hbm [resolvable:$true] %s266
      %s268 = sshll.u32 [#allocation19], 4
      %s269 = int_to_ptr.vmem [resolvable:$true] %s268
      %271 = dma.hbm_to_vmem [thread:$0]  %s267, 64, %s269, [#allocation20]
    $region113: #{deep_naigsr_forward.1} parent=1 // pred_fallthru
      _
    // Predicated region
    $region114: #{deep_naigsr_forward.1} parent=1 // pred_check
      _
    $region115: #{deep_naigsr_forward.1} parent=1 // pred_check_branch
      %273 = sbr.rel (0) target = $region117
    $region116: #{deep_naigsr_forward.1} parent=1 // pred_region
      %275 = vsyncadd [#allocation20], 0
      %s277 = sshll.u32 %s57, 4
      %s278 = int_to_ptr.hbm [resolvable:$true] %s277
      %s279 = sshll.u32 [#allocation21], 4
      %s280 = int_to_ptr.vmem [resolvable:$true] %s279
      %282 = dma.hbm_to_vmem [thread:$0]  %s278, 64, %s280, [#allocation20]
    $region117: #{deep_naigsr_forward.1} parent=1 // pred_fallthru
      _
    // Predicated region
    $region118: #{deep_naigsr_forward.1} parent=1 // pred_check
      _
    $region119: #{deep_naigsr_forward.1} parent=1 // pred_check_branch
      %284 = sbr.rel (0) target = $region121
    $region120: #{deep_naigsr_forward.1} parent=1 // pred_region
      %286 = vsyncadd [#allocation23], 0
      %s288 = sshll.u32 %s59, 4
      %s289 = int_to_ptr.hbm [resolvable:$true] %s288
      %s290 = sshll.u32 [#allocation22], 4
      %s291 = int_to_ptr.vmem [resolvable:$true] %s290
      %293 = dma.hbm_to_vmem [thread:$0]  %s289, 16, %s291, [#allocation23]
    $region121: #{deep_naigsr_forward.1} parent=1 // pred_fallthru
      _
    // Predicated region
    $region122: #{deep_naigsr_forward.1} parent=1 // pred_check
      _
    $region123: #{deep_naigsr_forward.1} parent=1 // pred_check_branch
      %295 = sbr.rel (0) target = $region125
    $region124: #{deep_naigsr_forward.1} parent=1 // pred_region
      _
    $region125: #{deep_naigsr_forward.1} parent=1 // pred_fallthru
      _
    // Predicated region
    $region126: #{deep_naigsr_forward.1} parent=1 // pred_check
      _
    $region127: #{deep_naigsr_forward.1} parent=1 // pred_check_branch
      %297 = sbr.rel (0) target = $region129
    $region128: #{deep_naigsr_forward.1} parent=1 // pred_region
      %299 = vsyncadd [#allocation23], 0
      %s301 = sshll.u32 %s63, 4
      %s302 = int_to_ptr.hbm [resolvable:$true] %s301
      %s303 = sshll.u32 [#allocation24], 4
      %s304 = int_to_ptr.vmem [resolvable:$true] %s303
      %306 = dma.hbm_to_vmem [thread:$0]  %s302, 16, %s304, [#allocation23]
    $region129: #{deep_naigsr_forward.1} parent=1 // pred_fallthru
      _
    // Predicated region
    $region130: #{deep_naigsr_forward.1} parent=1 // pred_check
      _
    $region131: #{deep_naigsr_forward.1} parent=1 // pred_check_branch
      %308 = sbr.rel (0) target = $region133
    $region132: #{deep_naigsr_forward.1} parent=1 // pred_region
      _
    $region133: #{deep_naigsr_forward.1} parent=1 // pred_fallthru
      _
    // Predicated region
    $region134: #{deep_naigsr_forward.1} parent=1 // pred_check
      _
    $region135: #{deep_naigsr_forward.1} parent=1 // pred_check_branch
      %310 = sbr.rel (0) target = $region137
    $region136: #{deep_naigsr_forward.1} parent=1 // pred_region
      %312 = vsyncadd [#allocation26], 0
      %s314 = sshll.u32 %s67, 4
      %s315 = int_to_ptr.hbm [resolvable:$true] %s314
      %s316 = sshll.u32 [#allocation25], 4
      %s317 = int_to_ptr.vmem [resolvable:$true] %s316
      %319 = dma.hbm_to_vmem [thread:$0]  %s315, 16, %s317, [#allocation26]
    $region137: #{deep_naigsr_forward.1} parent=1 // pred_fallthru
      _
    // Predicated region
    $region138: #{deep_naigsr_forward.1} parent=1 // pred_check
      _
    $region139: #{deep_naigsr_forward.1} parent=1 // pred_check_branch
      %321 = sbr.rel (0) target = $region141
    $region140: #{deep_naigsr_forward.1} parent=1 // pred_region
      _
    $region141: #{deep_naigsr_forward.1} parent=1 // pred_fallthru
      _
    // Predicated region
    $region142: #{deep_naigsr_forward.1} parent=1 // pred_check
      _
    $region143: #{deep_naigsr_forward.1} parent=1 // pred_check_branch
      %323 = sbr.rel (0) target = $region145
    $region144: #{deep_naigsr_forward.1} parent=1 // pred_region
      %325 = vsyncadd [#allocation26], 0
      %s327 = sshll.u32 %s71, 4
      %s328 = int_to_ptr.hbm [resolvable:$true] %s327
      %s329 = sshll.u32 [#allocation27], 4
      %s330 = int_to_ptr.vmem [resolvable:$true] %s329
      %332 = dma.hbm_to_vmem [thread:$0]  %s328, 64, %s330, [#allocation26]
    $region145: #{deep_naigsr_forward.1} parent=1 // pred_fallthru
      _
    // Predicated region
    $region146: #{deep_naigsr_forward.1} parent=1 // pred_check
      _
    $region147: #{deep_naigsr_forward.1} parent=1 // pred_check_branch
      %334 = sbr.rel (0) target = $region149
    $region148: #{deep_naigsr_forward.1} parent=1 // pred_region
      %336 = vsyncadd [#allocation29], 0
      %s338 = sshll.u32 %s73, 4
      %s339 = int_to_ptr.hbm [resolvable:$true] %s338
      %s340 = sshll.u32 [#allocation28], 4
      %s341 = int_to_ptr.vmem [resolvable:$true] %s340
      %343 = dma.hbm_to_vmem [thread:$0]  %s339, 64, %s341, [#allocation29]
    $region149: #{deep_naigsr_forward.1} parent=1 // pred_fallthru
      _
    // Predicated region
    $region150: #{deep_naigsr_forward.1} parent=1 // pred_check
      _
    $region151: #{deep_naigsr_forward.1} parent=1 // pred_check_branch
      %345 = sbr.rel (0) target = $region153
    $region152: #{deep_naigsr_forward.1} parent=1 // pred_region
      %347 = vsyncadd [#allocation29], 0
      %s349 = sshll.u32 %s75, 4
      %s350 = int_to_ptr.hbm [resolvable:$true] %s349
      %s351 = sshll.u32 [#allocation30], 4
      %s352 = int_to_ptr.vmem [resolvable:$true] %s351
      %354 = dma.hbm_to_vmem [thread:$0]  %s350, 64, %s352, [#allocation29]
    $region153: #{deep_naigsr_forward.1} parent=1 // pred_fallthru
      _
    // Predicated region
    $region154: #{deep_naigsr_forward.1} parent=1 // pred_check
      _
    $region155: #{deep_naigsr_forward.1} parent=1 // pred_check_branch
      %356 = sbr.rel (0) target = $region157
    $region156: #{deep_naigsr_forward.1} parent=1 // pred_region
      %358 = vsyncadd [#allocation32], 0
      %s360 = sshll.u32 %s77, 4
      %s361 = int_to_ptr.hbm [resolvable:$true] %s360
      %s362 = sshll.u32 [#allocation31], 4
      %s363 = int_to_ptr.vmem [resolvable:$true] %s362
      %365 = dma.hbm_to_vmem [thread:$0]  %s361, 16, %s363, [#allocation32]
    $region157: #{deep_naigsr_forward.1} parent=1 // pred_fallthru
      _
    // Predicated region
    $region158: #{deep_naigsr_forward.1} parent=1 // pred_check
      _
    $region159: #{deep_naigsr_forward.1} parent=1 // pred_check_branch
      %367 = sbr.rel (0) target = $region161
    $region160: #{deep_naigsr_forward.1} parent=1 // pred_region
      _
    $region161: #{deep_naigsr_forward.1} parent=1 // pred_fallthru
      _
    // Predicated region
    $region162: #{deep_naigsr_forward.1} parent=1 // pred_check
      _
    $region163: #{deep_naigsr_forward.1} parent=1 // pred_check_branch
      %369 = sbr.rel (0) target = $region165
    $region164: #{deep_naigsr_forward.1} parent=1 // pred_region
      %371 = vsyncadd [#allocation32], 0
      %s373 = sshll.u32 %s81, 4
      %s374 = int_to_ptr.hbm [resolvable:$true] %s373
      %s375 = sshll.u32 [#allocation33], 4
      %s376 = int_to_ptr.vmem [resolvable:$true] %s375
      %378 = dma.hbm_to_vmem [thread:$0]  %s374, 16, %s376, [#allocation32]
    $region165: #{deep_naigsr_forward.1} parent=1 // pred_fallthru
      _
    // Predicated region
    $region166: #{deep_naigsr_forward.1} parent=1 // pred_check
      _
    $region167: #{deep_naigsr_forward.1} parent=1 // pred_check_branch
      %380 = sbr.rel (0) target = $region169
    $region168: #{deep_naigsr_forward.1} parent=1 // pred_region
      _
    $region169: #{deep_naigsr_forward.1} parent=1 // pred_fallthru
      _
    // Predicated region
    $region170: #{deep_naigsr_forward.1} parent=1 // pred_check
      _
    $region171: #{deep_naigsr_forward.1} parent=1 // pred_check_branch
      %382 = sbr.rel (0) target = $region173
    $region172: #{deep_naigsr_forward.1} parent=1 // pred_region
      %384 = vsyncadd [#allocation35], 0
      %s386 = sshll.u32 %s85, 4
      %s387 = int_to_ptr.hbm [resolvable:$true] %s386
      %s388 = sshll.u32 [#allocation34], 4
      %s389 = int_to_ptr.vmem [resolvable:$true] %s388
      %391 = dma.hbm_to_vmem [thread:$0]  %s387, 16, %s389, [#allocation35]
    $region173: #{deep_naigsr_forward.1} parent=1 // pred_fallthru
      _
    // Predicated region
    $region174: #{deep_naigsr_forward.1} parent=1 // pred_check
      _
    $region175: #{deep_naigsr_forward.1} parent=1 // pred_check_branch
      %393 = sbr.rel (0) target = $region177
    $region176: #{deep_naigsr_forward.1} parent=1 // pred_region
      _
    $region177: #{deep_naigsr_forward.1} parent=1 // pred_fallthru
      _
    // Predicated region
    $region178: #{deep_naigsr_forward.1} parent=1 // pred_check
      _
    $region179: #{deep_naigsr_forward.1} parent=1 // pred_check_branch
      %395 = sbr.rel (0) target = $region181
    $region180: #{deep_naigsr_forward.1} parent=1 // pred_region
      %397 = vsyncadd [#allocation35], 0
      %s399 = sshll.u32 %s89, 4
      %s400 = int_to_ptr.hbm [resolvable:$true] %s399
      %s401 = sshll.u32 [#allocation36], 4
      %s402 = int_to_ptr.vmem [resolvable:$true] %s401
      %404 = dma.hbm_to_vmem [thread:$0]  %s400, 16, %s402, [#allocation35]
    $region181: #{deep_naigsr_forward.1} parent=1 // pred_fallthru
      _
    // Predicated region
    $region182: #{deep_naigsr_forward.1} parent=1 // pred_check
      _
    $region183: #{deep_naigsr_forward.1} parent=1 // pred_check_branch
      %406 = sbr.rel (0) target = $region185
    $region184: #{deep_naigsr_forward.1} parent=1 // pred_region
      %408 = dma.done [#allocation3], 64
    $region185: #{deep_naigsr_forward.1} parent=1 // pred_fallthru
      _
    // Predicated region
    $region186: #{deep_naigsr_forward.1} parent=1 // pred_check
      _
    $region187: #{deep_naigsr_forward.1} parent=1 // pred_check_branch
      %410 = sbr.rel (0) target = $region189
    $region188: #{deep_naigsr_forward.1} parent=1 // pred_region
      %412 = dma.done [#allocation5], 64
    $region189: #{deep_naigsr_forward.1} parent=1 // pred_fallthru
      _
    // Predicated region
    $region190: #{deep_naigsr_forward.1} parent=1 // pred_check
      _
    $region191: #{deep_naigsr_forward.1} parent=1 // pred_check_branch
      %414 = sbr.rel (0) target = $region193
    $region192: #{deep_naigsr_forward.1} parent=1 // pred_region
      %416 = dma.done [#allocation5], 64
    $region193: #{deep_naigsr_forward.1} parent=1 // pred_fallthru
      _
    // Predicated region
    $region194: #{deep_naigsr_forward.1} parent=1 // pred_check
      _
    $region195: #{deep_naigsr_forward.1} parent=1 // pred_check_branch
      %418 = sbr.rel (0) target = $region197
    $region196: #{deep_naigsr_forward.1} parent=1 // pred_region
      %420 = dma.done [#allocation8], 16
    $region197: #{deep_naigsr_forward.1} parent=1 // pred_fallthru
      _
    // Predicated region
    $region198: #{deep_naigsr_forward.1} parent=1 // pred_check
      _
    $region199: #{deep_naigsr_forward.1} parent=1 // pred_check_branch
      %422 = sbr.rel (0) target = $region201
    $region200: #{deep_naigsr_forward.1} parent=1 // pred_region
      %424 = dma.done [#allocation8], 16
    $region201: #{deep_naigsr_forward.1} parent=1 // pred_fallthru
      _
    // Predicated region
    $region202: #{deep_naigsr_forward.1} parent=1 // pred_check
      _
    $region203: #{deep_naigsr_forward.1} parent=1 // pred_check_branch
      %426 = sbr.rel (0) target = $region205
    $region204: #{deep_naigsr_forward.1} parent=1 // pred_region
      %428 = dma.done [#allocation11], 64
    $region205: #{deep_naigsr_forward.1} parent=1 // pred_fallthru
      _
    // Predicated region
    $region206: #{deep_naigsr_forward.1} parent=1 // pred_check
      _
    $region207: #{deep_naigsr_forward.1} parent=1 // pred_check_branch
      %430 = sbr.rel (0) target = $region209
    $region208: #{deep_naigsr_forward.1} parent=1 // pred_region
      %432 = dma.done [#allocation11], 64
    $region209: #{deep_naigsr_forward.1} parent=1 // pred_fallthru
      _
    // Predicated region
    $region210: #{deep_naigsr_forward.1} parent=1 // pred_check
      _
    $region211: #{deep_naigsr_forward.1} parent=1 // pred_check_branch
      %434 = sbr.rel (0) target = $region213
    $region212: #{deep_naigsr_forward.1} parent=1 // pred_region
      %436 = dma.done [#allocation14], 64
    $region213: #{deep_naigsr_forward.1} parent=1 // pred_fallthru
      _
    // Predicated region
    $region214: #{deep_naigsr_forward.1} parent=1 // pred_check
      _
    $region215: #{deep_naigsr_forward.1} parent=1 // pred_check_branch
      %438 = sbr.rel (0) target = $region217
    $region216: #{deep_naigsr_forward.1} parent=1 // pred_region
      %440 = dma.done [#allocation14], 16
    $region217: #{deep_naigsr_forward.1} parent=1 // pred_fallthru
      _
    // Predicated region
    $region218: #{deep_naigsr_forward.1} parent=1 // pred_check
      _
    $region219: #{deep_naigsr_forward.1} parent=1 // pred_check_branch
      %442 = sbr.rel (0) target = $region221
    $region220: #{deep_naigsr_forward.1} parent=1 // pred_region
      %444 = dma.done [#allocation17], 16
    $region221: #{deep_naigsr_forward.1} parent=1 // pred_fallthru
      _
    // Predicated region
    $region222: #{deep_naigsr_forward.1} parent=1 // pred_check
      _
    $region223: #{deep_naigsr_forward.1} parent=1 // pred_check_branch
      %446 = sbr.rel (0) target = $region225
    $region224: #{deep_naigsr_forward.1} parent=1 // pred_region
      %448 = dma.done [#allocation17], 64
    $region225: #{deep_naigsr_forward.1} parent=1 // pred_fallthru
      _
    // Predicated region
    $region226: #{deep_naigsr_forward.1} parent=1 // pred_check
      _
    $region227: #{deep_naigsr_forward.1} parent=1 // pred_check_branch
      %450 = sbr.rel (0) target = $region229
    $region228: #{deep_naigsr_forward.1} parent=1 // pred_region
      %452 = dma.done [#allocation20], 64
    $region229: #{deep_naigsr_forward.1} parent=1 // pred_fallthru
      _
    // Predicated region
    $region230: #{deep_naigsr_forward.1} parent=1 // pred_check
      _
    $region231: #{deep_naigsr_forward.1} parent=1 // pred_check_branch
      %454 = sbr.rel (0) target = $region233
    $region232: #{deep_naigsr_forward.1} parent=1 // pred_region
      %456 = dma.done [#allocation20], 64
    $region233: #{deep_naigsr_forward.1} parent=1 // pred_fallthru
      _
    // Predicated region
    $region234: #{deep_naigsr_forward.1} parent=1 // pred_check
      _
    $region235: #{deep_naigsr_forward.1} parent=1 // pred_check_branch
      %458 = sbr.rel (0) target = $region237
    $region236: #{deep_naigsr_forward.1} parent=1 // pred_region
      %460 = dma.done [#allocation23], 16
    $region237: #{deep_naigsr_forward.1} parent=1 // pred_fallthru
      _
    // Predicated region
    $region238: #{deep_naigsr_forward.1} parent=1 // pred_check
      _
    $region239: #{deep_naigsr_forward.1} parent=1 // pred_check_branch
      %462 = sbr.rel (0) target = $region241
    $region240: #{deep_naigsr_forward.1} parent=1 // pred_region
      %464 = dma.done [#allocation23], 16
    $region241: #{deep_naigsr_forward.1} parent=1 // pred_fallthru
      _
    // Predicated region
    $region242: #{deep_naigsr_forward.1} parent=1 // pred_check
      _
    $region243: #{deep_naigsr_forward.1} parent=1 // pred_check_branch
      %466 = sbr.rel (0) target = $region245
    $region244: #{deep_naigsr_forward.1} parent=1 // pred_region
      %468 = dma.done [#allocation26], 16
    $region245: #{deep_naigsr_forward.1} parent=1 // pred_fallthru
      _
    // Predicated region
    $region246: #{deep_naigsr_forward.1} parent=1 // pred_check
      _
    $region247: #{deep_naigsr_forward.1} parent=1 // pred_check_branch
      %470 = sbr.rel (0) target = $region249
    $region248: #{deep_naigsr_forward.1} parent=1 // pred_region
      %472 = dma.done [#allocation26], 64
    $region249: #{deep_naigsr_forward.1} parent=1 // pred_fallthru
      _
    // Predicated region
    $region250: #{deep_naigsr_forward.1} parent=1 // pred_check
      _
    $region251: #{deep_naigsr_forward.1} parent=1 // pred_check_branch
      %474 = sbr.rel (0) target = $region253
    $region252: #{deep_naigsr_forward.1} parent=1 // pred_region
      %476 = dma.done [#allocation29], 64
    $region253: #{deep_naigsr_forward.1} parent=1 // pred_fallthru
      _
    // Predicated region
    $region254: #{deep_naigsr_forward.1} parent=1 // pred_check
      _
    $region255: #{deep_naigsr_forward.1} parent=1 // pred_check_branch
      %478 = sbr.rel (0) target = $region257
    $region256: #{deep_naigsr_forward.1} parent=1 // pred_region
      %480 = dma.done [#allocation29], 64
    $region257: #{deep_naigsr_forward.1} parent=1 // pred_fallthru
      _
    // Predicated region
    $region258: #{deep_naigsr_forward.1} parent=1 // pred_check
      _
    $region259: #{deep_naigsr_forward.1} parent=1 // pred_check_branch
      %482 = sbr.rel (0) target = $region261
    $region260: #{deep_naigsr_forward.1} parent=1 // pred_region
      %484 = dma.done [#allocation32], 16
    $region261: #{deep_naigsr_forward.1} parent=1 // pred_fallthru
      _
    // Predicated region
    $region262: #{deep_naigsr_forward.1} parent=1 // pred_check
      _
    $region263: #{deep_naigsr_forward.1} parent=1 // pred_check_branch
      %486 = sbr.rel (0) target = $region265
    $region264: #{deep_naigsr_forward.1} parent=1 // pred_region
      %488 = dma.done [#allocation32], 16
    $region265: #{deep_naigsr_forward.1} parent=1 // pred_fallthru
      _
    // Predicated region
    $region266: #{deep_naigsr_forward.1} parent=1 // pred_check
      _
    $region267: #{deep_naigsr_forward.1} parent=1 // pred_check_branch
      %490 = sbr.rel (0) target = $region269
    $region268: #{deep_naigsr_forward.1} parent=1 // pred_region
      %492 = dma.done [#allocation35], 16
    $region269: #{deep_naigsr_forward.1} parent=1 // pred_fallthru
      _
    // Predicated region
    $region270: #{deep_naigsr_forward.1} parent=1 // pred_check
      _
    $region271: #{deep_naigsr_forward.1} parent=1 // pred_check_branch
      %494 = sbr.rel (0) target = $region273
    $region272: #{deep_naigsr_forward.1} parent=1 // pred_region
      %496 = dma.done [#allocation35], 16
    $region273: #{deep_naigsr_forward.1} parent=1 // pred_fallthru
      _
    %v498 = vld [vmem:[%s1] sm:$0xff]
    %v499 = vld [vmem:[%s1 + $0x8] sm:$0xff]
    %v500 = vld [vmem:[%s1 + $0x10] sm:$0xff]
    %v501 = vld [vmem:[%s1 + $0x18] sm:$0xff]
    %v502 = vld [vmem:[%s1 + $0x20] sm:$0xff]
    %v503 = vld [vmem:[%s1 + $0x28] sm:$0xff]
    %v504 = vld [vmem:[%s1 + $0x30] sm:$0xff]
    %v505 = vld [vmem:[%s1 + $0x38] sm:$0xff]
    %v506 = vld [vmem:[%s1 + $0x40] sm:$0xff]
    %v507 = vld [vmem:[%s1 + $0x48] sm:$0xff]
    %v508 = vld [vmem:[%s1 + $0x50] sm:$0xff]
    %v509 = vld [vmem:[%s1 + $0x58] sm:$0xff]
    %v510 = vld [vmem:[%s1 + $0x60] sm:$0xff]
    %v511 = vld [vmem:[%s1 + $0x68] sm:$0xff]
    %v512 = vld [vmem:[%s1 + $0x70] sm:$0xff]
    %v513 = vld [vmem:[%s1 + $0x78] sm:$0xff]
    %v514 = vld [vmem:[%s3] sm:$0xff]
    %v515 = vld [vmem:[%s3 + $0x8] sm:$0xff]
    %v516 = vld [vmem:[%s3 + $0x10] sm:$0xff]
    %v517 = vld [vmem:[%s3 + $0x18] sm:$0xff]
    %v518 = vld [vmem:[%s3 + $0x20] sm:$0xff]
    %v519 = vld [vmem:[%s3 + $0x28] sm:$0xff]
    %v520 = vld [vmem:[%s3 + $0x30] sm:$0xff]
    %v521 = vld [vmem:[%s3 + $0x38] sm:$0xff]
    %v522 = vld [vmem:[%s3 + $0x40] sm:$0xff]
    %v523 = vld [vmem:[%s3 + $0x48] sm:$0xff]
    %v524 = vld [vmem:[%s3 + $0x50] sm:$0xff]
    %v525 = vld [vmem:[%s3 + $0x58] sm:$0xff]
    %v526 = vld [vmem:[%s3 + $0x60] sm:$0xff]
    %v527 = vld [vmem:[%s3 + $0x68] sm:$0xff]
    %v528 = vld [vmem:[%s3 + $0x70] sm:$0xff]
    %v529 = vld [vmem:[%s3 + $0x78] sm:$0xff]
    %v530 = vld [vmem:[%s5] sm:$0xff]
    %v531 = vld [vmem:[%s5 + $0x8] sm:$0xff]
    %v532 = vld [vmem:[%s5 + $0x10] sm:$0xff]
    %v533 = vld [vmem:[%s5 + $0x18] sm:$0xff]
    %v534 = vld [vmem:[%s5 + $0x20] sm:$0xff]
    %v535 = vld [vmem:[%s5 + $0x28] sm:$0xff]
    %v536 = vld [vmem:[%s5 + $0x30] sm:$0xff]
    %v537 = vld [vmem:[%s5 + $0x38] sm:$0xff]
    %v538 = vld [vmem:[%s5 + $0x40] sm:$0xff]
    %v539 = vld [vmem:[%s5 + $0x48] sm:$0xff]
    %v540 = vld [vmem:[%s5 + $0x50] sm:$0xff]
    %v541 = vld [vmem:[%s5 + $0x58] sm:$0xff]
    %v542 = vld [vmem:[%s5 + $0x60] sm:$0xff]
    %v543 = vld [vmem:[%s5 + $0x68] sm:$0xff]
    %v544 = vld [vmem:[%s5 + $0x70] sm:$0xff]
    %v545 = vld [vmem:[%s5 + $0x78] sm:$0xff]
    %v546 = vld [vmem:[%s13] sm:$0x1]
    %548 = vset.pattern.permute.xlu0 0
    %549 = vperm.xlu0 %548, %v530
    %v550 = vpop.permute.xlu0 %549
    %553 = vset.pattern.permute.xlu0 0
    %554 = vperm.xlu0 %553, %v531
    %v555 = vpop.permute.xlu0 %554
    %558 = vset.pattern.permute.xlu0 0
    %559 = vperm.xlu0 %558, %v532
    %v560 = vpop.permute.xlu0 %559
    %563 = vset.pattern.permute.xlu0 0
    %564 = vperm.xlu0 %563, %v533
    %v565 = vpop.permute.xlu0 %564
    %568 = vset.pattern.permute.xlu0 0
    %569 = vperm.xlu0 %568, %v534
    %v570 = vpop.permute.xlu0 %569
    %573 = vset.pattern.permute.xlu0 0
    %574 = vperm.xlu0 %573, %v535
    %v575 = vpop.permute.xlu0 %574
    %578 = vset.pattern.permute.xlu0 0
    %579 = vperm.xlu0 %578, %v536
    %v580 = vpop.permute.xlu0 %579
    %583 = vset.pattern.permute.xlu0 0
    %584 = vperm.xlu0 %583, %v537
    %v585 = vpop.permute.xlu0 %584
    %588 = vset.pattern.permute.xlu0 0
    %589 = vperm.xlu0 %588, %v538
    %v590 = vpop.permute.xlu0 %589
    %593 = vset.pattern.permute.xlu0 0
    %594 = vperm.xlu0 %593, %v539
    %v595 = vpop.permute.xlu0 %594
    %598 = vset.pattern.permute.xlu0 0
    %599 = vperm.xlu0 %598, %v540
    %v600 = vpop.permute.xlu0 %599
    %603 = vset.pattern.permute.xlu0 0
    %604 = vperm.xlu0 %603, %v541
    %v605 = vpop.permute.xlu0 %604
    %608 = vset.pattern.permute.xlu0 0
    %609 = vperm.xlu0 %608, %v542
    %v610 = vpop.permute.xlu0 %609
    %613 = vset.pattern.permute.xlu0 0
    %614 = vperm.xlu0 %613, %v543
    %v615 = vpop.permute.xlu0 %614
    %618 = vset.pattern.permute.xlu0 0
    %619 = vperm.xlu0 %618, %v544
    %v620 = vpop.permute.xlu0 %619
    %623 = vset.pattern.permute.xlu0 0
    %624 = vperm.xlu0 %623, %v545
    %v625 = vpop.permute.xlu0 %624
    %v628 = vperm.slane %v546, 0
    %v630 = vmul.f32 %v550, %v628
    %v631 = vmul.f32 %v555, %v628
    %v632 = vmul.f32 %v560, %v628
    %v633 = vmul.f32 %v565, %v628
    %v634 = vmul.f32 %v570, %v628
    %v635 = vmul.f32 %v575, %v628
    %v636 = vmul.f32 %v580, %v628
    %v637 = vmul.f32 %v585, %v628
    %v638 = vmul.f32 %v590, %v628
    %v639 = vmul.f32 %v595, %v628
    %v640 = vmul.f32 %v600, %v628
    %v641 = vmul.f32 %v605, %v628
    %v642 = vmul.f32 %v610, %v628
    %v643 = vmul.f32 %v615, %v628
    %v644 = vmul.f32 %v620, %v628
    %v645 = vmul.f32 %v625, %v628
    %v646 = vpack.c.bf16 %v515, %v514
    %v647 = vpack.c.bf16 %v517, %v516
    %v648 = vpack.c.bf16 %v519, %v518
    %v649 = vpack.c.bf16 %v521, %v520
    %v650 = vpack.c.bf16 %v523, %v522
    %v651 = vpack.c.bf16 %v525, %v524
    %v652 = vpack.c.bf16 %v527, %v526
    %v653 = vpack.c.bf16 %v529, %v528
    %v654 = vld [vmem:[%s15] sm:$0xff]
    %v655 = vld [vmem:[%s15 + $0x8] sm:$0xff]
    %v656 = vpack.c.bf16 %v655, %v654
    %vm657 = vcmask 130048
    %v659 = vsel %vm657, %v646, 0
    %v662 = vsel %vm657, %v647, 0
    %v665 = vsel %vm657, %v648, 0
    %v668 = vsel %vm657, %v649, 0
    %v671 = vsel %vm657, %v650, 0
    %v674 = vsel %vm657, %v651, 0
    %v677 = vsel %vm657, %v652, 0
    %v680 = vsel %vm657, %v653, 0
    %682 = vmatpush.bf16.msra.mxu0 0
    %683 = vmatpush.bf16.msra.mxu0 0
    %684 = vmatpush.bf16.msra.mxu0 0
    %685 = vmatpush.bf16.msra.mxu0 0
    %686 = vmatpush.bf16.msra.mxu0 0
    %687 = vmatpush.bf16.msra.mxu0 0
    %688 = vmatpush.bf16.msra.mxu0 0
    %689 = vmatpush.bf16.msra.mxu0 %v656
    %690 = vmatmul.bf16.gmra.mxu0 %v659
    %v691 = vpop.f32.mrf.mxu0
    %v692 = vadd.f32 0.0, %v691
    %v693 = vpop.f32.mrf.mxu0
    %v694 = vadd.f32 0.0, %v693
    %695 = vmatmul.bf16.gmra.mxu0 %v662
    %v696 = vpop.f32.mrf.mxu0
    %v697 = vadd.f32 0.0, %v696
    %v698 = vpop.f32.mrf.mxu0
    %v699 = vadd.f32 0.0, %v698
    %700 = vmatmul.bf16.gmra.mxu0 %v665
    %v701 = vpop.f32.mrf.mxu0
    %v702 = vadd.f32 0.0, %v701
    %v703 = vpop.f32.mrf.mxu0
    %v704 = vadd.f32 0.0, %v703
    %705 = vmatmul.bf16.gmra.mxu0 %v668
    %v706 = vpop.f32.mrf.mxu0
    %v707 = vadd.f32 0.0, %v706
    %v708 = vpop.f32.mrf.mxu0
    %v709 = vadd.f32 0.0, %v708
    %710 = vmatmul.bf16.gmra.mxu0 %v671
    %v711 = vpop.f32.mrf.mxu0
    %v712 = vadd.f32 0.0, %v711
    %v713 = vpop.f32.mrf.mxu0
    %v714 = vadd.f32 0.0, %v713
    %715 = vmatmul.bf16.gmra.mxu0 %v674
    %v716 = vpop.f32.mrf.mxu0
    %v717 = vadd.f32 0.0, %v716
    %v718 = vpop.f32.mrf.mxu0
    %v719 = vadd.f32 0.0, %v718
    %720 = vmatmul.bf16.gmra.mxu0 %v677
    %v721 = vpop.f32.mrf.mxu0
    %v722 = vadd.f32 0.0, %v721
    %v723 = vpop.f32.mrf.mxu0
    %v724 = vadd.f32 0.0, %v723
    %725 = vmatmul.bf16.gmra.mxu0 %v680
    %v726 = vpop.f32.mrf.mxu0
    %v727 = vadd.f32 0.0, %v726
    %v728 = vpop.f32.mrf.mxu0
    %v729 = vadd.f32 0.0, %v728
    %730 = vdwg.mxu0
    %v731 = vadd.f32 %v630, %v692
    %v732 = vadd.f32 %v631, %v694
    %v733 = vadd.f32 %v632, %v697
    %v734 = vadd.f32 %v633, %v699
    %v735 = vadd.f32 %v634, %v702
    %v736 = vadd.f32 %v635, %v704
    %v737 = vadd.f32 %v636, %v707
    %v738 = vadd.f32 %v637, %v709
    %v739 = vadd.f32 %v638, %v712
    %v740 = vadd.f32 %v639, %v714
    %v741 = vadd.f32 %v640, %v717
    %v742 = vadd.f32 %v641, %v719
    %v743 = vadd.f32 %v642, %v722
    %v744 = vadd.f32 %v643, %v724
    %v745 = vadd.f32 %v644, %v727
    %v746 = vadd.f32 %v645, %v729
    %v747 = vld [vmem:[%s17] sm:$0x1]
    %v749 = vperm.slane %v747, 0
    %v751 = vadd.f32 %v731, %v749
    %v752 = vadd.f32 %v732, %v749
    %v753 = vadd.f32 %v733, %v749
    %v754 = vadd.f32 %v734, %v749
    %v755 = vadd.f32 %v735, %v749
    %v756 = vadd.f32 %v736, %v749
    %v757 = vadd.f32 %v737, %v749
    %v758 = vadd.f32 %v738, %v749
    %v759 = vadd.f32 %v739, %v749
    %v760 = vadd.f32 %v740, %v749
    %v761 = vadd.f32 %v741, %v749
    %v762 = vadd.f32 %v742, %v749
    %v763 = vadd.f32 %v743, %v749
    %v764 = vadd.f32 %v744, %v749
    %v765 = vadd.f32 %v745, %v749
    %v766 = vadd.f32 %v746, %v749
    %v767 = vld [vmem:[%s27] sm:$0x1]
    %v769 = vperm.slane %v767, 0
    %v771 = vmul.f32 %v550, %v769
    %v772 = vmul.f32 %v555, %v769
    %v773 = vmul.f32 %v560, %v769
    %v774 = vmul.f32 %v565, %v769
    %v775 = vmul.f32 %v570, %v769
    %v776 = vmul.f32 %v575, %v769
    %v777 = vmul.f32 %v580, %v769
    %v778 = vmul.f32 %v585, %v769
    %v779 = vmul.f32 %v590, %v769
    %v780 = vmul.f32 %v595, %v769
    %v781 = vmul.f32 %v600, %v769
    %v782 = vmul.f32 %v605, %v769
    %v783 = vmul.f32 %v610, %v769
    %v784 = vmul.f32 %v615, %v769
    %v785 = vmul.f32 %v620, %v769
    %v786 = vmul.f32 %v625, %v769
    %v787 = vld [vmem:[%s29] sm:$0xff]
    %v788 = vld [vmem:[%s29 + $0x8] sm:$0xff]
    %v789 = vpack.c.bf16 %v788, %v787
    %790 = vmatpush.bf16.msra.mxu0 0
    %791 = vmatpush.bf16.msra.mxu0 0
    %792 = vmatpush.bf16.msra.mxu0 0
    %793 = vmatpush.bf16.msra.mxu0 0
    %794 = vmatpush.bf16.msra.mxu0 0
    %795 = vmatpush.bf16.msra.mxu0 0
    %796 = vmatpush.bf16.msra.mxu0 0
    %797 = vmatpush.bf16.msra.mxu0 %v789
    %798 = vmatmul.bf16.gmra.mxu0 %v659
    %v799 = vpop.f32.mrf.mxu0
    %v800 = vadd.f32 0.0, %v799
    %v801 = vpop.f32.mrf.mxu0
    %v802 = vadd.f32 0.0, %v801
    %803 = vmatmul.bf16.gmra.mxu0 %v662
    %v804 = vpop.f32.mrf.mxu0
    %v805 = vadd.f32 0.0, %v804
    %v806 = vpop.f32.mrf.mxu0
    %v807 = vadd.f32 0.0, %v806
    %808 = vmatmul.bf16.gmra.mxu0 %v665
    %v809 = vpop.f32.mrf.mxu0
    %v810 = vadd.f32 0.0, %v809
    %v811 = vpop.f32.mrf.mxu0
    %v812 = vadd.f32 0.0, %v811
    %813 = vmatmul.bf16.gmra.mxu0 %v668
    %v814 = vpop.f32.mrf.mxu0
    %v815 = vadd.f32 0.0, %v814
    %v816 = vpop.f32.mrf.mxu0
    %v817 = vadd.f32 0.0, %v816
    %818 = vmatmul.bf16.gmra.mxu0 %v671
    %v819 = vpop.f32.mrf.mxu0
    %v820 = vadd.f32 0.0, %v819
    %v821 = vpop.f32.mrf.mxu0
    %v822 = vadd.f32 0.0, %v821
    %823 = vmatmul.bf16.gmra.mxu0 %v674
    %v824 = vpop.f32.mrf.mxu0
    %v825 = vadd.f32 0.0, %v824
    %v826 = vpop.f32.mrf.mxu0
    %v827 = vadd.f32 0.0, %v826
    %828 = vmatmul.bf16.gmra.mxu0 %v677
    %v829 = vpop.f32.mrf.mxu0
    %v830 = vadd.f32 0.0, %v829
    %v831 = vpop.f32.mrf.mxu0
    %v832 = vadd.f32 0.0, %v831
    %833 = vmatmul.bf16.gmra.mxu0 %v680
    %v834 = vpop.f32.mrf.mxu0
    %v835 = vadd.f32 0.0, %v834
    %v836 = vpop.f32.mrf.mxu0
    %v837 = vadd.f32 0.0, %v836
    %838 = vdwg.mxu0
    %v839 = vadd.f32 %v771, %v800
    %v840 = vadd.f32 %v772, %v802
    %v841 = vadd.f32 %v773, %v805
    %v842 = vadd.f32 %v774, %v807
    %v843 = vadd.f32 %v775, %v810
    %v844 = vadd.f32 %v776, %v812
    %v845 = vadd.f32 %v777, %v815
    %v846 = vadd.f32 %v778, %v817
    %v847 = vadd.f32 %v779, %v820
    %v848 = vadd.f32 %v780, %v822
    %v849 = vadd.f32 %v781, %v825
    %v850 = vadd.f32 %v782, %v827
    %v851 = vadd.f32 %v783, %v830
    %v852 = vadd.f32 %v784, %v832
    %v853 = vadd.f32 %v785, %v835
    %v854 = vadd.f32 %v786, %v837
    %v855 = vld [vmem:[#allocation7] sm:$0x1]
    %v857 = vperm.slane %v855, 0
    %v859 = vadd.f32 %v839, %v857
    %v860 = vadd.f32 %v840, %v857
    %v861 = vadd.f32 %v841, %v857
    %v862 = vadd.f32 %v842, %v857
    %v863 = vadd.f32 %v843, %v857
    %v864 = vadd.f32 %v844, %v857
    %v865 = vadd.f32 %v845, %v857
    %v866 = vadd.f32 %v846, %v857
    %v867 = vadd.f32 %v847, %v857
    %v868 = vadd.f32 %v848, %v857
    %v869 = vadd.f32 %v849, %v857
    %v870 = vadd.f32 %v850, %v857
    %v871 = vadd.f32 %v851, %v857
    %v872 = vadd.f32 %v852, %v857
    %v873 = vadd.f32 %v853, %v857
    %v874 = vadd.f32 %v854, %v857
    %v875 = vpack.c.bf16 %v499, %v498
    %v876 = vpack.c.bf16 %v501, %v500
    %v877 = vpack.c.bf16 %v503, %v502
    %v878 = vpack.c.bf16 %v505, %v504
    %v879 = vpack.c.bf16 %v507, %v506
    %v880 = vpack.c.bf16 %v509, %v508
    %v881 = vpack.c.bf16 %v511, %v510
    %v882 = vpack.c.bf16 %v513, %v512
    %v883 = vld [vmem:[%s11] sm:$0x7]
    %v884 = vpack.c.bf16 %v883, %v883
    %vm885 = vcmask 23552
    %v887 = vsel %vm885, %v875, 0
    %v890 = vsel %vm885, %v876, 0
    %v893 = vsel %vm885, %v877, 0
    %v896 = vsel %vm885, %v878, 0
    %v899 = vsel %vm885, %v879, 0
    %v902 = vsel %vm885, %v880, 0
    %v905 = vsel %vm885, %v881, 0
    %v908 = vsel %vm885, %v882, 0
    %vm910 = vcmask 1040384
    %vm911 = vcmask 1041408
    %v912 = vsel %vm910, 4294967295, 65535
    %v913 = vsel %vm911, %v912, 0
    %v915 = vand.u32 %v884, %v913
    %917 = vmatpush.bf16.msra.mxu0 0
    %918 = vmatpush.bf16.msra.mxu0 0
    %919 = vmatpush.bf16.msra.mxu0 0
    %920 = vmatpush.bf16.msra.mxu0 0
    %921 = vmatpush.bf16.msra.mxu0 0
    %922 = vmatpush.bf16.msra.mxu0 0
    %923 = vmatpush.bf16.msra.mxu0 0
    %924 = vmatpush.bf16.msra.mxu0 %v915
    %925 = vmatmul.bf16.gmra.mxu0 %v887
    %v926 = vpop.f32.mrf.mxu0
    %v927 = vadd.f32 %v751, %v926
    %v928 = vpop.f32.mrf.mxu0
    %v929 = vadd.f32 %v752, %v928
    %930 = vmatmul.bf16.gmra.mxu0 %v890
    %v931 = vpop.f32.mrf.mxu0
    %v932 = vadd.f32 %v753, %v931
    %v933 = vpop.f32.mrf.mxu0
    %v934 = vadd.f32 %v754, %v933
    %935 = vmatmul.bf16.gmra.mxu0 %v893
    %v936 = vpop.f32.mrf.mxu0
    %v937 = vadd.f32 %v755, %v936
    %v938 = vpop.f32.mrf.mxu0
    %v939 = vadd.f32 %v756, %v938
    %940 = vmatmul.bf16.gmra.mxu0 %v896
    %v941 = vpop.f32.mrf.mxu0
    %v942 = vadd.f32 %v757, %v941
    %v943 = vpop.f32.mrf.mxu0
    %v944 = vadd.f32 %v758, %v943
    %945 = vmatmul.bf16.gmra.mxu0 %v899
    %v946 = vpop.f32.mrf.mxu0
    %v947 = vadd.f32 %v759, %v946
    %v948 = vpop.f32.mrf.mxu0
    %v949 = vadd.f32 %v760, %v948
    %950 = vmatmul.bf16.gmra.mxu0 %v902
    %v951 = vpop.f32.mrf.mxu0
    %v952 = vadd.f32 %v761, %v951
    %v953 = vpop.f32.mrf.mxu0
    %v954 = vadd.f32 %v762, %v953
    %955 = vmatmul.bf16.gmra.mxu0 %v905
    %v956 = vpop.f32.mrf.mxu0
    %v957 = vadd.f32 %v763, %v956
    %v958 = vpop.f32.mrf.mxu0
    %v959 = vadd.f32 %v764, %v958
    %960 = vmatmul.bf16.gmra.mxu0 %v908
    %v961 = vpop.f32.mrf.mxu0
    %v962 = vadd.f32 %v765, %v961
    %v963 = vpop.f32.mrf.mxu0
    %v964 = vadd.f32 %v766, %v963
    %965 = vdwg.mxu0
    %v966 = vmax.f32 %v927, 0.0
    %v967 = vmax.f32 %v929, 0.0
    %v968 = vmax.f32 %v932, 0.0
    %v969 = vmax.f32 %v934, 0.0
    %v970 = vmax.f32 %v937, 0.0
    %v971 = vmax.f32 %v939, 0.0
    %v972 = vmax.f32 %v942, 0.0
    %v973 = vmax.f32 %v944, 0.0
    %v974 = vmax.f32 %v947, 0.0
    %v975 = vmax.f32 %v949, 0.0
    %v976 = vmax.f32 %v952, 0.0
    %v977 = vmax.f32 %v954, 0.0
    %v978 = vmax.f32 %v957, 0.0
    %v979 = vmax.f32 %v959, 0.0
    %v980 = vmax.f32 %v962, 0.0
    %v981 = vmax.f32 %v964, 0.0
    %v982 = vld [vmem:[#allocation6] sm:$0x7]
    %v983 = vpack.c.bf16 %v982, %v982
    %v985 = vand.u32 %v983, %v913
    %987 = vmatpush.bf16.msra.mxu0 0
    %988 = vmatpush.bf16.msra.mxu0 0
    %989 = vmatpush.bf16.msra.mxu0 0
    %990 = vmatpush.bf16.msra.mxu0 0
    %991 = vmatpush.bf16.msra.mxu0 0
    %992 = vmatpush.bf16.msra.mxu0 0
    %993 = vmatpush.bf16.msra.mxu0 0
    %994 = vmatpush.bf16.msra.mxu0 %v985
    %995 = vmatmul.bf16.gmra.mxu0 %v887
    %v996 = vpop.f32.mrf.mxu0
    %v997 = vadd.f32 0.0, %v996
    %v998 = vpop.f32.mrf.mxu0
    %v999 = vadd.f32 0.0, %v998
    %1000 = vmatmul.bf16.gmra.mxu0 %v890
    %v1001 = vpop.f32.mrf.mxu0
    %v1002 = vadd.f32 0.0, %v1001
    %v1003 = vpop.f32.mrf.mxu0
    %v1004 = vadd.f32 0.0, %v1003
    %1005 = vmatmul.bf16.gmra.mxu0 %v893
    %v1006 = vpop.f32.mrf.mxu0
    %v1007 = vadd.f32 0.0, %v1006
    %v1008 = vpop.f32.mrf.mxu0
    %v1009 = vadd.f32 0.0, %v1008
    %1010 = vmatmul.bf16.gmra.mxu0 %v896
    %v1011 = vpop.f32.mrf.mxu0
    %v1012 = vadd.f32 0.0, %v1011
    %v1013 = vpop.f32.mrf.mxu0
    %v1014 = vadd.f32 0.0, %v1013
    %1015 = vmatmul.bf16.gmra.mxu0 %v899
    %v1016 = vpop.f32.mrf.mxu0
    %v1017 = vadd.f32 0.0, %v1016
    %v1018 = vpop.f32.mrf.mxu0
    %v1019 = vadd.f32 0.0, %v1018
    %1020 = vmatmul.bf16.gmra.mxu0 %v902
    %v1021 = vpop.f32.mrf.mxu0
    %v1022 = vadd.f32 0.0, %v1021
    %v1023 = vpop.f32.mrf.mxu0
    %v1024 = vadd.f32 0.0, %v1023
    %1025 = vmatmul.bf16.gmra.mxu0 %v905
    %v1026 = vpop.f32.mrf.mxu0
    %v1027 = vadd.f32 0.0, %v1026
    %v1028 = vpop.f32.mrf.mxu0
    %v1029 = vadd.f32 0.0, %v1028
    %1030 = vmatmul.bf16.gmra.mxu0 %v908
    %v1031 = vpop.f32.mrf.mxu0
    %v1032 = vadd.f32 0.0, %v1031
    %v1033 = vpop.f32.mrf.mxu0
    %v1034 = vadd.f32 0.0, %v1033
    %1035 = vdwg.mxu0
    %v1036 = vpack.c.bf16 %v967, %v966
    %v1037 = vpack.c.bf16 %v969, %v968
    %v1038 = vpack.c.bf16 %v971, %v970
    %v1039 = vpack.c.bf16 %v973, %v972
    %v1040 = vpack.c.bf16 %v975, %v974
    %v1041 = vpack.c.bf16 %v977, %v976
    %v1042 = vpack.c.bf16 %v979, %v978
    %v1043 = vpack.c.bf16 %v981, %v980
    %v1044 = vld [vmem:[%s19] sm:$0xff]
    %v1045 = vld [vmem:[%s19 + $0x8] sm:$0xff]
    %v1046 = vld [vmem:[%s19 + $0x10] sm:$0xff]
    %v1047 = vld [vmem:[%s19 + $0x18] sm:$0xff]
    %v1048 = vld [vmem:[%s19 + $0x20] sm:$0xff]
    %v1049 = vld [vmem:[%s19 + $0x28] sm:$0xff]
    %v1050 = vld [vmem:[%s19 + $0x30] sm:$0xff]
    %v1051 = vld [vmem:[%s19 + $0x38] sm:$0xff]
    %v1052 = vld [vmem:[%s19 + $0x40] sm:$0xff]
    %v1053 = vld [vmem:[%s19 + $0x48] sm:$0xff]
    %v1054 = vld [vmem:[%s19 + $0x50] sm:$0xff]
    %v1055 = vld [vmem:[%s19 + $0x58] sm:$0xff]
    %v1056 = vld [vmem:[%s19 + $0x60] sm:$0xff]
    %v1057 = vld [vmem:[%s19 + $0x68] sm:$0xff]
    %v1058 = vld [vmem:[%s19 + $0x70] sm:$0xff]
    %v1059 = vld [vmem:[%s19 + $0x78] sm:$0xff]
    %v1060 = vpack.c.bf16 %v1045, %v1044
    %v1061 = vpack.c.bf16 %v1047, %v1046
    %v1062 = vpack.c.bf16 %v1049, %v1048
    %v1063 = vpack.c.bf16 %v1051, %v1050
    %v1064 = vpack.c.bf16 %v1053, %v1052
    %v1065 = vpack.c.bf16 %v1055, %v1054
    %v1066 = vpack.c.bf16 %v1057, %v1056
    %v1067 = vpack.c.bf16 %v1059, %v1058
    %1068 = vmatpush.bf16.msra.mxu0 %v1067
    %1069 = vmatpush.bf16.msra.mxu0 %v1066
    %1070 = vmatpush.bf16.msra.mxu0 %v1065
    %1071 = vmatpush.bf16.msra.mxu0 %v1064
    %1072 = vmatpush.bf16.msra.mxu0 %v1063
    %1073 = vmatpush.bf16.msra.mxu0 %v1062
    %1074 = vmatpush.bf16.msra.mxu0 %v1061
    %1075 = vmatpush.bf16.msra.mxu0 %v1060
    %1076 = vmatmul.bf16.gmra.mxu0 %v1036
    %v1077 = vpop.f32.mrf.mxu0
    %v1078 = vadd.f32 %v997, %v1077
    %v1079 = vpop.f32.mrf.mxu0
    %v1080 = vadd.f32 %v999, %v1079
    %1081 = vmatmul.bf16.gmra.mxu0 %v1037
    %v1082 = vpop.f32.mrf.mxu0
    %v1083 = vadd.f32 %v1002, %v1082
    %v1084 = vpop.f32.mrf.mxu0
    %v1085 = vadd.f32 %v1004, %v1084
    %1086 = vmatmul.bf16.gmra.mxu0 %v1038
    %v1087 = vpop.f32.mrf.mxu0
    %v1088 = vadd.f32 %v1007, %v1087
    %v1089 = vpop.f32.mrf.mxu0
    %v1090 = vadd.f32 %v1009, %v1089
    %1091 = vmatmul.bf16.gmra.mxu0 %v1039
    %v1092 = vpop.f32.mrf.mxu0
    %v1093 = vadd.f32 %v1012, %v1092
    %v1094 = vpop.f32.mrf.mxu0
    %v1095 = vadd.f32 %v1014, %v1094
    %1096 = vmatmul.bf16.gmra.mxu0 %v1040
    %v1097 = vpop.f32.mrf.mxu0
    %v1098 = vadd.f32 %v1017, %v1097
    %v1099 = vpop.f32.mrf.mxu0
    %v1100 = vadd.f32 %v1019, %v1099
    %1101 = vmatmul.bf16.gmra.mxu0 %v1041
    %v1102 = vpop.f32.mrf.mxu0
    %v1103 = vadd.f32 %v1022, %v1102
    %v1104 = vpop.f32.mrf.mxu0
    %v1105 = vadd.f32 %v1024, %v1104
    %1106 = vmatmul.bf16.gmra.mxu0 %v1042
    %v1107 = vpop.f32.mrf.mxu0
    %v1108 = vadd.f32 %v1027, %v1107
    %v1109 = vpop.f32.mrf.mxu0
    %v1110 = vadd.f32 %v1029, %v1109
    %1111 = vmatmul.bf16.gmra.mxu0 %v1043
    %v1112 = vpop.f32.mrf.mxu0
    %v1113 = vadd.f32 %v1032, %v1112
    %v1114 = vpop.f32.mrf.mxu0
    %v1115 = vadd.f32 %v1034, %v1114
    %1116 = vdwg.mxu0
    %v1117 = vadd.f32 %v1078, %v859
    %v1118 = vadd.f32 %v1080, %v860
    %v1119 = vadd.f32 %v1083, %v861
    %v1120 = vadd.f32 %v1085, %v862
    %v1121 = vadd.f32 %v1088, %v863
    %v1122 = vadd.f32 %v1090, %v864
    %v1123 = vadd.f32 %v1093, %v865
    %v1124 = vadd.f32 %v1095, %v866
    %v1125 = vadd.f32 %v1098, %v867
    %v1126 = vadd.f32 %v1100, %v868
    %v1127 = vadd.f32 %v1103, %v869
    %v1128 = vadd.f32 %v1105, %v870
    %v1129 = vadd.f32 %v1108, %v871
    %v1130 = vadd.f32 %v1110, %v872
    %v1131 = vadd.f32 %v1113, %v873
    %v1132 = vadd.f32 %v1115, %v874
    %v1133 = vmax.f32 %v1117, 0.0
    %v1134 = vmax.f32 %v1118, 0.0
    %v1135 = vmax.f32 %v1119, 0.0
    %v1136 = vmax.f32 %v1120, 0.0
    %v1137 = vmax.f32 %v1121, 0.0
    %v1138 = vmax.f32 %v1122, 0.0
    %v1139 = vmax.f32 %v1123, 0.0
    %v1140 = vmax.f32 %v1124, 0.0
    %v1141 = vmax.f32 %v1125, 0.0
    %v1142 = vmax.f32 %v1126, 0.0
    %v1143 = vmax.f32 %v1127, 0.0
    %v1144 = vmax.f32 %v1128, 0.0
    %v1145 = vmax.f32 %v1129, 0.0
    %v1146 = vmax.f32 %v1130, 0.0
    %v1147 = vmax.f32 %v1131, 0.0
    %v1148 = vmax.f32 %v1132, 0.0
    %v1149 = vpack.c.bf16 %v1134, %v1133
    %v1150 = vpack.c.bf16 %v1136, %v1135
    %v1151 = vpack.c.bf16 %v1138, %v1137
    %v1152 = vpack.c.bf16 %v1140, %v1139
    %v1153 = vpack.c.bf16 %v1142, %v1141
    %v1154 = vpack.c.bf16 %v1144, %v1143
    %v1155 = vpack.c.bf16 %v1146, %v1145
    %v1156 = vpack.c.bf16 %v1148, %v1147
    %v1157 = vld [vmem:[%s33] sm:$0xff]
    %v1158 = vld [vmem:[%s33 + $0x8] sm:$0xff]
    %v1159 = vld [vmem:[%s33 + $0x10] sm:$0xff]
    %v1160 = vld [vmem:[%s33 + $0x18] sm:$0xff]
    %v1161 = vld [vmem:[%s33 + $0x20] sm:$0xff]
    %v1162 = vld [vmem:[%s33 + $0x28] sm:$0xff]
    %v1163 = vld [vmem:[%s33 + $0x30] sm:$0xff]
    %v1164 = vld [vmem:[%s33 + $0x38] sm:$0xff]
    %v1165 = vld [vmem:[%s33 + $0x40] sm:$0xff]
    %v1166 = vld [vmem:[%s33 + $0x48] sm:$0xff]
    %v1167 = vld [vmem:[%s33 + $0x50] sm:$0xff]
    %v1168 = vld [vmem:[%s33 + $0x58] sm:$0xff]
    %v1169 = vld [vmem:[%s33 + $0x60] sm:$0xff]
    %v1170 = vld [vmem:[%s33 + $0x68] sm:$0xff]
    %v1171 = vld [vmem:[%s33 + $0x70] sm:$0xff]
    %v1172 = vld [vmem:[%s33 + $0x78] sm:$0xff]
    %v1173 = vpack.c.bf16 %v1158, %v1157
    %v1174 = vpack.c.bf16 %v1160, %v1159
    %v1175 = vpack.c.bf16 %v1162, %v1161
    %v1176 = vpack.c.bf16 %v1164, %v1163
    %v1177 = vpack.c.bf16 %v1166, %v1165
    %v1178 = vpack.c.bf16 %v1168, %v1167
    %v1179 = vpack.c.bf16 %v1170, %v1169
    %v1180 = vpack.c.bf16 %v1172, %v1171
    %v1181 = vld [vmem:[#allocation9] sm:$0x1]
    %v1183 = vperm.slane %v1181, 0
    %1185 = vmatpush.bf16.msra.mxu0 %v1180
    %1186 = vmatpush.bf16.msra.mxu0 %v1179
    %1187 = vmatpush.bf16.msra.mxu0 %v1178
    %1188 = vmatpush.bf16.msra.mxu0 %v1177
    %1189 = vmatpush.bf16.msra.mxu0 %v1176
    %1190 = vmatpush.bf16.msra.mxu0 %v1175
    %1191 = vmatpush.bf16.msra.mxu0 %v1174
    %1192 = vmatpush.bf16.msra.mxu0 %v1173
    %1193 = vmatmul.bf16.gmra.mxu0 %v1149
    %v1194 = vpop.f32.mrf.mxu0
    %v1195 = vadd.f32 %v1183, %v1194
    %v1196 = vpop.f32.mrf.mxu0
    %v1197 = vadd.f32 %v1183, %v1196
    %1198 = vmatmul.bf16.gmra.mxu0 %v1150
    %v1199 = vpop.f32.mrf.mxu0
    %v1200 = vadd.f32 %v1183, %v1199
    %v1201 = vpop.f32.mrf.mxu0
    %v1202 = vadd.f32 %v1183, %v1201
    %1203 = vmatmul.bf16.gmra.mxu0 %v1151
    %v1204 = vpop.f32.mrf.mxu0
    %v1205 = vadd.f32 %v1183, %v1204
    %v1206 = vpop.f32.mrf.mxu0
    %v1207 = vadd.f32 %v1183, %v1206
    %1208 = vmatmul.bf16.gmra.mxu0 %v1152
    %v1209 = vpop.f32.mrf.mxu0
    %v1210 = vadd.f32 %v1183, %v1209
    %v1211 = vpop.f32.mrf.mxu0
    %v1212 = vadd.f32 %v1183, %v1211
    %1213 = vmatmul.bf16.gmra.mxu0 %v1153
    %v1214 = vpop.f32.mrf.mxu0
    %v1215 = vadd.f32 %v1183, %v1214
    %v1216 = vpop.f32.mrf.mxu0
    %v1217 = vadd.f32 %v1183, %v1216
    %1218 = vmatmul.bf16.gmra.mxu0 %v1154
    %v1219 = vpop.f32.mrf.mxu0
    %v1220 = vadd.f32 %v1183, %v1219
    %v1221 = vpop.f32.mrf.mxu0
    %v1222 = vadd.f32 %v1183, %v1221
    %1223 = vmatmul.bf16.gmra.mxu0 %v1155
    %v1224 = vpop.f32.mrf.mxu0
    %v1225 = vadd.f32 %v1183, %v1224
    %v1226 = vpop.f32.mrf.mxu0
    %v1227 = vadd.f32 %v1183, %v1226
    %1228 = vmatmul.bf16.gmra.mxu0 %v1156
    %v1229 = vpop.f32.mrf.mxu0
    %v1230 = vadd.f32 %v1183, %v1229
    %v1231 = vpop.f32.mrf.mxu0
    %v1232 = vadd.f32 %v1183, %v1231
    %1233 = vdwg.mxu0
    %v1234 = vmax.f32 %v1195, 0.0
    %v1235 = vmax.f32 %v1197, 0.0
    %v1236 = vmax.f32 %v1200, 0.0
    %v1237 = vmax.f32 %v1202, 0.0
    %v1238 = vmax.f32 %v1205, 0.0
    %v1239 = vmax.f32 %v1207, 0.0
    %v1240 = vmax.f32 %v1210, 0.0
    %v1241 = vmax.f32 %v1212, 0.0
    %v1242 = vmax.f32 %v1215, 0.0
    %v1243 = vmax.f32 %v1217, 0.0
    %v1244 = vmax.f32 %v1220, 0.0
    %v1245 = vmax.f32 %v1222, 0.0
    %v1246 = vmax.f32 %v1225, 0.0
    %v1247 = vmax.f32 %v1227, 0.0
    %v1248 = vmax.f32 %v1230, 0.0
    %v1249 = vmax.f32 %v1232, 0.0
    %v1250 = vpack.c.bf16 %v1235, %v1234
    %v1251 = vpack.c.bf16 %v1237, %v1236
    %v1252 = vpack.c.bf16 %v1239, %v1238
    %v1253 = vpack.c.bf16 %v1241, %v1240
    %v1254 = vpack.c.bf16 %v1243, %v1242
    %v1255 = vpack.c.bf16 %v1245, %v1244
    %v1256 = vpack.c.bf16 %v1247, %v1246
    %v1257 = vpack.c.bf16 %v1249, %v1248
    %v1258 = vld [vmem:[%s37] sm:$0xff]
    %v1259 = vld [vmem:[%s37 + $0x8] sm:$0xff]
    %v1260 = vld [vmem:[%s37 + $0x10] sm:$0xff]
    %v1261 = vld [vmem:[%s37 + $0x18] sm:$0xff]
    %v1262 = vld [vmem:[%s37 + $0x20] sm:$0xff]
    %v1263 = vld [vmem:[%s37 + $0x28] sm:$0xff]
    %v1264 = vld [vmem:[%s37 + $0x30] sm:$0xff]
    %v1265 = vld [vmem:[%s37 + $0x38] sm:$0xff]
    %v1266 = vld [vmem:[%s37 + $0x40] sm:$0xff]
    %v1267 = vld [vmem:[%s37 + $0x48] sm:$0xff]
    %v1268 = vld [vmem:[%s37 + $0x50] sm:$0xff]
    %v1269 = vld [vmem:[%s37 + $0x58] sm:$0xff]
    %v1270 = vld [vmem:[%s37 + $0x60] sm:$0xff]
    %v1271 = vld [vmem:[%s37 + $0x68] sm:$0xff]
    %v1272 = vld [vmem:[%s37 + $0x70] sm:$0xff]
    %v1273 = vld [vmem:[%s37 + $0x78] sm:$0xff]
    %v1274 = vpack.c.bf16 %v1259, %v1258
    %v1275 = vpack.c.bf16 %v1261, %v1260
    %v1276 = vpack.c.bf16 %v1263, %v1262
    %v1277 = vpack.c.bf16 %v1265, %v1264
    %v1278 = vpack.c.bf16 %v1267, %v1266
    %v1279 = vpack.c.bf16 %v1269, %v1268
    %v1280 = vpack.c.bf16 %v1271, %v1270
    %v1281 = vpack.c.bf16 %v1273, %v1272
    %1282 = vmatpush.bf16.msra.mxu0 %v1281
    %1283 = vmatpush.bf16.msra.mxu0 %v1280
    %1284 = vmatpush.bf16.msra.mxu0 %v1279
    %1285 = vmatpush.bf16.msra.mxu0 %v1278
    %1286 = vmatpush.bf16.msra.mxu0 %v1277
    %1287 = vmatpush.bf16.msra.mxu0 %v1276
    %1288 = vmatpush.bf16.msra.mxu0 %v1275
    %1289 = vmatpush.bf16.msra.mxu0 %v1274
    %1290 = vmatmul.bf16.gmra.mxu0 %v1250
    %v1291 = vpop.f32.mrf.mxu0
    %v1292 = vadd.f32 0.0, %v1291
    %v1293 = vpop.f32.mrf.mxu0
    %v1294 = vadd.f32 0.0, %v1293
    %1295 = vmatmul.bf16.gmra.mxu0 %v1251
    %v1296 = vpop.f32.mrf.mxu0
    %v1297 = vadd.f32 0.0, %v1296
    %v1298 = vpop.f32.mrf.mxu0
    %v1299 = vadd.f32 0.0, %v1298
    %1300 = vmatmul.bf16.gmra.mxu0 %v1252
    %v1301 = vpop.f32.mrf.mxu0
    %v1302 = vadd.f32 0.0, %v1301
    %v1303 = vpop.f32.mrf.mxu0
    %v1304 = vadd.f32 0.0, %v1303
    %1305 = vmatmul.bf16.gmra.mxu0 %v1253
    %v1306 = vpop.f32.mrf.mxu0
    %v1307 = vadd.f32 0.0, %v1306
    %v1308 = vpop.f32.mrf.mxu0
    %v1309 = vadd.f32 0.0, %v1308
    %1310 = vmatmul.bf16.gmra.mxu0 %v1254
    %v1311 = vpop.f32.mrf.mxu0
    %v1312 = vadd.f32 0.0, %v1311
    %v1313 = vpop.f32.mrf.mxu0
    %v1314 = vadd.f32 0.0, %v1313
    %1315 = vmatmul.bf16.gmra.mxu0 %v1255
    %v1316 = vpop.f32.mrf.mxu0
    %v1317 = vadd.f32 0.0, %v1316
    %v1318 = vpop.f32.mrf.mxu0
    %v1319 = vadd.f32 0.0, %v1318
    %1320 = vmatmul.bf16.gmra.mxu0 %v1256
    %v1321 = vpop.f32.mrf.mxu0
    %v1322 = vadd.f32 0.0, %v1321
    %v1323 = vpop.f32.mrf.mxu0
    %v1324 = vadd.f32 0.0, %v1323
    %1325 = vmatmul.bf16.gmra.mxu0 %v1257
    %v1326 = vpop.f32.mrf.mxu0
    %v1327 = vadd.f32 0.0, %v1326
    %v1328 = vpop.f32.mrf.mxu0
    %v1329 = vadd.f32 0.0, %v1328
    %1330 = vdwg.mxu0
    %v1331 = vadd.f32 %v498, %v1292
    %v1332 = vadd.f32 %v499, %v1294
    %v1333 = vadd.f32 %v500, %v1297
    %v1334 = vadd.f32 %v501, %v1299
    %v1335 = vadd.f32 %v502, %v1302
    %v1336 = vadd.f32 %v503, %v1304
    %v1337 = vadd.f32 %v504, %v1307
    %v1338 = vadd.f32 %v505, %v1309
    %v1339 = vadd.f32 %v506, %v1312
    %v1340 = vadd.f32 %v507, %v1314
    %v1341 = vadd.f32 %v508, %v1317
    %v1342 = vadd.f32 %v509, %v1319
    %v1343 = vadd.f32 %v510, %v1322
    %v1344 = vadd.f32 %v511, %v1324
    %v1345 = vadd.f32 %v512, %v1327
    %v1346 = vadd.f32 %v513, %v1329
    %1363 = vrot.lane.b32.xlu0 %v1292, 125
    %v1364 = vpop.permute.xlu0 %1363
    %1365 = vrot.lane.b32.xlu0 %v1294, 125
    %v1366 = vpop.permute.xlu0 %1365
    %1367 = vrot.lane.b32.xlu0 %v1297, 125
    %v1368 = vpop.permute.xlu0 %1367
    %1369 = vrot.lane.b32.xlu0 %v1299, 125
    %v1370 = vpop.permute.xlu0 %1369
    %1371 = vrot.lane.b32.xlu0 %v1302, 125
    %v1372 = vpop.permute.xlu0 %1371
    %1373 = vrot.lane.b32.xlu0 %v1304, 125
    %v1374 = vpop.permute.xlu0 %1373
    %1375 = vrot.lane.b32.xlu0 %v1307, 125
    %v1376 = vpop.permute.xlu0 %1375
    %1377 = vrot.lane.b32.xlu0 %v1309, 125
    %v1378 = vpop.permute.xlu0 %1377
    %1379 = vrot.lane.b32.xlu0 %v1312, 125
    %v1380 = vpop.permute.xlu0 %1379
    %1381 = vrot.lane.b32.xlu0 %v1314, 125
    %v1382 = vpop.permute.xlu0 %1381
    %1383 = vrot.lane.b32.xlu0 %v1317, 125
    %v1384 = vpop.permute.xlu0 %1383
    %1385 = vrot.lane.b32.xlu0 %v1319, 125
    %v1386 = vpop.permute.xlu0 %1385
    %1387 = vrot.lane.b32.xlu0 %v1322, 125
    %v1388 = vpop.permute.xlu0 %1387
    %1389 = vrot.lane.b32.xlu0 %v1324, 125
    %v1390 = vpop.permute.xlu0 %1389
    %1391 = vrot.lane.b32.xlu0 %v1327, 125
    %v1392 = vpop.permute.xlu0 %1391
    %1393 = vrot.lane.b32.xlu0 %v1329, 125
    %v1394 = vpop.permute.xlu0 %1393
    %v1411 = vadd.f32 %v498, %v1364
    %v1412 = vadd.f32 %v499, %v1366
    %v1413 = vadd.f32 %v500, %v1368
    %v1414 = vadd.f32 %v501, %v1370
    %v1415 = vadd.f32 %v502, %v1372
    %v1416 = vadd.f32 %v503, %v1374
    %v1417 = vadd.f32 %v504, %v1376
    %v1418 = vadd.f32 %v505, %v1378
    %v1419 = vadd.f32 %v506, %v1380
    %v1420 = vadd.f32 %v507, %v1382
    %v1421 = vadd.f32 %v508, %v1384
    %v1422 = vadd.f32 %v509, %v1386
    %v1423 = vadd.f32 %v510, %v1388
    %v1424 = vadd.f32 %v511, %v1390
    %v1425 = vadd.f32 %v512, %v1392
    %v1426 = vadd.f32 %v513, %v1394
    %v1427 = vpack.c.bf16 %v1332, %v1331
    %v1428 = vpack.c.bf16 %v1334, %v1333
    %v1429 = vpack.c.bf16 %v1336, %v1335
    %v1430 = vpack.c.bf16 %v1338, %v1337
    %v1431 = vpack.c.bf16 %v1340, %v1339
    %v1432 = vpack.c.bf16 %v1342, %v1341
    %v1433 = vpack.c.bf16 %v1344, %v1343
    %v1434 = vpack.c.bf16 %v1346, %v1345
    %v1435 = vld [vmem:[%s7] sm:$0x7]
    %v1436 = vpack.c.bf16 %v1435, %v1435
    %v1437 = vpack.c.bf16 %v1412, %v1411
    %v1438 = vpack.c.bf16 %v1414, %v1413
    %v1439 = vpack.c.bf16 %v1416, %v1415
    %v1440 = vpack.c.bf16 %v1418, %v1417
    %v1441 = vpack.c.bf16 %v1420, %v1419
    %v1442 = vpack.c.bf16 %v1422, %v1421
    %v1443 = vpack.c.bf16 %v1424, %v1423
    %v1444 = vpack.c.bf16 %v1426, %v1425
    %v1445 = vld [vmem:[%s9] sm:$0x7]
    %v1446 = vpack.c.bf16 %v1445, %v1445
    %v1448 = vsel %vm885, %v1437, 0
    %v1451 = vsel %vm885, %v1438, 0
    %v1454 = vsel %vm885, %v1439, 0
    %v1457 = vsel %vm885, %v1440, 0
    %v1460 = vsel %vm885, %v1441, 0
    %v1463 = vsel %vm885, %v1442, 0
    %v1466 = vsel %vm885, %v1443, 0
    %v1469 = vsel %vm885, %v1444, 0
    %v1472 = vand.u32 %v1446, %v913
    %1474 = vmatpush.bf16.msra.mxu0 0
    %1475 = vmatpush.bf16.msra.mxu0 0
    %1476 = vmatpush.bf16.msra.mxu0 0
    %1477 = vmatpush.bf16.msra.mxu0 0
    %1478 = vmatpush.bf16.msra.mxu0 0
    %1479 = vmatpush.bf16.msra.mxu0 0
    %1480 = vmatpush.bf16.msra.mxu0 0
    %1481 = vmatpush.bf16.msra.mxu0 %v1472
    %1482 = vmatmul.bf16.gmra.mxu0 %v1448
    %v1483 = vpop.f32.mrf.mxu0
    %v1484 = vadd.f32 0.0, %v1483
    %v1485 = vpop.f32.mrf.mxu0
    %v1486 = vadd.f32 0.0, %v1485
    %1487 = vmatmul.bf16.gmra.mxu0 %v1451
    %v1488 = vpop.f32.mrf.mxu0
    %v1489 = vadd.f32 0.0, %v1488
    %v1490 = vpop.f32.mrf.mxu0
    %v1491 = vadd.f32 0.0, %v1490
    %1492 = vmatmul.bf16.gmra.mxu0 %v1454
    %v1493 = vpop.f32.mrf.mxu0
    %v1494 = vadd.f32 0.0, %v1493
    %v1495 = vpop.f32.mrf.mxu0
    %v1496 = vadd.f32 0.0, %v1495
    %1497 = vmatmul.bf16.gmra.mxu0 %v1457
    %v1498 = vpop.f32.mrf.mxu0
    %v1499 = vadd.f32 0.0, %v1498
    %v1500 = vpop.f32.mrf.mxu0
    %v1501 = vadd.f32 0.0, %v1500
    %1502 = vmatmul.bf16.gmra.mxu0 %v1460
    %v1503 = vpop.f32.mrf.mxu0
    %v1504 = vadd.f32 0.0, %v1503
    %v1505 = vpop.f32.mrf.mxu0
    %v1506 = vadd.f32 0.0, %v1505
    %1507 = vmatmul.bf16.gmra.mxu0 %v1463
    %v1508 = vpop.f32.mrf.mxu0
    %v1509 = vadd.f32 0.0, %v1508
    %v1510 = vpop.f32.mrf.mxu0
    %v1511 = vadd.f32 0.0, %v1510
    %1512 = vmatmul.bf16.gmra.mxu0 %v1466
    %v1513 = vpop.f32.mrf.mxu0
    %v1514 = vadd.f32 0.0, %v1513
    %v1515 = vpop.f32.mrf.mxu0
    %v1516 = vadd.f32 0.0, %v1515
    %1517 = vmatmul.bf16.gmra.mxu0 %v1469
    %v1518 = vpop.f32.mrf.mxu0
    %v1519 = vadd.f32 0.0, %v1518
    %v1520 = vpop.f32.mrf.mxu0
    %v1521 = vadd.f32 0.0, %v1520
    %1522 = vdwg.mxu0
    %v1524 = vsel %vm885, %v1427, 0
    %v1527 = vsel %vm885, %v1428, 0
    %v1530 = vsel %vm885, %v1429, 0
    %v1533 = vsel %vm885, %v1430, 0
    %v1536 = vsel %vm885, %v1431, 0
    %v1539 = vsel %vm885, %v1432, 0
    %v1542 = vsel %vm885, %v1433, 0
    %v1545 = vsel %vm885, %v1434, 0
    %v1548 = vand.u32 %v1436, %v913
    %1550 = vmatpush.bf16.msra.mxu0 0
    %1551 = vmatpush.bf16.msra.mxu0 0
    %1552 = vmatpush.bf16.msra.mxu0 0
    %1553 = vmatpush.bf16.msra.mxu0 0
    %1554 = vmatpush.bf16.msra.mxu0 0
    %1555 = vmatpush.bf16.msra.mxu0 0
    %1556 = vmatpush.bf16.msra.mxu0 0
    %1557 = vmatpush.bf16.msra.mxu0 %v1548
    %1558 = vmatmul.bf16.gmra.mxu0 %v1524
    %v1559 = vpop.f32.mrf.mxu0
    %v1560 = vadd.f32 %v1484, %v1559
    %v1561 = vpop.f32.mrf.mxu0
    %v1562 = vadd.f32 %v1486, %v1561
    %1563 = vmatmul.bf16.gmra.mxu0 %v1527
    %v1564 = vpop.f32.mrf.mxu0
    %v1565 = vadd.f32 %v1489, %v1564
    %v1566 = vpop.f32.mrf.mxu0
    %v1567 = vadd.f32 %v1491, %v1566
    %1568 = vmatmul.bf16.gmra.mxu0 %v1530
    %v1569 = vpop.f32.mrf.mxu0
    %v1570 = vadd.f32 %v1494, %v1569
    %v1571 = vpop.f32.mrf.mxu0
    %v1572 = vadd.f32 %v1496, %v1571
    %1573 = vmatmul.bf16.gmra.mxu0 %v1533
    %v1574 = vpop.f32.mrf.mxu0
    %v1575 = vadd.f32 %v1499, %v1574
    %v1576 = vpop.f32.mrf.mxu0
    %v1577 = vadd.f32 %v1501, %v1576
    %1578 = vmatmul.bf16.gmra.mxu0 %v1536
    %v1579 = vpop.f32.mrf.mxu0
    %v1580 = vadd.f32 %v1504, %v1579
    %v1581 = vpop.f32.mrf.mxu0
    %v1582 = vadd.f32 %v1506, %v1581
    %1583 = vmatmul.bf16.gmra.mxu0 %v1539
    %v1584 = vpop.f32.mrf.mxu0
    %v1585 = vadd.f32 %v1509, %v1584
    %v1586 = vpop.f32.mrf.mxu0
    %v1587 = vadd.f32 %v1511, %v1586
    %1588 = vmatmul.bf16.gmra.mxu0 %v1542
    %v1589 = vpop.f32.mrf.mxu0
    %v1590 = vadd.f32 %v1514, %v1589
    %v1591 = vpop.f32.mrf.mxu0
    %v1592 = vadd.f32 %v1516, %v1591
    %1593 = vmatmul.bf16.gmra.mxu0 %v1545
    %v1594 = vpop.f32.mrf.mxu0
    %v1595 = vadd.f32 %v1519, %v1594
    %v1596 = vpop.f32.mrf.mxu0
    %v1597 = vadd.f32 %v1521, %v1596
    %1598 = vdwg.mxu0
    %v1599 = vadd.f32 %v1560, %v751
    %v1600 = vadd.f32 %v1562, %v752
    %v1601 = vadd.f32 %v1565, %v753
    %v1602 = vadd.f32 %v1567, %v754
    %v1603 = vadd.f32 %v1570, %v755
    %v1604 = vadd.f32 %v1572, %v756
    %v1605 = vadd.f32 %v1575, %v757
    %v1606 = vadd.f32 %v1577, %v758
    %v1607 = vadd.f32 %v1580, %v759
    %v1608 = vadd.f32 %v1582, %v760
    %v1609 = vadd.f32 %v1585, %v761
    %v1610 = vadd.f32 %v1587, %v762
    %v1611 = vadd.f32 %v1590, %v763
    %v1612 = vadd.f32 %v1592, %v764
    %v1613 = vadd.f32 %v1595, %v765
    %v1614 = vadd.f32 %v1597, %v766
    %v1615 = vmax.f32 %v1599, 0.0
    %v1616 = vmax.f32 %v1600, 0.0
    %v1617 = vmax.f32 %v1601, 0.0
    %v1618 = vmax.f32 %v1602, 0.0
    %v1619 = vmax.f32 %v1603, 0.0
    %v1620 = vmax.f32 %v1604, 0.0
    %v1621 = vmax.f32 %v1605, 0.0
    %v1622 = vmax.f32 %v1606, 0.0
    %v1623 = vmax.f32 %v1607, 0.0
    %v1624 = vmax.f32 %v1608, 0.0
    %v1625 = vmax.f32 %v1609, 0.0
    %v1626 = vmax.f32 %v1610, 0.0
    %v1627 = vmax.f32 %v1611, 0.0
    %v1628 = vmax.f32 %v1612, 0.0
    %v1629 = vmax.f32 %v1613, 0.0
    %v1630 = vmax.f32 %v1614, 0.0
    %v1631 = vld [vmem:[#allocation2] sm:$0x7]
    %v1632 = vpack.c.bf16 %v1631, %v1631
    %v1633 = vld [vmem:[#allocation4] sm:$0x7]
    %v1634 = vpack.c.bf16 %v1633, %v1633
    %v1636 = vand.u32 %v1634, %v913
    %1638 = vmatpush.bf16.msra.mxu0 0
    %1639 = vmatpush.bf16.msra.mxu0 0
    %1640 = vmatpush.bf16.msra.mxu0 0
    %1641 = vmatpush.bf16.msra.mxu0 0
    %1642 = vmatpush.bf16.msra.mxu0 0
    %1643 = vmatpush.bf16.msra.mxu0 0
    %1644 = vmatpush.bf16.msra.mxu0 0
    %1645 = vmatpush.bf16.msra.mxu0 %v1636
    %1646 = vmatmul.bf16.gmra.mxu0 %v1448
    %v1647 = vpop.f32.mrf.mxu0
    %v1648 = vadd.f32 0.0, %v1647
    %v1649 = vpop.f32.mrf.mxu0
    %v1650 = vadd.f32 0.0, %v1649
    %1651 = vmatmul.bf16.gmra.mxu0 %v1451
    %v1652 = vpop.f32.mrf.mxu0
    %v1653 = vadd.f32 0.0, %v1652
    %v1654 = vpop.f32.mrf.mxu0
    %v1655 = vadd.f32 0.0, %v1654
    %1656 = vmatmul.bf16.gmra.mxu0 %v1454
    %v1657 = vpop.f32.mrf.mxu0
    %v1658 = vadd.f32 0.0, %v1657
    %v1659 = vpop.f32.mrf.mxu0
    %v1660 = vadd.f32 0.0, %v1659
    %1661 = vmatmul.bf16.gmra.mxu0 %v1457
    %v1662 = vpop.f32.mrf.mxu0
    %v1663 = vadd.f32 0.0, %v1662
    %v1664 = vpop.f32.mrf.mxu0
    %v1665 = vadd.f32 0.0, %v1664
    %1666 = vmatmul.bf16.gmra.mxu0 %v1460
    %v1667 = vpop.f32.mrf.mxu0
    %v1668 = vadd.f32 0.0, %v1667
    %v1669 = vpop.f32.mrf.mxu0
    %v1670 = vadd.f32 0.0, %v1669
    %1671 = vmatmul.bf16.gmra.mxu0 %v1463
    %v1672 = vpop.f32.mrf.mxu0
    %v1673 = vadd.f32 0.0, %v1672
    %v1674 = vpop.f32.mrf.mxu0
    %v1675 = vadd.f32 0.0, %v1674
    %1676 = vmatmul.bf16.gmra.mxu0 %v1466
    %v1677 = vpop.f32.mrf.mxu0
    %v1678 = vadd.f32 0.0, %v1677
    %v1679 = vpop.f32.mrf.mxu0
    %v1680 = vadd.f32 0.0, %v1679
    %1681 = vmatmul.bf16.gmra.mxu0 %v1469
    %v1682 = vpop.f32.mrf.mxu0
    %v1683 = vadd.f32 0.0, %v1682
    %v1684 = vpop.f32.mrf.mxu0
    %v1685 = vadd.f32 0.0, %v1684
    %1686 = vdwg.mxu0
    %v1688 = vand.u32 %v1632, %v913
    %1690 = vmatpush.bf16.msra.mxu0 0
    %1691 = vmatpush.bf16.msra.mxu0 0
    %1692 = vmatpush.bf16.msra.mxu0 0
    %1693 = vmatpush.bf16.msra.mxu0 0
    %1694 = vmatpush.bf16.msra.mxu0 0
    %1695 = vmatpush.bf16.msra.mxu0 0
    %1696 = vmatpush.bf16.msra.mxu0 0
    %1697 = vmatpush.bf16.msra.mxu0 %v1688
    %1698 = vmatmul.bf16.gmra.mxu0 %v1524
    %v1699 = vpop.f32.mrf.mxu0
    %v1700 = vadd.f32 %v1648, %v1699
    %v1701 = vpop.f32.mrf.mxu0
    %v1702 = vadd.f32 %v1650, %v1701
    %1703 = vmatmul.bf16.gmra.mxu0 %v1527
    %v1704 = vpop.f32.mrf.mxu0
    %v1705 = vadd.f32 %v1653, %v1704
    %v1706 = vpop.f32.mrf.mxu0
    %v1707 = vadd.f32 %v1655, %v1706
    %1708 = vmatmul.bf16.gmra.mxu0 %v1530
    %v1709 = vpop.f32.mrf.mxu0
    %v1710 = vadd.f32 %v1658, %v1709
    %v1711 = vpop.f32.mrf.mxu0
    %v1712 = vadd.f32 %v1660, %v1711
    %1713 = vmatmul.bf16.gmra.mxu0 %v1533
    %v1714 = vpop.f32.mrf.mxu0
    %v1715 = vadd.f32 %v1663, %v1714
    %v1716 = vpop.f32.mrf.mxu0
    %v1717 = vadd.f32 %v1665, %v1716
    %1718 = vmatmul.bf16.gmra.mxu0 %v1536
    %v1719 = vpop.f32.mrf.mxu0
    %v1720 = vadd.f32 %v1668, %v1719
    %v1721 = vpop.f32.mrf.mxu0
    %v1722 = vadd.f32 %v1670, %v1721
    %1723 = vmatmul.bf16.gmra.mxu0 %v1539
    %v1724 = vpop.f32.mrf.mxu0
    %v1725 = vadd.f32 %v1673, %v1724
    %v1726 = vpop.f32.mrf.mxu0
    %v1727 = vadd.f32 %v1675, %v1726
    %1728 = vmatmul.bf16.gmra.mxu0 %v1542
    %v1729 = vpop.f32.mrf.mxu0
    %v1730 = vadd.f32 %v1678, %v1729
    %v1731 = vpop.f32.mrf.mxu0
    %v1732 = vadd.f32 %v1680, %v1731
    %1733 = vmatmul.bf16.gmra.mxu0 %v1545
    %v1734 = vpop.f32.mrf.mxu0
    %v1735 = vadd.f32 %v1683, %v1734
    %v1736 = vpop.f32.mrf.mxu0
    %v1737 = vadd.f32 %v1685, %v1736
    %1738 = vdwg.mxu0
    %v1739 = vpack.c.bf16 %v1616, %v1615
    %v1740 = vpack.c.bf16 %v1618, %v1617
    %v1741 = vpack.c.bf16 %v1620, %v1619
    %v1742 = vpack.c.bf16 %v1622, %v1621
    %v1743 = vpack.c.bf16 %v1624, %v1623
    %v1744 = vpack.c.bf16 %v1626, %v1625
    %v1745 = vpack.c.bf16 %v1628, %v1627
    %v1746 = vpack.c.bf16 %v1630, %v1629
    %1747 = vmatpush.bf16.msra.mxu0 %v1067
    %1748 = vmatpush.bf16.msra.mxu0 %v1066
    %1749 = vmatpush.bf16.msra.mxu0 %v1065
    %1750 = vmatpush.bf16.msra.mxu0 %v1064
    %1751 = vmatpush.bf16.msra.mxu0 %v1063
    %1752 = vmatpush.bf16.msra.mxu0 %v1062
    %1753 = vmatpush.bf16.msra.mxu0 %v1061
    %1754 = vmatpush.bf16.msra.mxu0 %v1060
    %1755 = vmatmul.bf16.gmra.mxu0 %v1739
    %v1756 = vpop.f32.mrf.mxu0
    %v1757 = vadd.f32 %v1700, %v1756
    %v1758 = vpop.f32.mrf.mxu0
    %v1759 = vadd.f32 %v1702, %v1758
    %1760 = vmatmul.bf16.gmra.mxu0 %v1740
    %v1761 = vpop.f32.mrf.mxu0
    %v1762 = vadd.f32 %v1705, %v1761
    %v1763 = vpop.f32.mrf.mxu0
    %v1764 = vadd.f32 %v1707, %v1763
    %1765 = vmatmul.bf16.gmra.mxu0 %v1741
    %v1766 = vpop.f32.mrf.mxu0
    %v1767 = vadd.f32 %v1710, %v1766
    %v1768 = vpop.f32.mrf.mxu0
    %v1769 = vadd.f32 %v1712, %v1768
    %1770 = vmatmul.bf16.gmra.mxu0 %v1742
    %v1771 = vpop.f32.mrf.mxu0
    %v1772 = vadd.f32 %v1715, %v1771
    %v1773 = vpop.f32.mrf.mxu0
    %v1774 = vadd.f32 %v1717, %v1773
    %1775 = vmatmul.bf16.gmra.mxu0 %v1743
    %v1776 = vpop.f32.mrf.mxu0
    %v1777 = vadd.f32 %v1720, %v1776
    %v1778 = vpop.f32.mrf.mxu0
    %v1779 = vadd.f32 %v1722, %v1778
    %1780 = vmatmul.bf16.gmra.mxu0 %v1744
    %v1781 = vpop.f32.mrf.mxu0
    %v1782 = vadd.f32 %v1725, %v1781
    %v1783 = vpop.f32.mrf.mxu0
    %v1784 = vadd.f32 %v1727, %v1783
    %1785 = vmatmul.bf16.gmra.mxu0 %v1745
    %v1786 = vpop.f32.mrf.mxu0
    %v1787 = vadd.f32 %v1730, %v1786
    %v1788 = vpop.f32.mrf.mxu0
    %v1789 = vadd.f32 %v1732, %v1788
    %1790 = vmatmul.bf16.gmra.mxu0 %v1746
    %v1791 = vpop.f32.mrf.mxu0
    %v1792 = vadd.f32 %v1735, %v1791
    %v1793 = vpop.f32.mrf.mxu0
    %v1794 = vadd.f32 %v1737, %v1793
    %1795 = vdwg.mxu0
    %v1796 = vadd.f32 %v1757, %v859
    %v1797 = vadd.f32 %v1759, %v860
    %v1798 = vadd.f32 %v1762, %v861
    %v1799 = vadd.f32 %v1764, %v862
    %v1800 = vadd.f32 %v1767, %v863
    %v1801 = vadd.f32 %v1769, %v864
    %v1802 = vadd.f32 %v1772, %v865
    %v1803 = vadd.f32 %v1774, %v866
    %v1804 = vadd.f32 %v1777, %v867
    %v1805 = vadd.f32 %v1779, %v868
    %v1806 = vadd.f32 %v1782, %v869
    %v1807 = vadd.f32 %v1784, %v870
    %v1808 = vadd.f32 %v1787, %v871
    %v1809 = vadd.f32 %v1789, %v872
    %v1810 = vadd.f32 %v1792, %v873
    %v1811 = vadd.f32 %v1794, %v874
    %v1812 = vmax.f32 %v1796, 0.0
    %v1813 = vmax.f32 %v1797, 0.0
    %v1814 = vmax.f32 %v1798, 0.0
    %v1815 = vmax.f32 %v1799, 0.0
    %v1816 = vmax.f32 %v1800, 0.0
    %v1817 = vmax.f32 %v1801, 0.0
    %v1818 = vmax.f32 %v1802, 0.0
    %v1819 = vmax.f32 %v1803, 0.0
    %v1820 = vmax.f32 %v1804, 0.0
    %v1821 = vmax.f32 %v1805, 0.0
    %v1822 = vmax.f32 %v1806, 0.0
    %v1823 = vmax.f32 %v1807, 0.0
    %v1824 = vmax.f32 %v1808, 0.0
    %v1825 = vmax.f32 %v1809, 0.0
    %v1826 = vmax.f32 %v1810, 0.0
    %v1827 = vmax.f32 %v1811, 0.0
    %v1828 = vpack.c.bf16 %v1813, %v1812
    %v1829 = vpack.c.bf16 %v1815, %v1814
    %v1830 = vpack.c.bf16 %v1817, %v1816
    %v1831 = vpack.c.bf16 %v1819, %v1818
    %v1832 = vpack.c.bf16 %v1821, %v1820
    %v1833 = vpack.c.bf16 %v1823, %v1822
    %v1834 = vpack.c.bf16 %v1825, %v1824
    %v1835 = vpack.c.bf16 %v1827, %v1826
    %1836 = vmatpush.bf16.msra.mxu0 %v1180
    %1837 = vmatpush.bf16.msra.mxu0 %v1179
    %1838 = vmatpush.bf16.msra.mxu0 %v1178
    %1839 = vmatpush.bf16.msra.mxu0 %v1177
    %1840 = vmatpush.bf16.msra.mxu0 %v1176
    %1841 = vmatpush.bf16.msra.mxu0 %v1175
    %1842 = vmatpush.bf16.msra.mxu0 %v1174
    %1843 = vmatpush.bf16.msra.mxu0 %v1173
    %1844 = vmatmul.bf16.gmra.mxu0 %v1828
    %v1845 = vpop.f32.mrf.mxu0
    %v1846 = vadd.f32 %v1183, %v1845
    %v1847 = vpop.f32.mrf.mxu0
    %v1848 = vadd.f32 %v1183, %v1847
    %1849 = vmatmul.bf16.gmra.mxu0 %v1829
    %v1850 = vpop.f32.mrf.mxu0
    %v1851 = vadd.f32 %v1183, %v1850
    %v1852 = vpop.f32.mrf.mxu0
    %v1853 = vadd.f32 %v1183, %v1852
    %1854 = vmatmul.bf16.gmra.mxu0 %v1830
    %v1855 = vpop.f32.mrf.mxu0
    %v1856 = vadd.f32 %v1183, %v1855
    %v1857 = vpop.f32.mrf.mxu0
    %v1858 = vadd.f32 %v1183, %v1857
    %1859 = vmatmul.bf16.gmra.mxu0 %v1831
    %v1860 = vpop.f32.mrf.mxu0
    %v1861 = vadd.f32 %v1183, %v1860
    %v1862 = vpop.f32.mrf.mxu0
    %v1863 = vadd.f32 %v1183, %v1862
    %1864 = vmatmul.bf16.gmra.mxu0 %v1832
    %v1865 = vpop.f32.mrf.mxu0
    %v1866 = vadd.f32 %v1183, %v1865
    %v1867 = vpop.f32.mrf.mxu0
    %v1868 = vadd.f32 %v1183, %v1867
    %1869 = vmatmul.bf16.gmra.mxu0 %v1833
    %v1870 = vpop.f32.mrf.mxu0
    %v1871 = vadd.f32 %v1183, %v1870
    %v1872 = vpop.f32.mrf.mxu0
    %v1873 = vadd.f32 %v1183, %v1872
    %1874 = vmatmul.bf16.gmra.mxu0 %v1834
    %v1875 = vpop.f32.mrf.mxu0
    %v1876 = vadd.f32 %v1183, %v1875
    %v1877 = vpop.f32.mrf.mxu0
    %v1878 = vadd.f32 %v1183, %v1877
    %1879 = vmatmul.bf16.gmra.mxu0 %v1835
    %v1880 = vpop.f32.mrf.mxu0
    %v1881 = vadd.f32 %v1183, %v1880
    %v1882 = vpop.f32.mrf.mxu0
    %v1883 = vadd.f32 %v1183, %v1882
    %1884 = vdwg.mxu0
    %v1885 = vmax.f32 %v1846, 0.0
    %v1886 = vmax.f32 %v1848, 0.0
    %v1887 = vmax.f32 %v1851, 0.0
    %v1888 = vmax.f32 %v1853, 0.0
    %v1889 = vmax.f32 %v1856, 0.0
    %v1890 = vmax.f32 %v1858, 0.0
    %v1891 = vmax.f32 %v1861, 0.0
    %v1892 = vmax.f32 %v1863, 0.0
    %v1893 = vmax.f32 %v1866, 0.0
    %v1894 = vmax.f32 %v1868, 0.0
    %v1895 = vmax.f32 %v1871, 0.0
    %v1896 = vmax.f32 %v1873, 0.0
    %v1897 = vmax.f32 %v1876, 0.0
    %v1898 = vmax.f32 %v1878, 0.0
    %v1899 = vmax.f32 %v1881, 0.0
    %v1900 = vmax.f32 %v1883, 0.0
    %v1901 = vpack.c.bf16 %v1886, %v1885
    %v1902 = vpack.c.bf16 %v1888, %v1887
    %v1903 = vpack.c.bf16 %v1890, %v1889
    %v1904 = vpack.c.bf16 %v1892, %v1891
    %v1905 = vpack.c.bf16 %v1894, %v1893
    %v1906 = vpack.c.bf16 %v1896, %v1895
    %v1907 = vpack.c.bf16 %v1898, %v1897
    %v1908 = vpack.c.bf16 %v1900, %v1899
    %1909 = vmatpush.bf16.msra.mxu0 %v1281
    %1910 = vmatpush.bf16.msra.mxu0 %v1280
    %1911 = vmatpush.bf16.msra.mxu0 %v1279
    %1912 = vmatpush.bf16.msra.mxu0 %v1278
    %1913 = vmatpush.bf16.msra.mxu0 %v1277
    %1914 = vmatpush.bf16.msra.mxu0 %v1276
    %1915 = vmatpush.bf16.msra.mxu0 %v1275
    %1916 = vmatpush.bf16.msra.mxu0 %v1274
    %1917 = vmatmul.bf16.gmra.mxu0 %v1901
    %v1918 = vpop.f32.mrf.mxu0
    %v1919 = vadd.f32 0.0, %v1918
    %v1920 = vpop.f32.mrf.mxu0
    %v1921 = vadd.f32 0.0, %v1920
    %1922 = vmatmul.bf16.gmra.mxu0 %v1902
    %v1923 = vpop.f32.mrf.mxu0
    %v1924 = vadd.f32 0.0, %v1923
    %v1925 = vpop.f32.mrf.mxu0
    %v1926 = vadd.f32 0.0, %v1925
    %1927 = vmatmul.bf16.gmra.mxu0 %v1903
    %v1928 = vpop.f32.mrf.mxu0
    %v1929 = vadd.f32 0.0, %v1928
    %v1930 = vpop.f32.mrf.mxu0
    %v1931 = vadd.f32 0.0, %v1930
    %1932 = vmatmul.bf16.gmra.mxu0 %v1904
    %v1933 = vpop.f32.mrf.mxu0
    %v1934 = vadd.f32 0.0, %v1933
    %v1935 = vpop.f32.mrf.mxu0
    %v1936 = vadd.f32 0.0, %v1935
    %1937 = vmatmul.bf16.gmra.mxu0 %v1905
    %v1938 = vpop.f32.mrf.mxu0
    %v1939 = vadd.f32 0.0, %v1938
    %v1940 = vpop.f32.mrf.mxu0
    %v1941 = vadd.f32 0.0, %v1940
    %1942 = vmatmul.bf16.gmra.mxu0 %v1906
    %v1943 = vpop.f32.mrf.mxu0
    %v1944 = vadd.f32 0.0, %v1943
    %v1945 = vpop.f32.mrf.mxu0
    %v1946 = vadd.f32 0.0, %v1945
    %1947 = vmatmul.bf16.gmra.mxu0 %v1907
    %v1948 = vpop.f32.mrf.mxu0
    %v1949 = vadd.f32 0.0, %v1948
    %v1950 = vpop.f32.mrf.mxu0
    %v1951 = vadd.f32 0.0, %v1950
    %1952 = vmatmul.bf16.gmra.mxu0 %v1908
    %v1953 = vpop.f32.mrf.mxu0
    %v1954 = vadd.f32 0.0, %v1953
    %v1955 = vpop.f32.mrf.mxu0
    %v1956 = vadd.f32 0.0, %v1955
    %1957 = vdwg.mxu0
    %v1958 = vsub.f32 0.0, %v1919
    %v1959 = vsub.f32 0.0, %v1921
    %v1960 = vsub.f32 0.0, %v1924
    %v1961 = vsub.f32 0.0, %v1926
    %v1962 = vsub.f32 0.0, %v1929
    %v1963 = vsub.f32 0.0, %v1931
    %v1964 = vsub.f32 0.0, %v1934
    %v1965 = vsub.f32 0.0, %v1936
    %v1966 = vsub.f32 0.0, %v1939
    %v1967 = vsub.f32 0.0, %v1941
    %v1968 = vsub.f32 0.0, %v1944
    %v1969 = vsub.f32 0.0, %v1946
    %v1970 = vsub.f32 0.0, %v1949
    %v1971 = vsub.f32 0.0, %v1951
    %v1972 = vsub.f32 0.0, %v1954
    %v1973 = vsub.f32 0.0, %v1956
    %1974 = vst.msk [vmem:[%s91] sm:$0xff] %vm885, %v1292
    %1975 = vst.msk [vmem:[%s91 + $0x8] sm:$0xff] %vm885, %v1294
    %1976 = vst.msk [vmem:[%s91 + $0x10] sm:$0xff] %vm885, %v1297
    %1977 = vst.msk [vmem:[%s91 + $0x18] sm:$0xff] %vm885, %v1299
    %1978 = vst.msk [vmem:[%s91 + $0x20] sm:$0xff] %vm885, %v1302
    %1979 = vst.msk [vmem:[%s91 + $0x28] sm:$0xff] %vm885, %v1304
    %1980 = vst.msk [vmem:[%s91 + $0x30] sm:$0xff] %vm885, %v1307
    %1981 = vst.msk [vmem:[%s91 + $0x38] sm:$0xff] %vm885, %v1309
    %1982 = vst.msk [vmem:[%s91 + $0x40] sm:$0xff] %vm885, %v1312
    %1983 = vst.msk [vmem:[%s91 + $0x48] sm:$0xff] %vm885, %v1314
    %1984 = vst.msk [vmem:[%s91 + $0x50] sm:$0xff] %vm885, %v1317
    %1985 = vst.msk [vmem:[%s91 + $0x58] sm:$0xff] %vm885, %v1319
    %1986 = vst.msk [vmem:[%s91 + $0x60] sm:$0xff] %vm885, %v1322
    %1987 = vst.msk [vmem:[%s91 + $0x68] sm:$0xff] %vm885, %v1324
    %1988 = vst.msk [vmem:[%s91 + $0x70] sm:$0xff] %vm885, %v1327
    %1989 = vst.msk [vmem:[%s91 + $0x78] sm:$0xff] %vm885, %v1329
    %2006 = vrot.lane.b32.xlu0 %v1958, 3
    %v2007 = vpop.permute.xlu0 %2006
    %2008 = vrot.lane.b32.xlu0 %v1959, 3
    %v2009 = vpop.permute.xlu0 %2008
    %2010 = vrot.lane.b32.xlu0 %v1960, 3
    %v2011 = vpop.permute.xlu0 %2010
    %2012 = vrot.lane.b32.xlu0 %v1961, 3
    %v2013 = vpop.permute.xlu0 %2012
    %2014 = vrot.lane.b32.xlu0 %v1962, 3
    %v2015 = vpop.permute.xlu0 %2014
    %2016 = vrot.lane.b32.xlu0 %v1963, 3
    %v2017 = vpop.permute.xlu0 %2016
    %2018 = vrot.lane.b32.xlu0 %v1964, 3
    %v2019 = vpop.permute.xlu0 %2018
    %2020 = vrot.lane.b32.xlu0 %v1965, 3
    %v2021 = vpop.permute.xlu0 %2020
    %2022 = vrot.lane.b32.xlu0 %v1966, 3
    %v2023 = vpop.permute.xlu0 %2022
    %2024 = vrot.lane.b32.xlu0 %v1967, 3
    %v2025 = vpop.permute.xlu0 %2024
    %2026 = vrot.lane.b32.xlu0 %v1968, 3
    %v2027 = vpop.permute.xlu0 %2026
    %2028 = vrot.lane.b32.xlu0 %v1969, 3
    %v2029 = vpop.permute.xlu0 %2028
    %2030 = vrot.lane.b32.xlu0 %v1970, 3
    %v2031 = vpop.permute.xlu0 %2030
    %2032 = vrot.lane.b32.xlu0 %v1971, 3
    %v2033 = vpop.permute.xlu0 %2032
    %2034 = vrot.lane.b32.xlu0 %v1972, 3
    %v2035 = vpop.permute.xlu0 %2034
    %2036 = vrot.lane.b32.xlu0 %v1973, 3
    %v2037 = vpop.permute.xlu0 %2036
    %vm2054 = vcmask 48152
    %2055 = vst.msk [vmem:[%s91] sm:$0xff] %vm2054, %v2007
    %2056 = vst.msk [vmem:[%s91 + $0x8] sm:$0xff] %vm2054, %v2009
    %2057 = vst.msk [vmem:[%s91 + $0x10] sm:$0xff] %vm2054, %v2011
    %2058 = vst.msk [vmem:[%s91 + $0x18] sm:$0xff] %vm2054, %v2013
    %2059 = vst.msk [vmem:[%s91 + $0x20] sm:$0xff] %vm2054, %v2015
    %2060 = vst.msk [vmem:[%s91 + $0x28] sm:$0xff] %vm2054, %v2017
    %2061 = vst.msk [vmem:[%s91 + $0x30] sm:$0xff] %vm2054, %v2019
    %2062 = vst.msk [vmem:[%s91 + $0x38] sm:$0xff] %vm2054, %v2021
    %2063 = vst.msk [vmem:[%s91 + $0x40] sm:$0xff] %vm2054, %v2023
    %2064 = vst.msk [vmem:[%s91 + $0x48] sm:$0xff] %vm2054, %v2025
    %2065 = vst.msk [vmem:[%s91 + $0x50] sm:$0xff] %vm2054, %v2027
    %2066 = vst.msk [vmem:[%s91 + $0x58] sm:$0xff] %vm2054, %v2029
    %2067 = vst.msk [vmem:[%s91 + $0x60] sm:$0xff] %vm2054, %v2031
    %2068 = vst.msk [vmem:[%s91 + $0x68] sm:$0xff] %vm2054, %v2033
    %2069 = vst.msk [vmem:[%s91 + $0x70] sm:$0xff] %vm2054, %v2035
    %2070 = vst.msk [vmem:[%s91 + $0x78] sm:$0xff] %vm2054, %v2037
    %2071 = vrot.lane.b32.xlu0 %v1292, 3
    %v2072 = vpop.permute.xlu0 %2071
    %2073 = vrot.lane.b32.xlu0 %v1294, 3
    %v2074 = vpop.permute.xlu0 %2073
    %2075 = vrot.lane.b32.xlu0 %v1297, 3
    %v2076 = vpop.permute.xlu0 %2075
    %2077 = vrot.lane.b32.xlu0 %v1299, 3
    %v2078 = vpop.permute.xlu0 %2077
    %2079 = vrot.lane.b32.xlu0 %v1302, 3
    %v2080 = vpop.permute.xlu0 %2079
    %2081 = vrot.lane.b32.xlu0 %v1304, 3
    %v2082 = vpop.permute.xlu0 %2081
    %2083 = vrot.lane.b32.xlu0 %v1307, 3
    %v2084 = vpop.permute.xlu0 %2083
    %2085 = vrot.lane.b32.xlu0 %v1309, 3
    %v2086 = vpop.permute.xlu0 %2085
    %2087 = vrot.lane.b32.xlu0 %v1312, 3
    %v2088 = vpop.permute.xlu0 %2087
    %2089 = vrot.lane.b32.xlu0 %v1314, 3
    %v2090 = vpop.permute.xlu0 %2089
    %2091 = vrot.lane.b32.xlu0 %v1317, 3
    %v2092 = vpop.permute.xlu0 %2091
    %2093 = vrot.lane.b32.xlu0 %v1319, 3
    %v2094 = vpop.permute.xlu0 %2093
    %2095 = vrot.lane.b32.xlu0 %v1322, 3
    %v2096 = vpop.permute.xlu0 %2095
    %2097 = vrot.lane.b32.xlu0 %v1324, 3
    %v2098 = vpop.permute.xlu0 %2097
    %2099 = vrot.lane.b32.xlu0 %v1327, 3
    %v2100 = vpop.permute.xlu0 %2099
    %2101 = vrot.lane.b32.xlu0 %v1329, 3
    %v2102 = vpop.permute.xlu0 %2101
    %vm2119 = vcmask 72752
    %2120 = vst.msk [vmem:[%s91] sm:$0xff] %vm2119, %v2072
    %2121 = vst.msk [vmem:[%s91 + $0x8] sm:$0xff] %vm2119, %v2074
    %2122 = vst.msk [vmem:[%s91 + $0x10] sm:$0xff] %vm2119, %v2076
    %2123 = vst.msk [vmem:[%s91 + $0x18] sm:$0xff] %vm2119, %v2078
    %2124 = vst.msk [vmem:[%s91 + $0x20] sm:$0xff] %vm2119, %v2080
    %2125 = vst.msk [vmem:[%s91 + $0x28] sm:$0xff] %vm2119, %v2082
    %2126 = vst.msk [vmem:[%s91 + $0x30] sm:$0xff] %vm2119, %v2084
    %2127 = vst.msk [vmem:[%s91 + $0x38] sm:$0xff] %vm2119, %v2086
    %2128 = vst.msk [vmem:[%s91 + $0x40] sm:$0xff] %vm2119, %v2088
    %2129 = vst.msk [vmem:[%s91 + $0x48] sm:$0xff] %vm2119, %v2090
    %2130 = vst.msk [vmem:[%s91 + $0x50] sm:$0xff] %vm2119, %v2092
    %2131 = vst.msk [vmem:[%s91 + $0x58] sm:$0xff] %vm2119, %v2094
    %2132 = vst.msk [vmem:[%s91 + $0x60] sm:$0xff] %vm2119, %v2096
    %2133 = vst.msk [vmem:[%s91 + $0x68] sm:$0xff] %vm2119, %v2098
    %2134 = vst.msk [vmem:[%s91 + $0x70] sm:$0xff] %vm2119, %v2100
    %2135 = vst.msk [vmem:[%s91 + $0x78] sm:$0xff] %vm2119, %v2102
    %2136 = vrot.lane.b32.xlu0 %v1958, 6
    %v2137 = vpop.permute.xlu0 %2136
    %2138 = vrot.lane.b32.xlu0 %v1959, 6
    %v2139 = vpop.permute.xlu0 %2138
    %2140 = vrot.lane.b32.xlu0 %v1960, 6
    %v2141 = vpop.permute.xlu0 %2140
    %2142 = vrot.lane.b32.xlu0 %v1961, 6
    %v2143 = vpop.permute.xlu0 %2142
    %2144 = vrot.lane.b32.xlu0 %v1962, 6
    %v2145 = vpop.permute.xlu0 %2144
    %2146 = vrot.lane.b32.xlu0 %v1963, 6
    %v2147 = vpop.permute.xlu0 %2146
    %2148 = vrot.lane.b32.xlu0 %v1964, 6
    %v2149 = vpop.permute.xlu0 %2148
    %2150 = vrot.lane.b32.xlu0 %v1965, 6
    %v2151 = vpop.permute.xlu0 %2150
    %2152 = vrot.lane.b32.xlu0 %v1966, 6
    %v2153 = vpop.permute.xlu0 %2152
    %2154 = vrot.lane.b32.xlu0 %v1967, 6
    %v2155 = vpop.permute.xlu0 %2154
    %2156 = vrot.lane.b32.xlu0 %v1968, 6
    %v2157 = vpop.permute.xlu0 %2156
    %2158 = vrot.lane.b32.xlu0 %v1969, 6
    %v2159 = vpop.permute.xlu0 %2158
    %2160 = vrot.lane.b32.xlu0 %v1970, 6
    %v2161 = vpop.permute.xlu0 %2160
    %2162 = vrot.lane.b32.xlu0 %v1971, 6
    %v2163 = vpop.permute.xlu0 %2162
    %2164 = vrot.lane.b32.xlu0 %v1972, 6
    %v2165 = vpop.permute.xlu0 %2164
    %2166 = vrot.lane.b32.xlu0 %v1973, 6
    %v2167 = vpop.permute.xlu0 %2166
    %vm2184 = vcmask 97352
    %2185 = vst.msk [vmem:[%s91] sm:$0xff] %vm2184, %v2137
    %2186 = vst.msk [vmem:[%s91 + $0x8] sm:$0xff] %vm2184, %v2139
    %2187 = vst.msk [vmem:[%s91 + $0x10] sm:$0xff] %vm2184, %v2141
    %2188 = vst.msk [vmem:[%s91 + $0x18] sm:$0xff] %vm2184, %v2143
    %2189 = vst.msk [vmem:[%s91 + $0x20] sm:$0xff] %vm2184, %v2145
    %2190 = vst.msk [vmem:[%s91 + $0x28] sm:$0xff] %vm2184, %v2147
    %2191 = vst.msk [vmem:[%s91 + $0x30] sm:$0xff] %vm2184, %v2149
    %2192 = vst.msk [vmem:[%s91 + $0x38] sm:$0xff] %vm2184, %v2151
    %2193 = vst.msk [vmem:[%s91 + $0x40] sm:$0xff] %vm2184, %v2153
    %2194 = vst.msk [vmem:[%s91 + $0x48] sm:$0xff] %vm2184, %v2155
    %2195 = vst.msk [vmem:[%s91 + $0x50] sm:$0xff] %vm2184, %v2157
    %2196 = vst.msk [vmem:[%s91 + $0x58] sm:$0xff] %vm2184, %v2159
    %2197 = vst.msk [vmem:[%s91 + $0x60] sm:$0xff] %vm2184, %v2161
    %2198 = vst.msk [vmem:[%s91 + $0x68] sm:$0xff] %vm2184, %v2163
    %2199 = vst.msk [vmem:[%s91 + $0x70] sm:$0xff] %vm2184, %v2165
    %2200 = vst.msk [vmem:[%s91 + $0x78] sm:$0xff] %vm2184, %v2167
    %v2201 = vld [vmem:[%s5] sm:$0xff]
    %v2202 = vld [vmem:[%s5 + $0x8] sm:$0xff]
    %v2203 = vld [vmem:[%s5 + $0x10] sm:$0xff]
    %v2204 = vld [vmem:[%s5 + $0x18] sm:$0xff]
    %v2205 = vld [vmem:[%s5 + $0x20] sm:$0xff]
    %v2206 = vld [vmem:[%s5 + $0x28] sm:$0xff]
    %v2207 = vld [vmem:[%s5 + $0x30] sm:$0xff]
    %v2208 = vld [vmem:[%s5 + $0x38] sm:$0xff]
    %v2209 = vld [vmem:[%s5 + $0x40] sm:$0xff]
    %v2210 = vld [vmem:[%s5 + $0x48] sm:$0xff]
    %v2211 = vld [vmem:[%s5 + $0x50] sm:$0xff]
    %v2212 = vld [vmem:[%s5 + $0x58] sm:$0xff]
    %v2213 = vld [vmem:[%s5 + $0x60] sm:$0xff]
    %v2214 = vld [vmem:[%s5 + $0x68] sm:$0xff]
    %v2215 = vld [vmem:[%s5 + $0x70] sm:$0xff]
    %v2216 = vld [vmem:[%s5 + $0x78] sm:$0xff]
    %v2217 = vld [vmem:[#allocation15] sm:$0x1]
    %2219 = vset.pattern.permute.xlu0 1
    %2220 = vperm.xlu0 %2219, %v2201
    %v2221 = vpop.permute.xlu0 %2220
    %2224 = vset.pattern.permute.xlu0 1
    %2225 = vperm.xlu0 %2224, %v2202
    %v2226 = vpop.permute.xlu0 %2225
    %2229 = vset.pattern.permute.xlu0 1
    %2230 = vperm.xlu0 %2229, %v2203
    %v2231 = vpop.permute.xlu0 %2230
    %2234 = vset.pattern.permute.xlu0 1
    %2235 = vperm.xlu0 %2234, %v2204
    %v2236 = vpop.permute.xlu0 %2235
    %2239 = vset.pattern.permute.xlu0 1
    %2240 = vperm.xlu0 %2239, %v2205
    %v2241 = vpop.permute.xlu0 %2240
    %2244 = vset.pattern.permute.xlu0 1
    %2245 = vperm.xlu0 %2244, %v2206
    %v2246 = vpop.permute.xlu0 %2245
    %2249 = vset.pattern.permute.xlu0 1
    %2250 = vperm.xlu0 %2249, %v2207
    %v2251 = vpop.permute.xlu0 %2250
    %2254 = vset.pattern.permute.xlu0 1
    %2255 = vperm.xlu0 %2254, %v2208
    %v2256 = vpop.permute.xlu0 %2255
    %2259 = vset.pattern.permute.xlu0 1
    %2260 = vperm.xlu0 %2259, %v2209
    %v2261 = vpop.permute.xlu0 %2260
    %2264 = vset.pattern.permute.xlu0 1
    %2265 = vperm.xlu0 %2264, %v2210
    %v2266 = vpop.permute.xlu0 %2265
    %2269 = vset.pattern.permute.xlu0 1
    %2270 = vperm.xlu0 %2269, %v2211
    %v2271 = vpop.permute.xlu0 %2270
    %2274 = vset.pattern.permute.xlu0 1
    %2275 = vperm.xlu0 %2274, %v2212
    %v2276 = vpop.permute.xlu0 %2275
    %2279 = vset.pattern.permute.xlu0 1
    %2280 = vperm.xlu0 %2279, %v2213
    %v2281 = vpop.permute.xlu0 %2280
    %2284 = vset.pattern.permute.xlu0 1
    %2285 = vperm.xlu0 %2284, %v2214
    %v2286 = vpop.permute.xlu0 %2285
    %2289 = vset.pattern.permute.xlu0 1
    %2290 = vperm.xlu0 %2289, %v2215
    %v2291 = vpop.permute.xlu0 %2290
    %2294 = vset.pattern.permute.xlu0 1
    %2295 = vperm.xlu0 %2294, %v2216
    %v2296 = vpop.permute.xlu0 %2295
    %v2299 = vperm.slane %v2217, 0
    %v2301 = vmul.f32 %v2221, %v2299
    %v2302 = vmul.f32 %v2226, %v2299
    %v2303 = vmul.f32 %v2231, %v2299
    %v2304 = vmul.f32 %v2236, %v2299
    %v2305 = vmul.f32 %v2241, %v2299
    %v2306 = vmul.f32 %v2246, %v2299
    %v2307 = vmul.f32 %v2251, %v2299
    %v2308 = vmul.f32 %v2256, %v2299
    %v2309 = vmul.f32 %v2261, %v2299
    %v2310 = vmul.f32 %v2266, %v2299
    %v2311 = vmul.f32 %v2271, %v2299
    %v2312 = vmul.f32 %v2276, %v2299
    %v2313 = vmul.f32 %v2281, %v2299
    %v2314 = vmul.f32 %v2286, %v2299
    %v2315 = vmul.f32 %v2291, %v2299
    %v2316 = vmul.f32 %v2296, %v2299
    %v2317 = vld [vmem:[%s47] sm:$0xff]
    %v2318 = vld [vmem:[%s47 + $0x8] sm:$0xff]
    %v2319 = vpack.c.bf16 %v2318, %v2317
    %2320 = vmatpush.bf16.msra.mxu0 0
    %2321 = vmatpush.bf16.msra.mxu0 0
    %2322 = vmatpush.bf16.msra.mxu0 0
    %2323 = vmatpush.bf16.msra.mxu0 0
    %2324 = vmatpush.bf16.msra.mxu0 0
    %2325 = vmatpush.bf16.msra.mxu0 0
    %2326 = vmatpush.bf16.msra.mxu0 0
    %2327 = vmatpush.bf16.msra.mxu0 %v2319
    %2328 = vmatmul.bf16.gmra.mxu0 %v659
    %v2329 = vpop.f32.mrf.mxu0
    %v2330 = vadd.f32 0.0, %v2329
    %v2331 = vpop.f32.mrf.mxu0
    %v2332 = vadd.f32 0.0, %v2331
    %2333 = vmatmul.bf16.gmra.mxu0 %v662
    %v2334 = vpop.f32.mrf.mxu0
    %v2335 = vadd.f32 0.0, %v2334
    %v2336 = vpop.f32.mrf.mxu0
    %v2337 = vadd.f32 0.0, %v2336
    %2338 = vmatmul.bf16.gmra.mxu0 %v665
    %v2339 = vpop.f32.mrf.mxu0
    %v2340 = vadd.f32 0.0, %v2339
    %v2341 = vpop.f32.mrf.mxu0
    %v2342 = vadd.f32 0.0, %v2341
    %2343 = vmatmul.bf16.gmra.mxu0 %v668
    %v2344 = vpop.f32.mrf.mxu0
    %v2345 = vadd.f32 0.0, %v2344
    %v2346 = vpop.f32.mrf.mxu0
    %v2347 = vadd.f32 0.0, %v2346
    %2348 = vmatmul.bf16.gmra.mxu0 %v671
    %v2349 = vpop.f32.mrf.mxu0
    %v2350 = vadd.f32 0.0, %v2349
    %v2351 = vpop.f32.mrf.mxu0
    %v2352 = vadd.f32 0.0, %v2351
    %2353 = vmatmul.bf16.gmra.mxu0 %v674
    %v2354 = vpop.f32.mrf.mxu0
    %v2355 = vadd.f32 0.0, %v2354
    %v2356 = vpop.f32.mrf.mxu0
    %v2357 = vadd.f32 0.0, %v2356
    %2358 = vmatmul.bf16.gmra.mxu0 %v677
    %v2359 = vpop.f32.mrf.mxu0
    %v2360 = vadd.f32 0.0, %v2359
    %v2361 = vpop.f32.mrf.mxu0
    %v2362 = vadd.f32 0.0, %v2361
    %2363 = vmatmul.bf16.gmra.mxu0 %v680
    %v2364 = vpop.f32.mrf.mxu0
    %v2365 = vadd.f32 0.0, %v2364
    %v2366 = vpop.f32.mrf.mxu0
    %v2367 = vadd.f32 0.0, %v2366
    %2368 = vdwg.mxu0
    %v2369 = vadd.f32 %v2301, %v2330
    %v2370 = vadd.f32 %v2302, %v2332
    %v2371 = vadd.f32 %v2303, %v2335
    %v2372 = vadd.f32 %v2304, %v2337
    %v2373 = vadd.f32 %v2305, %v2340
    %v2374 = vadd.f32 %v2306, %v2342
    %v2375 = vadd.f32 %v2307, %v2345
    %v2376 = vadd.f32 %v2308, %v2347
    %v2377 = vadd.f32 %v2309, %v2350
    %v2378 = vadd.f32 %v2310, %v2352
    %v2379 = vadd.f32 %v2311, %v2355
    %v2380 = vadd.f32 %v2312, %v2357
    %v2381 = vadd.f32 %v2313, %v2360
    %v2382 = vadd.f32 %v2314, %v2362
    %v2383 = vadd.f32 %v2315, %v2365
    %v2384 = vadd.f32 %v2316, %v2367
    %v2385 = vld [vmem:[#allocation16] sm:$0x1]
    %v2387 = vperm.slane %v2385, 0
    %v2389 = vadd.f32 %v2369, %v2387
    %v2390 = vadd.f32 %v2370, %v2387
    %v2391 = vadd.f32 %v2371, %v2387
    %v2392 = vadd.f32 %v2372, %v2387
    %v2393 = vadd.f32 %v2373, %v2387
    %v2394 = vadd.f32 %v2374, %v2387
    %v2395 = vadd.f32 %v2375, %v2387
    %v2396 = vadd.f32 %v2376, %v2387
    %v2397 = vadd.f32 %v2377, %v2387
    %v2398 = vadd.f32 %v2378, %v2387
    %v2399 = vadd.f32 %v2379, %v2387
    %v2400 = vadd.f32 %v2380, %v2387
    %v2401 = vadd.f32 %v2381, %v2387
    %v2402 = vadd.f32 %v2382, %v2387
    %v2403 = vadd.f32 %v2383, %v2387
    %v2404 = vadd.f32 %v2384, %v2387
    %v2405 = vld [vmem:[#allocation22] sm:$0x1]
    %v2407 = vperm.slane %v2405, 0
    %v2409 = vmul.f32 %v2221, %v2407
    %v2410 = vmul.f32 %v2226, %v2407
    %v2411 = vmul.f32 %v2231, %v2407
    %v2412 = vmul.f32 %v2236, %v2407
    %v2413 = vmul.f32 %v2241, %v2407
    %v2414 = vmul.f32 %v2246, %v2407
    %v2415 = vmul.f32 %v2251, %v2407
    %v2416 = vmul.f32 %v2256, %v2407
    %v2417 = vmul.f32 %v2261, %v2407
    %v2418 = vmul.f32 %v2266, %v2407
    %v2419 = vmul.f32 %v2271, %v2407
    %v2420 = vmul.f32 %v2276, %v2407
    %v2421 = vmul.f32 %v2281, %v2407
    %v2422 = vmul.f32 %v2286, %v2407
    %v2423 = vmul.f32 %v2291, %v2407
    %v2424 = vmul.f32 %v2296, %v2407
    %v2425 = vld [vmem:[%s61] sm:$0xff]
    %v2426 = vld [vmem:[%s61 + $0x8] sm:$0xff]
    %v2427 = vpack.c.bf16 %v2426, %v2425
    %2428 = vmatpush.bf16.msra.mxu0 0
    %2429 = vmatpush.bf16.msra.mxu0 0
    %2430 = vmatpush.bf16.msra.mxu0 0
    %2431 = vmatpush.bf16.msra.mxu0 0
    %2432 = vmatpush.bf16.msra.mxu0 0
    %2433 = vmatpush.bf16.msra.mxu0 0
    %2434 = vmatpush.bf16.msra.mxu0 0
    %2435 = vmatpush.bf16.msra.mxu0 %v2427
    %2436 = vmatmul.bf16.gmra.mxu0 %v659
    %v2437 = vpop.f32.mrf.mxu0
    %v2438 = vadd.f32 0.0, %v2437
    %v2439 = vpop.f32.mrf.mxu0
    %v2440 = vadd.f32 0.0, %v2439
    %2441 = vmatmul.bf16.gmra.mxu0 %v662
    %v2442 = vpop.f32.mrf.mxu0
    %v2443 = vadd.f32 0.0, %v2442
    %v2444 = vpop.f32.mrf.mxu0
    %v2445 = vadd.f32 0.0, %v2444
    %2446 = vmatmul.bf16.gmra.mxu0 %v665
    %v2447 = vpop.f32.mrf.mxu0
    %v2448 = vadd.f32 0.0, %v2447
    %v2449 = vpop.f32.mrf.mxu0
    %v2450 = vadd.f32 0.0, %v2449
    %2451 = vmatmul.bf16.gmra.mxu0 %v668
    %v2452 = vpop.f32.mrf.mxu0
    %v2453 = vadd.f32 0.0, %v2452
    %v2454 = vpop.f32.mrf.mxu0
    %v2455 = vadd.f32 0.0, %v2454
    %2456 = vmatmul.bf16.gmra.mxu0 %v671
    %v2457 = vpop.f32.mrf.mxu0
    %v2458 = vadd.f32 0.0, %v2457
    %v2459 = vpop.f32.mrf.mxu0
    %v2460 = vadd.f32 0.0, %v2459
    %2461 = vmatmul.bf16.gmra.mxu0 %v674
    %v2462 = vpop.f32.mrf.mxu0
    %v2463 = vadd.f32 0.0, %v2462
    %v2464 = vpop.f32.mrf.mxu0
    %v2465 = vadd.f32 0.0, %v2464
    %2466 = vmatmul.bf16.gmra.mxu0 %v677
    %v2467 = vpop.f32.mrf.mxu0
    %v2468 = vadd.f32 0.0, %v2467
    %v2469 = vpop.f32.mrf.mxu0
    %v2470 = vadd.f32 0.0, %v2469
    %2471 = vmatmul.bf16.gmra.mxu0 %v680
    %v2472 = vpop.f32.mrf.mxu0
    %v2473 = vadd.f32 0.0, %v2472
    %v2474 = vpop.f32.mrf.mxu0
    %v2475 = vadd.f32 0.0, %v2474
    %2476 = vdwg.mxu0
    %v2477 = vadd.f32 %v2409, %v2438
    %v2478 = vadd.f32 %v2410, %v2440
    %v2479 = vadd.f32 %v2411, %v2443
    %v2480 = vadd.f32 %v2412, %v2445
    %v2481 = vadd.f32 %v2413, %v2448
    %v2482 = vadd.f32 %v2414, %v2450
    %v2483 = vadd.f32 %v2415, %v2453
    %v2484 = vadd.f32 %v2416, %v2455
    %v2485 = vadd.f32 %v2417, %v2458
    %v2486 = vadd.f32 %v2418, %v2460
    %v2487 = vadd.f32 %v2419, %v2463
    %v2488 = vadd.f32 %v2420, %v2465
    %v2489 = vadd.f32 %v2421, %v2468
    %v2490 = vadd.f32 %v2422, %v2470
    %v2491 = vadd.f32 %v2423, %v2473
    %v2492 = vadd.f32 %v2424, %v2475
    %v2493 = vld [vmem:[#allocation24] sm:$0x1]
    %v2495 = vperm.slane %v2493, 0
    %v2497 = vadd.f32 %v2477, %v2495
    %v2498 = vadd.f32 %v2478, %v2495
    %v2499 = vadd.f32 %v2479, %v2495
    %v2500 = vadd.f32 %v2480, %v2495
    %v2501 = vadd.f32 %v2481, %v2495
    %v2502 = vadd.f32 %v2482, %v2495
    %v2503 = vadd.f32 %v2483, %v2495
    %v2504 = vadd.f32 %v2484, %v2495
    %v2505 = vadd.f32 %v2485, %v2495
    %v2506 = vadd.f32 %v2486, %v2495
    %v2507 = vadd.f32 %v2487, %v2495
    %v2508 = vadd.f32 %v2488, %v2495
    %v2509 = vadd.f32 %v2489, %v2495
    %v2510 = vadd.f32 %v2490, %v2495
    %v2511 = vadd.f32 %v2491, %v2495
    %v2512 = vadd.f32 %v2492, %v2495
    %v2513 = vld [vmem:[#allocation13] sm:$0x7]
    %v2514 = vpack.c.bf16 %v2513, %v2513
    %v2516 = vand.u32 %v2514, %v913
    %2518 = vmatpush.bf16.msra.mxu0 0
    %2519 = vmatpush.bf16.msra.mxu0 0
    %2520 = vmatpush.bf16.msra.mxu0 0
    %2521 = vmatpush.bf16.msra.mxu0 0
    %2522 = vmatpush.bf16.msra.mxu0 0
    %2523 = vmatpush.bf16.msra.mxu0 0
    %2524 = vmatpush.bf16.msra.mxu0 0
    %2525 = vmatpush.bf16.msra.mxu0 %v2516
    %2526 = vmatmul.bf16.gmra.mxu0 %v887
    %v2527 = vpop.f32.mrf.mxu0
    %v2528 = vadd.f32 %v2389, %v2527
    %v2529 = vpop.f32.mrf.mxu0
    %v2530 = vadd.f32 %v2390, %v2529
    %2531 = vmatmul.bf16.gmra.mxu0 %v890
    %v2532 = vpop.f32.mrf.mxu0
    %v2533 = vadd.f32 %v2391, %v2532
    %v2534 = vpop.f32.mrf.mxu0
    %v2535 = vadd.f32 %v2392, %v2534
    %2536 = vmatmul.bf16.gmra.mxu0 %v893
    %v2537 = vpop.f32.mrf.mxu0
    %v2538 = vadd.f32 %v2393, %v2537
    %v2539 = vpop.f32.mrf.mxu0
    %v2540 = vadd.f32 %v2394, %v2539
    %2541 = vmatmul.bf16.gmra.mxu0 %v896
    %v2542 = vpop.f32.mrf.mxu0
    %v2543 = vadd.f32 %v2395, %v2542
    %v2544 = vpop.f32.mrf.mxu0
    %v2545 = vadd.f32 %v2396, %v2544
    %2546 = vmatmul.bf16.gmra.mxu0 %v899
    %v2547 = vpop.f32.mrf.mxu0
    %v2548 = vadd.f32 %v2397, %v2547
    %v2549 = vpop.f32.mrf.mxu0
    %v2550 = vadd.f32 %v2398, %v2549
    %2551 = vmatmul.bf16.gmra.mxu0 %v902
    %v2552 = vpop.f32.mrf.mxu0
    %v2553 = vadd.f32 %v2399, %v2552
    %v2554 = vpop.f32.mrf.mxu0
    %v2555 = vadd.f32 %v2400, %v2554
    %2556 = vmatmul.bf16.gmra.mxu0 %v905
    %v2557 = vpop.f32.mrf.mxu0
    %v2558 = vadd.f32 %v2401, %v2557
    %v2559 = vpop.f32.mrf.mxu0
    %v2560 = vadd.f32 %v2402, %v2559
    %2561 = vmatmul.bf16.gmra.mxu0 %v908
    %v2562 = vpop.f32.mrf.mxu0
    %v2563 = vadd.f32 %v2403, %v2562
    %v2564 = vpop.f32.mrf.mxu0
    %v2565 = vadd.f32 %v2404, %v2564
    %2566 = vdwg.mxu0
    %v2567 = vmax.f32 %v2528, 0.0
    %v2568 = vmax.f32 %v2530, 0.0
    %v2569 = vmax.f32 %v2533, 0.0
    %v2570 = vmax.f32 %v2535, 0.0
    %v2571 = vmax.f32 %v2538, 0.0
    %v2572 = vmax.f32 %v2540, 0.0
    %v2573 = vmax.f32 %v2543, 0.0
    %v2574 = vmax.f32 %v2545, 0.0
    %v2575 = vmax.f32 %v2548, 0.0
    %v2576 = vmax.f32 %v2550, 0.0
    %v2577 = vmax.f32 %v2553, 0.0
    %v2578 = vmax.f32 %v2555, 0.0
    %v2579 = vmax.f32 %v2558, 0.0
    %v2580 = vmax.f32 %v2560, 0.0
    %v2581 = vmax.f32 %v2563, 0.0
    %v2582 = vmax.f32 %v2565, 0.0
    %v2583 = vld [vmem:[#allocation21] sm:$0x7]
    %v2584 = vpack.c.bf16 %v2583, %v2583
    %v2586 = vand.u32 %v2584, %v913
    %2588 = vmatpush.bf16.msra.mxu0 0
    %2589 = vmatpush.bf16.msra.mxu0 0
    %2590 = vmatpush.bf16.msra.mxu0 0
    %2591 = vmatpush.bf16.msra.mxu0 0
    %2592 = vmatpush.bf16.msra.mxu0 0
    %2593 = vmatpush.bf16.msra.mxu0 0
    %2594 = vmatpush.bf16.msra.mxu0 0
    %2595 = vmatpush.bf16.msra.mxu0 %v2586
    %2596 = vmatmul.bf16.gmra.mxu0 %v887
    %v2597 = vpop.f32.mrf.mxu0
    %v2598 = vadd.f32 0.0, %v2597
    %v2599 = vpop.f32.mrf.mxu0
    %v2600 = vadd.f32 0.0, %v2599
    %2601 = vmatmul.bf16.gmra.mxu0 %v890
    %v2602 = vpop.f32.mrf.mxu0
    %v2603 = vadd.f32 0.0, %v2602
    %v2604 = vpop.f32.mrf.mxu0
    %v2605 = vadd.f32 0.0, %v2604
    %2606 = vmatmul.bf16.gmra.mxu0 %v893
    %v2607 = vpop.f32.mrf.mxu0
    %v2608 = vadd.f32 0.0, %v2607
    %v2609 = vpop.f32.mrf.mxu0
    %v2610 = vadd.f32 0.0, %v2609
    %2611 = vmatmul.bf16.gmra.mxu0 %v896
    %v2612 = vpop.f32.mrf.mxu0
    %v2613 = vadd.f32 0.0, %v2612
    %v2614 = vpop.f32.mrf.mxu0
    %v2615 = vadd.f32 0.0, %v2614
    %2616 = vmatmul.bf16.gmra.mxu0 %v899
    %v2617 = vpop.f32.mrf.mxu0
    %v2618 = vadd.f32 0.0, %v2617
    %v2619 = vpop.f32.mrf.mxu0
    %v2620 = vadd.f32 0.0, %v2619
    %2621 = vmatmul.bf16.gmra.mxu0 %v902
    %v2622 = vpop.f32.mrf.mxu0
    %v2623 = vadd.f32 0.0, %v2622
    %v2624 = vpop.f32.mrf.mxu0
    %v2625 = vadd.f32 0.0, %v2624
    %2626 = vmatmul.bf16.gmra.mxu0 %v905
    %v2627 = vpop.f32.mrf.mxu0
    %v2628 = vadd.f32 0.0, %v2627
    %v2629 = vpop.f32.mrf.mxu0
    %v2630 = vadd.f32 0.0, %v2629
    %2631 = vmatmul.bf16.gmra.mxu0 %v908
    %v2632 = vpop.f32.mrf.mxu0
    %v2633 = vadd.f32 0.0, %v2632
    %v2634 = vpop.f32.mrf.mxu0
    %v2635 = vadd.f32 0.0, %v2634
    %2636 = vdwg.mxu0
    %v2637 = vpack.c.bf16 %v2568, %v2567
    %v2638 = vpack.c.bf16 %v2570, %v2569
    %v2639 = vpack.c.bf16 %v2572, %v2571
    %v2640 = vpack.c.bf16 %v2574, %v2573
    %v2641 = vpack.c.bf16 %v2576, %v2575
    %v2642 = vpack.c.bf16 %v2578, %v2577
    %v2643 = vpack.c.bf16 %v2580, %v2579
    %v2644 = vpack.c.bf16 %v2582, %v2581
    %v2645 = vld [vmem:[%s51] sm:$0xff]
    %v2646 = vld [vmem:[%s51 + $0x8] sm:$0xff]
    %v2647 = vld [vmem:[%s51 + $0x10] sm:$0xff]
    %v2648 = vld [vmem:[%s51 + $0x18] sm:$0xff]
    %v2649 = vld [vmem:[%s51 + $0x20] sm:$0xff]
    %v2650 = vld [vmem:[%s51 + $0x28] sm:$0xff]
    %v2651 = vld [vmem:[%s51 + $0x30] sm:$0xff]
    %v2652 = vld [vmem:[%s51 + $0x38] sm:$0xff]
    %v2653 = vld [vmem:[%s51 + $0x40] sm:$0xff]
    %v2654 = vld [vmem:[%s51 + $0x48] sm:$0xff]
    %v2655 = vld [vmem:[%s51 + $0x50] sm:$0xff]
    %v2656 = vld [vmem:[%s51 + $0x58] sm:$0xff]
    %v2657 = vld [vmem:[%s51 + $0x60] sm:$0xff]
    %v2658 = vld [vmem:[%s51 + $0x68] sm:$0xff]
    %v2659 = vld [vmem:[%s51 + $0x70] sm:$0xff]
    %v2660 = vld [vmem:[%s51 + $0x78] sm:$0xff]
    %v2661 = vpack.c.bf16 %v2646, %v2645
    %v2662 = vpack.c.bf16 %v2648, %v2647
    %v2663 = vpack.c.bf16 %v2650, %v2649
    %v2664 = vpack.c.bf16 %v2652, %v2651
    %v2665 = vpack.c.bf16 %v2654, %v2653
    %v2666 = vpack.c.bf16 %v2656, %v2655
    %v2667 = vpack.c.bf16 %v2658, %v2657
    %v2668 = vpack.c.bf16 %v2660, %v2659
    %2669 = vmatpush.bf16.msra.mxu0 %v2668
    %2670 = vmatpush.bf16.msra.mxu0 %v2667
    %2671 = vmatpush.bf16.msra.mxu0 %v2666
    %2672 = vmatpush.bf16.msra.mxu0 %v2665
    %2673 = vmatpush.bf16.msra.mxu0 %v2664
    %2674 = vmatpush.bf16.msra.mxu0 %v2663
    %2675 = vmatpush.bf16.msra.mxu0 %v2662
    %2676 = vmatpush.bf16.msra.mxu0 %v2661
    %2677 = vmatmul.bf16.gmra.mxu0 %v2637
    %v2678 = vpop.f32.mrf.mxu0
    %v2679 = vadd.f32 %v2598, %v2678
    %v2680 = vpop.f32.mrf.mxu0
    %v2681 = vadd.f32 %v2600, %v2680
    %2682 = vmatmul.bf16.gmra.mxu0 %v2638
    %v2683 = vpop.f32.mrf.mxu0
    %v2684 = vadd.f32 %v2603, %v2683
    %v2685 = vpop.f32.mrf.mxu0
    %v2686 = vadd.f32 %v2605, %v2685
    %2687 = vmatmul.bf16.gmra.mxu0 %v2639
    %v2688 = vpop.f32.mrf.mxu0
    %v2689 = vadd.f32 %v2608, %v2688
    %v2690 = vpop.f32.mrf.mxu0
    %v2691 = vadd.f32 %v2610, %v2690
    %2692 = vmatmul.bf16.gmra.mxu0 %v2640
    %v2693 = vpop.f32.mrf.mxu0
    %v2694 = vadd.f32 %v2613, %v2693
    %v2695 = vpop.f32.mrf.mxu0
    %v2696 = vadd.f32 %v2615, %v2695
    %2697 = vmatmul.bf16.gmra.mxu0 %v2641
    %v2698 = vpop.f32.mrf.mxu0
    %v2699 = vadd.f32 %v2618, %v2698
    %v2700 = vpop.f32.mrf.mxu0
    %v2701 = vadd.f32 %v2620, %v2700
    %2702 = vmatmul.bf16.gmra.mxu0 %v2642
    %v2703 = vpop.f32.mrf.mxu0
    %v2704 = vadd.f32 %v2623, %v2703
    %v2705 = vpop.f32.mrf.mxu0
    %v2706 = vadd.f32 %v2625, %v2705
    %2707 = vmatmul.bf16.gmra.mxu0 %v2643
    %v2708 = vpop.f32.mrf.mxu0
    %v2709 = vadd.f32 %v2628, %v2708
    %v2710 = vpop.f32.mrf.mxu0
    %v2711 = vadd.f32 %v2630, %v2710
    %2712 = vmatmul.bf16.gmra.mxu0 %v2644
    %v2713 = vpop.f32.mrf.mxu0
    %v2714 = vadd.f32 %v2633, %v2713
    %v2715 = vpop.f32.mrf.mxu0
    %v2716 = vadd.f32 %v2635, %v2715
    %2717 = vdwg.mxu0
    %v2718 = vadd.f32 %v2679, %v2497
    %v2719 = vadd.f32 %v2681, %v2498
    %v2720 = vadd.f32 %v2684, %v2499
    %v2721 = vadd.f32 %v2686, %v2500
    %v2722 = vadd.f32 %v2689, %v2501
    %v2723 = vadd.f32 %v2691, %v2502
    %v2724 = vadd.f32 %v2694, %v2503
    %v2725 = vadd.f32 %v2696, %v2504
    %v2726 = vadd.f32 %v2699, %v2505
    %v2727 = vadd.f32 %v2701, %v2506
    %v2728 = vadd.f32 %v2704, %v2507
    %v2729 = vadd.f32 %v2706, %v2508
    %v2730 = vadd.f32 %v2709, %v2509
    %v2731 = vadd.f32 %v2711, %v2510
    %v2732 = vadd.f32 %v2714, %v2511
    %v2733 = vadd.f32 %v2716, %v2512
    %v2734 = vmax.f32 %v2718, 0.0
    %v2735 = vmax.f32 %v2719, 0.0
    %v2736 = vmax.f32 %v2720, 0.0
    %v2737 = vmax.f32 %v2721, 0.0
    %v2738 = vmax.f32 %v2722, 0.0
    %v2739 = vmax.f32 %v2723, 0.0
    %v2740 = vmax.f32 %v2724, 0.0
    %v2741 = vmax.f32 %v2725, 0.0
    %v2742 = vmax.f32 %v2726, 0.0
    %v2743 = vmax.f32 %v2727, 0.0
    %v2744 = vmax.f32 %v2728, 0.0
    %v2745 = vmax.f32 %v2729, 0.0
    %v2746 = vmax.f32 %v2730, 0.0
    %v2747 = vmax.f32 %v2731, 0.0
    %v2748 = vmax.f32 %v2732, 0.0
    %v2749 = vmax.f32 %v2733, 0.0
    %v2750 = vpack.c.bf16 %v2735, %v2734
    %v2751 = vpack.c.bf16 %v2737, %v2736
    %v2752 = vpack.c.bf16 %v2739, %v2738
    %v2753 = vpack.c.bf16 %v2741, %v2740
    %v2754 = vpack.c.bf16 %v2743, %v2742
    %v2755 = vpack.c.bf16 %v2745, %v2744
    %v2756 = vpack.c.bf16 %v2747, %v2746
    %v2757 = vpack.c.bf16 %v2749, %v2748
    %v2758 = vld [vmem:[%s65] sm:$0xff]
    %v2759 = vld [vmem:[%s65 + $0x8] sm:$0xff]
    %v2760 = vld [vmem:[%s65 + $0x10] sm:$0xff]
    %v2761 = vld [vmem:[%s65 + $0x18] sm:$0xff]
    %v2762 = vld [vmem:[%s65 + $0x20] sm:$0xff]
    %v2763 = vld [vmem:[%s65 + $0x28] sm:$0xff]
    %v2764 = vld [vmem:[%s65 + $0x30] sm:$0xff]
    %v2765 = vld [vmem:[%s65 + $0x38] sm:$0xff]
    %v2766 = vld [vmem:[%s65 + $0x40] sm:$0xff]
    %v2767 = vld [vmem:[%s65 + $0x48] sm:$0xff]
    %v2768 = vld [vmem:[%s65 + $0x50] sm:$0xff]
    %v2769 = vld [vmem:[%s65 + $0x58] sm:$0xff]
    %v2770 = vld [vmem:[%s65 + $0x60] sm:$0xff]
    %v2771 = vld [vmem:[%s65 + $0x68] sm:$0xff]
    %v2772 = vld [vmem:[%s65 + $0x70] sm:$0xff]
    %v2773 = vld [vmem:[%s65 + $0x78] sm:$0xff]
    %v2774 = vpack.c.bf16 %v2759, %v2758
    %v2775 = vpack.c.bf16 %v2761, %v2760
    %v2776 = vpack.c.bf16 %v2763, %v2762
    %v2777 = vpack.c.bf16 %v2765, %v2764
    %v2778 = vpack.c.bf16 %v2767, %v2766
    %v2779 = vpack.c.bf16 %v2769, %v2768
    %v2780 = vpack.c.bf16 %v2771, %v2770
    %v2781 = vpack.c.bf16 %v2773, %v2772
    %v2782 = vld [vmem:[#allocation25] sm:$0x1]
    %v2784 = vperm.slane %v2782, 0
    %2786 = vmatpush.bf16.msra.mxu0 %v2781
    %2787 = vmatpush.bf16.msra.mxu0 %v2780
    %2788 = vmatpush.bf16.msra.mxu0 %v2779
    %2789 = vmatpush.bf16.msra.mxu0 %v2778
    %2790 = vmatpush.bf16.msra.mxu0 %v2777
    %2791 = vmatpush.bf16.msra.mxu0 %v2776
    %2792 = vmatpush.bf16.msra.mxu0 %v2775
    %2793 = vmatpush.bf16.msra.mxu0 %v2774
    %2794 = vmatmul.bf16.gmra.mxu0 %v2750
    %v2795 = vpop.f32.mrf.mxu0
    %v2796 = vadd.f32 %v2784, %v2795
    %v2797 = vpop.f32.mrf.mxu0
    %v2798 = vadd.f32 %v2784, %v2797
    %2799 = vmatmul.bf16.gmra.mxu0 %v2751
    %v2800 = vpop.f32.mrf.mxu0
    %v2801 = vadd.f32 %v2784, %v2800
    %v2802 = vpop.f32.mrf.mxu0
    %v2803 = vadd.f32 %v2784, %v2802
    %2804 = vmatmul.bf16.gmra.mxu0 %v2752
    %v2805 = vpop.f32.mrf.mxu0
    %v2806 = vadd.f32 %v2784, %v2805
    %v2807 = vpop.f32.mrf.mxu0
    %v2808 = vadd.f32 %v2784, %v2807
    %2809 = vmatmul.bf16.gmra.mxu0 %v2753
    %v2810 = vpop.f32.mrf.mxu0
    %v2811 = vadd.f32 %v2784, %v2810
    %v2812 = vpop.f32.mrf.mxu0
    %v2813 = vadd.f32 %v2784, %v2812
    %2814 = vmatmul.bf16.gmra.mxu0 %v2754
    %v2815 = vpop.f32.mrf.mxu0
    %v2816 = vadd.f32 %v2784, %v2815
    %v2817 = vpop.f32.mrf.mxu0
    %v2818 = vadd.f32 %v2784, %v2817
    %2819 = vmatmul.bf16.gmra.mxu0 %v2755
    %v2820 = vpop.f32.mrf.mxu0
    %v2821 = vadd.f32 %v2784, %v2820
    %v2822 = vpop.f32.mrf.mxu0
    %v2823 = vadd.f32 %v2784, %v2822
    %2824 = vmatmul.bf16.gmra.mxu0 %v2756
    %v2825 = vpop.f32.mrf.mxu0
    %v2826 = vadd.f32 %v2784, %v2825
    %v2827 = vpop.f32.mrf.mxu0
    %v2828 = vadd.f32 %v2784, %v2827
    %2829 = vmatmul.bf16.gmra.mxu0 %v2757
    %v2830 = vpop.f32.mrf.mxu0
    %v2831 = vadd.f32 %v2784, %v2830
    %v2832 = vpop.f32.mrf.mxu0
    %v2833 = vadd.f32 %v2784, %v2832
    %2834 = vdwg.mxu0
    %v2835 = vmax.f32 %v2796, 0.0
    %v2836 = vmax.f32 %v2798, 0.0
    %v2837 = vmax.f32 %v2801, 0.0
    %v2838 = vmax.f32 %v2803, 0.0
    %v2839 = vmax.f32 %v2806, 0.0
    %v2840 = vmax.f32 %v2808, 0.0
    %v2841 = vmax.f32 %v2811, 0.0
    %v2842 = vmax.f32 %v2813, 0.0
    %v2843 = vmax.f32 %v2816, 0.0
    %v2844 = vmax.f32 %v2818, 0.0
    %v2845 = vmax.f32 %v2821, 0.0
    %v2846 = vmax.f32 %v2823, 0.0
    %v2847 = vmax.f32 %v2826, 0.0
    %v2848 = vmax.f32 %v2828, 0.0
    %v2849 = vmax.f32 %v2831, 0.0
    %v2850 = vmax.f32 %v2833, 0.0
    %v2851 = vpack.c.bf16 %v2836, %v2835
    %v2852 = vpack.c.bf16 %v2838, %v2837
    %v2853 = vpack.c.bf16 %v2840, %v2839
    %v2854 = vpack.c.bf16 %v2842, %v2841
    %v2855 = vpack.c.bf16 %v2844, %v2843
    %v2856 = vpack.c.bf16 %v2846, %v2845
    %v2857 = vpack.c.bf16 %v2848, %v2847
    %v2858 = vpack.c.bf16 %v2850, %v2849
    %v2859 = vld [vmem:[%s69] sm:$0xff]
    %v2860 = vld [vmem:[%s69 + $0x8] sm:$0xff]
    %v2861 = vld [vmem:[%s69 + $0x10] sm:$0xff]
    %v2862 = vld [vmem:[%s69 + $0x18] sm:$0xff]
    %v2863 = vld [vmem:[%s69 + $0x20] sm:$0xff]
    %v2864 = vld [vmem:[%s69 + $0x28] sm:$0xff]
    %v2865 = vld [vmem:[%s69 + $0x30] sm:$0xff]
    %v2866 = vld [vmem:[%s69 + $0x38] sm:$0xff]
    %v2867 = vld [vmem:[%s69 + $0x40] sm:$0xff]
    %v2868 = vld [vmem:[%s69 + $0x48] sm:$0xff]
    %v2869 = vld [vmem:[%s69 + $0x50] sm:$0xff]
    %v2870 = vld [vmem:[%s69 + $0x58] sm:$0xff]
    %v2871 = vld [vmem:[%s69 + $0x60] sm:$0xff]
    %v2872 = vld [vmem:[%s69 + $0x68] sm:$0xff]
    %v2873 = vld [vmem:[%s69 + $0x70] sm:$0xff]
    %v2874 = vld [vmem:[%s69 + $0x78] sm:$0xff]
    %v2875 = vpack.c.bf16 %v2860, %v2859
    %v2876 = vpack.c.bf16 %v2862, %v2861
    %v2877 = vpack.c.bf16 %v2864, %v2863
    %v2878 = vpack.c.bf16 %v2866, %v2865
    %v2879 = vpack.c.bf16 %v2868, %v2867
    %v2880 = vpack.c.bf16 %v2870, %v2869
    %v2881 = vpack.c.bf16 %v2872, %v2871
    %v2882 = vpack.c.bf16 %v2874, %v2873
    %2883 = vmatpush.bf16.msra.mxu0 %v2882
    %2884 = vmatpush.bf16.msra.mxu0 %v2881
    %2885 = vmatpush.bf16.msra.mxu0 %v2880
    %2886 = vmatpush.bf16.msra.mxu0 %v2879
    %2887 = vmatpush.bf16.msra.mxu0 %v2878
    %2888 = vmatpush.bf16.msra.mxu0 %v2877
    %2889 = vmatpush.bf16.msra.mxu0 %v2876
    %2890 = vmatpush.bf16.msra.mxu0 %v2875
    %2891 = vmatmul.bf16.gmra.mxu0 %v2851
    %v2892 = vpop.f32.mrf.mxu0
    %v2893 = vadd.f32 0.0, %v2892
    %v2894 = vpop.f32.mrf.mxu0
    %v2895 = vadd.f32 0.0, %v2894
    %2896 = vmatmul.bf16.gmra.mxu0 %v2852
    %v2897 = vpop.f32.mrf.mxu0
    %v2898 = vadd.f32 0.0, %v2897
    %v2899 = vpop.f32.mrf.mxu0
    %v2900 = vadd.f32 0.0, %v2899
    %2901 = vmatmul.bf16.gmra.mxu0 %v2853
    %v2902 = vpop.f32.mrf.mxu0
    %v2903 = vadd.f32 0.0, %v2902
    %v2904 = vpop.f32.mrf.mxu0
    %v2905 = vadd.f32 0.0, %v2904
    %2906 = vmatmul.bf16.gmra.mxu0 %v2854
    %v2907 = vpop.f32.mrf.mxu0
    %v2908 = vadd.f32 0.0, %v2907
    %v2909 = vpop.f32.mrf.mxu0
    %v2910 = vadd.f32 0.0, %v2909
    %2911 = vmatmul.bf16.gmra.mxu0 %v2855
    %v2912 = vpop.f32.mrf.mxu0
    %v2913 = vadd.f32 0.0, %v2912
    %v2914 = vpop.f32.mrf.mxu0
    %v2915 = vadd.f32 0.0, %v2914
    %2916 = vmatmul.bf16.gmra.mxu0 %v2856
    %v2917 = vpop.f32.mrf.mxu0
    %v2918 = vadd.f32 0.0, %v2917
    %v2919 = vpop.f32.mrf.mxu0
    %v2920 = vadd.f32 0.0, %v2919
    %2921 = vmatmul.bf16.gmra.mxu0 %v2857
    %v2922 = vpop.f32.mrf.mxu0
    %v2923 = vadd.f32 0.0, %v2922
    %v2924 = vpop.f32.mrf.mxu0
    %v2925 = vadd.f32 0.0, %v2924
    %2926 = vmatmul.bf16.gmra.mxu0 %v2858
    %v2927 = vpop.f32.mrf.mxu0
    %v2928 = vadd.f32 0.0, %v2927
    %v2929 = vpop.f32.mrf.mxu0
    %v2930 = vadd.f32 0.0, %v2929
    %2931 = vdwg.mxu0
    %v2932 = vadd.f32 %v498, %v2893
    %v2933 = vadd.f32 %v499, %v2895
    %v2934 = vadd.f32 %v500, %v2898
    %v2935 = vadd.f32 %v501, %v2900
    %v2936 = vadd.f32 %v502, %v2903
    %v2937 = vadd.f32 %v503, %v2905
    %v2938 = vadd.f32 %v504, %v2908
    %v2939 = vadd.f32 %v505, %v2910
    %v2940 = vadd.f32 %v506, %v2913
    %v2941 = vadd.f32 %v507, %v2915
    %v2942 = vadd.f32 %v508, %v2918
    %v2943 = vadd.f32 %v509, %v2920
    %v2944 = vadd.f32 %v510, %v2923
    %v2945 = vadd.f32 %v511, %v2925
    %v2946 = vadd.f32 %v512, %v2928
    %v2947 = vadd.f32 %v513, %v2930
    %2964 = vrot.lane.b32.xlu0 %v2893, 125
    %v2965 = vpop.permute.xlu0 %2964
    %2966 = vrot.lane.b32.xlu0 %v2895, 125
    %v2967 = vpop.permute.xlu0 %2966
    %2968 = vrot.lane.b32.xlu0 %v2898, 125
    %v2969 = vpop.permute.xlu0 %2968
    %2970 = vrot.lane.b32.xlu0 %v2900, 125
    %v2971 = vpop.permute.xlu0 %2970
    %2972 = vrot.lane.b32.xlu0 %v2903, 125
    %v2973 = vpop.permute.xlu0 %2972
    %2974 = vrot.lane.b32.xlu0 %v2905, 125
    %v2975 = vpop.permute.xlu0 %2974
    %2976 = vrot.lane.b32.xlu0 %v2908, 125
    %v2977 = vpop.permute.xlu0 %2976
    %2978 = vrot.lane.b32.xlu0 %v2910, 125
    %v2979 = vpop.permute.xlu0 %2978
    %2980 = vrot.lane.b32.xlu0 %v2913, 125
    %v2981 = vpop.permute.xlu0 %2980
    %2982 = vrot.lane.b32.xlu0 %v2915, 125
    %v2983 = vpop.permute.xlu0 %2982
    %2984 = vrot.lane.b32.xlu0 %v2918, 125
    %v2985 = vpop.permute.xlu0 %2984
    %2986 = vrot.lane.b32.xlu0 %v2920, 125
    %v2987 = vpop.permute.xlu0 %2986
    %2988 = vrot.lane.b32.xlu0 %v2923, 125
    %v2989 = vpop.permute.xlu0 %2988
    %2990 = vrot.lane.b32.xlu0 %v2925, 125
    %v2991 = vpop.permute.xlu0 %2990
    %2992 = vrot.lane.b32.xlu0 %v2928, 125
    %v2993 = vpop.permute.xlu0 %2992
    %2994 = vrot.lane.b32.xlu0 %v2930, 125
    %v2995 = vpop.permute.xlu0 %2994
    %v3012 = vadd.f32 %v498, %v2965
    %v3013 = vadd.f32 %v499, %v2967
    %v3014 = vadd.f32 %v500, %v2969
    %v3015 = vadd.f32 %v501, %v2971
    %v3016 = vadd.f32 %v502, %v2973
    %v3017 = vadd.f32 %v503, %v2975
    %v3018 = vadd.f32 %v504, %v2977
    %v3019 = vadd.f32 %v505, %v2979
    %v3020 = vadd.f32 %v506, %v2981
    %v3021 = vadd.f32 %v507, %v2983
    %v3022 = vadd.f32 %v508, %v2985
    %v3023 = vadd.f32 %v509, %v2987
    %v3024 = vadd.f32 %v510, %v2989
    %v3025 = vadd.f32 %v511, %v2991
    %v3026 = vadd.f32 %v512, %v2993
    %v3027 = vadd.f32 %v513, %v2995
    %v3028 = vpack.c.bf16 %v2933, %v2932
    %v3029 = vpack.c.bf16 %v2935, %v2934
    %v3030 = vpack.c.bf16 %v2937, %v2936
    %v3031 = vpack.c.bf16 %v2939, %v2938
    %v3032 = vpack.c.bf16 %v2941, %v2940
    %v3033 = vpack.c.bf16 %v2943, %v2942
    %v3034 = vpack.c.bf16 %v2945, %v2944
    %v3035 = vpack.c.bf16 %v2947, %v2946
    %v3036 = vld [vmem:[#allocation10] sm:$0x7]
    %v3037 = vpack.c.bf16 %v3036, %v3036
    %v3038 = vpack.c.bf16 %v3013, %v3012
    %v3039 = vpack.c.bf16 %v3015, %v3014
    %v3040 = vpack.c.bf16 %v3017, %v3016
    %v3041 = vpack.c.bf16 %v3019, %v3018
    %v3042 = vpack.c.bf16 %v3021, %v3020
    %v3043 = vpack.c.bf16 %v3023, %v3022
    %v3044 = vpack.c.bf16 %v3025, %v3024
    %v3045 = vpack.c.bf16 %v3027, %v3026
    %v3046 = vld [vmem:[#allocation12] sm:$0x7]
    %v3047 = vpack.c.bf16 %v3046, %v3046
    %v3049 = vsel %vm885, %v3038, 0
    %v3052 = vsel %vm885, %v3039, 0
    %v3055 = vsel %vm885, %v3040, 0
    %v3058 = vsel %vm885, %v3041, 0
    %v3061 = vsel %vm885, %v3042, 0
    %v3064 = vsel %vm885, %v3043, 0
    %v3067 = vsel %vm885, %v3044, 0
    %v3070 = vsel %vm885, %v3045, 0
    %v3073 = vand.u32 %v3047, %v913
    %3075 = vmatpush.bf16.msra.mxu0 0
    %3076 = vmatpush.bf16.msra.mxu0 0
    %3077 = vmatpush.bf16.msra.mxu0 0
    %3078 = vmatpush.bf16.msra.mxu0 0
    %3079 = vmatpush.bf16.msra.mxu0 0
    %3080 = vmatpush.bf16.msra.mxu0 0
    %3081 = vmatpush.bf16.msra.mxu0 0
    %3082 = vmatpush.bf16.msra.mxu0 %v3073
    %3083 = vmatmul.bf16.gmra.mxu0 %v3049
    %v3084 = vpop.f32.mrf.mxu0
    %v3085 = vadd.f32 0.0, %v3084
    %v3086 = vpop.f32.mrf.mxu0
    %v3087 = vadd.f32 0.0, %v3086
    %3088 = vmatmul.bf16.gmra.mxu0 %v3052
    %v3089 = vpop.f32.mrf.mxu0
    %v3090 = vadd.f32 0.0, %v3089
    %v3091 = vpop.f32.mrf.mxu0
    %v3092 = vadd.f32 0.0, %v3091
    %3093 = vmatmul.bf16.gmra.mxu0 %v3055
    %v3094 = vpop.f32.mrf.mxu0
    %v3095 = vadd.f32 0.0, %v3094
    %v3096 = vpop.f32.mrf.mxu0
    %v3097 = vadd.f32 0.0, %v3096
    %3098 = vmatmul.bf16.gmra.mxu0 %v3058
    %v3099 = vpop.f32.mrf.mxu0
    %v3100 = vadd.f32 0.0, %v3099
    %v3101 = vpop.f32.mrf.mxu0
    %v3102 = vadd.f32 0.0, %v3101
    %3103 = vmatmul.bf16.gmra.mxu0 %v3061
    %v3104 = vpop.f32.mrf.mxu0
    %v3105 = vadd.f32 0.0, %v3104
    %v3106 = vpop.f32.mrf.mxu0
    %v3107 = vadd.f32 0.0, %v3106
    %3108 = vmatmul.bf16.gmra.mxu0 %v3064
    %v3109 = vpop.f32.mrf.mxu0
    %v3110 = vadd.f32 0.0, %v3109
    %v3111 = vpop.f32.mrf.mxu0
    %v3112 = vadd.f32 0.0, %v3111
    %3113 = vmatmul.bf16.gmra.mxu0 %v3067
    %v3114 = vpop.f32.mrf.mxu0
    %v3115 = vadd.f32 0.0, %v3114
    %v3116 = vpop.f32.mrf.mxu0
    %v3117 = vadd.f32 0.0, %v3116
    %3118 = vmatmul.bf16.gmra.mxu0 %v3070
    %v3119 = vpop.f32.mrf.mxu0
    %v3120 = vadd.f32 0.0, %v3119
    %v3121 = vpop.f32.mrf.mxu0
    %v3122 = vadd.f32 0.0, %v3121
    %3123 = vdwg.mxu0
    %v3125 = vsel %vm885, %v3028, 0
    %v3128 = vsel %vm885, %v3029, 0
    %v3131 = vsel %vm885, %v3030, 0
    %v3134 = vsel %vm885, %v3031, 0
    %v3137 = vsel %vm885, %v3032, 0
    %v3140 = vsel %vm885, %v3033, 0
    %v3143 = vsel %vm885, %v3034, 0
    %v3146 = vsel %vm885, %v3035, 0
    %v3149 = vand.u32 %v3037, %v913
    %3151 = vmatpush.bf16.msra.mxu0 0
    %3152 = vmatpush.bf16.msra.mxu0 0
    %3153 = vmatpush.bf16.msra.mxu0 0
    %3154 = vmatpush.bf16.msra.mxu0 0
    %3155 = vmatpush.bf16.msra.mxu0 0
    %3156 = vmatpush.bf16.msra.mxu0 0
    %3157 = vmatpush.bf16.msra.mxu0 0
    %3158 = vmatpush.bf16.msra.mxu0 %v3149
    %3159 = vmatmul.bf16.gmra.mxu0 %v3125
    %v3160 = vpop.f32.mrf.mxu0
    %v3161 = vadd.f32 %v3085, %v3160
    %v3162 = vpop.f32.mrf.mxu0
    %v3163 = vadd.f32 %v3087, %v3162
    %3164 = vmatmul.bf16.gmra.mxu0 %v3128
    %v3165 = vpop.f32.mrf.mxu0
    %v3166 = vadd.f32 %v3090, %v3165
    %v3167 = vpop.f32.mrf.mxu0
    %v3168 = vadd.f32 %v3092, %v3167
    %3169 = vmatmul.bf16.gmra.mxu0 %v3131
    %v3170 = vpop.f32.mrf.mxu0
    %v3171 = vadd.f32 %v3095, %v3170
    %v3172 = vpop.f32.mrf.mxu0
    %v3173 = vadd.f32 %v3097, %v3172
    %3174 = vmatmul.bf16.gmra.mxu0 %v3134
    %v3175 = vpop.f32.mrf.mxu0
    %v3176 = vadd.f32 %v3100, %v3175
    %v3177 = vpop.f32.mrf.mxu0
    %v3178 = vadd.f32 %v3102, %v3177
    %3179 = vmatmul.bf16.gmra.mxu0 %v3137
    %v3180 = vpop.f32.mrf.mxu0
    %v3181 = vadd.f32 %v3105, %v3180
    %v3182 = vpop.f32.mrf.mxu0
    %v3183 = vadd.f32 %v3107, %v3182
    %3184 = vmatmul.bf16.gmra.mxu0 %v3140
    %v3185 = vpop.f32.mrf.mxu0
    %v3186 = vadd.f32 %v3110, %v3185
    %v3187 = vpop.f32.mrf.mxu0
    %v3188 = vadd.f32 %v3112, %v3187
    %3189 = vmatmul.bf16.gmra.mxu0 %v3143
    %v3190 = vpop.f32.mrf.mxu0
    %v3191 = vadd.f32 %v3115, %v3190
    %v3192 = vpop.f32.mrf.mxu0
    %v3193 = vadd.f32 %v3117, %v3192
    %3194 = vmatmul.bf16.gmra.mxu0 %v3146
    %v3195 = vpop.f32.mrf.mxu0
    %v3196 = vadd.f32 %v3120, %v3195
    %v3197 = vpop.f32.mrf.mxu0
    %v3198 = vadd.f32 %v3122, %v3197
    %3199 = vdwg.mxu0
    %v3200 = vadd.f32 %v3161, %v2389
    %v3201 = vadd.f32 %v3163, %v2390
    %v3202 = vadd.f32 %v3166, %v2391
    %v3203 = vadd.f32 %v3168, %v2392
    %v3204 = vadd.f32 %v3171, %v2393
    %v3205 = vadd.f32 %v3173, %v2394
    %v3206 = vadd.f32 %v3176, %v2395
    %v3207 = vadd.f32 %v3178, %v2396
    %v3208 = vadd.f32 %v3181, %v2397
    %v3209 = vadd.f32 %v3183, %v2398
    %v3210 = vadd.f32 %v3186, %v2399
    %v3211 = vadd.f32 %v3188, %v2400
    %v3212 = vadd.f32 %v3191, %v2401
    %v3213 = vadd.f32 %v3193, %v2402
    %v3214 = vadd.f32 %v3196, %v2403
    %v3215 = vadd.f32 %v3198, %v2404
    %v3216 = vmax.f32 %v3200, 0.0
    %v3217 = vmax.f32 %v3201, 0.0
    %v3218 = vmax.f32 %v3202, 0.0
    %v3219 = vmax.f32 %v3203, 0.0
    %v3220 = vmax.f32 %v3204, 0.0
    %v3221 = vmax.f32 %v3205, 0.0
    %v3222 = vmax.f32 %v3206, 0.0
    %v3223 = vmax.f32 %v3207, 0.0
    %v3224 = vmax.f32 %v3208, 0.0
    %v3225 = vmax.f32 %v3209, 0.0
    %v3226 = vmax.f32 %v3210, 0.0
    %v3227 = vmax.f32 %v3211, 0.0
    %v3228 = vmax.f32 %v3212, 0.0
    %v3229 = vmax.f32 %v3213, 0.0
    %v3230 = vmax.f32 %v3214, 0.0
    %v3231 = vmax.f32 %v3215, 0.0
    %v3232 = vld [vmem:[#allocation18] sm:$0x7]
    %v3233 = vpack.c.bf16 %v3232, %v3232
    %v3234 = vld [vmem:[#allocation19] sm:$0x7]
    %v3235 = vpack.c.bf16 %v3234, %v3234
    %v3237 = vand.u32 %v3235, %v913
    %3239 = vmatpush.bf16.msra.mxu0 0
    %3240 = vmatpush.bf16.msra.mxu0 0
    %3241 = vmatpush.bf16.msra.mxu0 0
    %3242 = vmatpush.bf16.msra.mxu0 0
    %3243 = vmatpush.bf16.msra.mxu0 0
    %3244 = vmatpush.bf16.msra.mxu0 0
    %3245 = vmatpush.bf16.msra.mxu0 0
    %3246 = vmatpush.bf16.msra.mxu0 %v3237
    %3247 = vmatmul.bf16.gmra.mxu0 %v3049
    %v3248 = vpop.f32.mrf.mxu0
    %v3249 = vadd.f32 0.0, %v3248
    %v3250 = vpop.f32.mrf.mxu0
    %v3251 = vadd.f32 0.0, %v3250
    %3252 = vmatmul.bf16.gmra.mxu0 %v3052
    %v3253 = vpop.f32.mrf.mxu0
    %v3254 = vadd.f32 0.0, %v3253
    %v3255 = vpop.f32.mrf.mxu0
    %v3256 = vadd.f32 0.0, %v3255
    %3257 = vmatmul.bf16.gmra.mxu0 %v3055
    %v3258 = vpop.f32.mrf.mxu0
    %v3259 = vadd.f32 0.0, %v3258
    %v3260 = vpop.f32.mrf.mxu0
    %v3261 = vadd.f32 0.0, %v3260
    %3262 = vmatmul.bf16.gmra.mxu0 %v3058
    %v3263 = vpop.f32.mrf.mxu0
    %v3264 = vadd.f32 0.0, %v3263
    %v3265 = vpop.f32.mrf.mxu0
    %v3266 = vadd.f32 0.0, %v3265
    %3267 = vmatmul.bf16.gmra.mxu0 %v3061
    %v3268 = vpop.f32.mrf.mxu0
    %v3269 = vadd.f32 0.0, %v3268
    %v3270 = vpop.f32.mrf.mxu0
    %v3271 = vadd.f32 0.0, %v3270
    %3272 = vmatmul.bf16.gmra.mxu0 %v3064
    %v3273 = vpop.f32.mrf.mxu0
    %v3274 = vadd.f32 0.0, %v3273
    %v3275 = vpop.f32.mrf.mxu0
    %v3276 = vadd.f32 0.0, %v3275
    %3277 = vmatmul.bf16.gmra.mxu0 %v3067
    %v3278 = vpop.f32.mrf.mxu0
    %v3279 = vadd.f32 0.0, %v3278
    %v3280 = vpop.f32.mrf.mxu0
    %v3281 = vadd.f32 0.0, %v3280
    %3282 = vmatmul.bf16.gmra.mxu0 %v3070
    %v3283 = vpop.f32.mrf.mxu0
    %v3284 = vadd.f32 0.0, %v3283
    %v3285 = vpop.f32.mrf.mxu0
    %v3286 = vadd.f32 0.0, %v3285
    %3287 = vdwg.mxu0
    %v3289 = vand.u32 %v3233, %v913
    %3291 = vmatpush.bf16.msra.mxu0 0
    %3292 = vmatpush.bf16.msra.mxu0 0
    %3293 = vmatpush.bf16.msra.mxu0 0
    %3294 = vmatpush.bf16.msra.mxu0 0
    %3295 = vmatpush.bf16.msra.mxu0 0
    %3296 = vmatpush.bf16.msra.mxu0 0
    %3297 = vmatpush.bf16.msra.mxu0 0
    %3298 = vmatpush.bf16.msra.mxu0 %v3289
    %3299 = vmatmul.bf16.gmra.mxu0 %v3125
    %v3300 = vpop.f32.mrf.mxu0
    %v3301 = vadd.f32 %v3249, %v3300
    %v3302 = vpop.f32.mrf.mxu0
    %v3303 = vadd.f32 %v3251, %v3302
    %3304 = vmatmul.bf16.gmra.mxu0 %v3128
    %v3305 = vpop.f32.mrf.mxu0
    %v3306 = vadd.f32 %v3254, %v3305
    %v3307 = vpop.f32.mrf.mxu0
    %v3308 = vadd.f32 %v3256, %v3307
    %3309 = vmatmul.bf16.gmra.mxu0 %v3131
    %v3310 = vpop.f32.mrf.mxu0
    %v3311 = vadd.f32 %v3259, %v3310
    %v3312 = vpop.f32.mrf.mxu0
    %v3313 = vadd.f32 %v3261, %v3312
    %3314 = vmatmul.bf16.gmra.mxu0 %v3134
    %v3315 = vpop.f32.mrf.mxu0
    %v3316 = vadd.f32 %v3264, %v3315
    %v3317 = vpop.f32.mrf.mxu0
    %v3318 = vadd.f32 %v3266, %v3317
    %3319 = vmatmul.bf16.gmra.mxu0 %v3137
    %v3320 = vpop.f32.mrf.mxu0
    %v3321 = vadd.f32 %v3269, %v3320
    %v3322 = vpop.f32.mrf.mxu0
    %v3323 = vadd.f32 %v3271, %v3322
    %3324 = vmatmul.bf16.gmra.mxu0 %v3140
    %v3325 = vpop.f32.mrf.mxu0
    %v3326 = vadd.f32 %v3274, %v3325
    %v3327 = vpop.f32.mrf.mxu0
    %v3328 = vadd.f32 %v3276, %v3327
    %3329 = vmatmul.bf16.gmra.mxu0 %v3143
    %v3330 = vpop.f32.mrf.mxu0
    %v3331 = vadd.f32 %v3279, %v3330
    %v3332 = vpop.f32.mrf.mxu0
    %v3333 = vadd.f32 %v3281, %v3332
    %3334 = vmatmul.bf16.gmra.mxu0 %v3146
    %v3335 = vpop.f32.mrf.mxu0
    %v3336 = vadd.f32 %v3284, %v3335
    %v3337 = vpop.f32.mrf.mxu0
    %v3338 = vadd.f32 %v3286, %v3337
    %3339 = vdwg.mxu0
    %v3340 = vpack.c.bf16 %v3217, %v3216
    %v3341 = vpack.c.bf16 %v3219, %v3218
    %v3342 = vpack.c.bf16 %v3221, %v3220
    %v3343 = vpack.c.bf16 %v3223, %v3222
    %v3344 = vpack.c.bf16 %v3225, %v3224
    %v3345 = vpack.c.bf16 %v3227, %v3226
    %v3346 = vpack.c.bf16 %v3229, %v3228
    %v3347 = vpack.c.bf16 %v3231, %v3230
    %3348 = vmatpush.bf16.msra.mxu0 %v2668
    %3349 = vmatpush.bf16.msra.mxu0 %v2667
    %3350 = vmatpush.bf16.msra.mxu0 %v2666
    %3351 = vmatpush.bf16.msra.mxu0 %v2665
    %3352 = vmatpush.bf16.msra.mxu0 %v2664
    %3353 = vmatpush.bf16.msra.mxu0 %v2663
    %3354 = vmatpush.bf16.msra.mxu0 %v2662
    %3355 = vmatpush.bf16.msra.mxu0 %v2661
    %3356 = vmatmul.bf16.gmra.mxu0 %v3340
    %v3357 = vpop.f32.mrf.mxu0
    %v3358 = vadd.f32 %v3301, %v3357
    %v3359 = vpop.f32.mrf.mxu0
    %v3360 = vadd.f32 %v3303, %v3359
    %3361 = vmatmul.bf16.gmra.mxu0 %v3341
    %v3362 = vpop.f32.mrf.mxu0
    %v3363 = vadd.f32 %v3306, %v3362
    %v3364 = vpop.f32.mrf.mxu0
    %v3365 = vadd.f32 %v3308, %v3364
    %3366 = vmatmul.bf16.gmra.mxu0 %v3342
    %v3367 = vpop.f32.mrf.mxu0
    %v3368 = vadd.f32 %v3311, %v3367
    %v3369 = vpop.f32.mrf.mxu0
    %v3370 = vadd.f32 %v3313, %v3369
    %3371 = vmatmul.bf16.gmra.mxu0 %v3343
    %v3372 = vpop.f32.mrf.mxu0
    %v3373 = vadd.f32 %v3316, %v3372
    %v3374 = vpop.f32.mrf.mxu0
    %v3375 = vadd.f32 %v3318, %v3374
    %3376 = vmatmul.bf16.gmra.mxu0 %v3344
    %v3377 = vpop.f32.mrf.mxu0
    %v3378 = vadd.f32 %v3321, %v3377
    %v3379 = vpop.f32.mrf.mxu0
    %v3380 = vadd.f32 %v3323, %v3379
    %3381 = vmatmul.bf16.gmra.mxu0 %v3345
    %v3382 = vpop.f32.mrf.mxu0
    %v3383 = vadd.f32 %v3326, %v3382
    %v3384 = vpop.f32.mrf.mxu0
    %v3385 = vadd.f32 %v3328, %v3384
    %3386 = vmatmul.bf16.gmra.mxu0 %v3346
    %v3387 = vpop.f32.mrf.mxu0
    %v3388 = vadd.f32 %v3331, %v3387
    %v3389 = vpop.f32.mrf.mxu0
    %v3390 = vadd.f32 %v3333, %v3389
    %3391 = vmatmul.bf16.gmra.mxu0 %v3347
    %v3392 = vpop.f32.mrf.mxu0
    %v3393 = vadd.f32 %v3336, %v3392
    %v3394 = vpop.f32.mrf.mxu0
    %v3395 = vadd.f32 %v3338, %v3394
    %3396 = vdwg.mxu0
    %v3397 = vadd.f32 %v3358, %v2497
    %v3398 = vadd.f32 %v3360, %v2498
    %v3399 = vadd.f32 %v3363, %v2499
    %v3400 = vadd.f32 %v3365, %v2500
    %v3401 = vadd.f32 %v3368, %v2501
    %v3402 = vadd.f32 %v3370, %v2502
    %v3403 = vadd.f32 %v3373, %v2503
    %v3404 = vadd.f32 %v3375, %v2504
    %v3405 = vadd.f32 %v3378, %v2505
    %v3406 = vadd.f32 %v3380, %v2506
    %v3407 = vadd.f32 %v3383, %v2507
    %v3408 = vadd.f32 %v3385, %v2508
    %v3409 = vadd.f32 %v3388, %v2509
    %v3410 = vadd.f32 %v3390, %v2510
    %v3411 = vadd.f32 %v3393, %v2511
    %v3412 = vadd.f32 %v3395, %v2512
    %v3413 = vmax.f32 %v3397, 0.0
    %v3414 = vmax.f32 %v3398, 0.0
    %v3415 = vmax.f32 %v3399, 0.0
    %v3416 = vmax.f32 %v3400, 0.0
    %v3417 = vmax.f32 %v3401, 0.0
    %v3418 = vmax.f32 %v3402, 0.0
    %v3419 = vmax.f32 %v3403, 0.0
    %v3420 = vmax.f32 %v3404, 0.0
    %v3421 = vmax.f32 %v3405, 0.0
    %v3422 = vmax.f32 %v3406, 0.0
    %v3423 = vmax.f32 %v3407, 0.0
    %v3424 = vmax.f32 %v3408, 0.0
    %v3425 = vmax.f32 %v3409, 0.0
    %v3426 = vmax.f32 %v3410, 0.0
    %v3427 = vmax.f32 %v3411, 0.0
    %v3428 = vmax.f32 %v3412, 0.0
    %v3429 = vpack.c.bf16 %v3414, %v3413
    %v3430 = vpack.c.bf16 %v3416, %v3415
    %v3431 = vpack.c.bf16 %v3418, %v3417
    %v3432 = vpack.c.bf16 %v3420, %v3419
    %v3433 = vpack.c.bf16 %v3422, %v3421
    %v3434 = vpack.c.bf16 %v3424, %v3423
    %v3435 = vpack.c.bf16 %v3426, %v3425
    %v3436 = vpack.c.bf16 %v3428, %v3427
    %3437 = vmatpush.bf16.msra.mxu0 %v2781
    %3438 = vmatpush.bf16.msra.mxu0 %v2780
    %3439 = vmatpush.bf16.msra.mxu0 %v2779
    %3440 = vmatpush.bf16.msra.mxu0 %v2778
    %3441 = vmatpush.bf16.msra.mxu0 %v2777
    %3442 = vmatpush.bf16.msra.mxu0 %v2776
    %3443 = vmatpush.bf16.msra.mxu0 %v2775
    %3444 = vmatpush.bf16.msra.mxu0 %v2774
    %3445 = vmatmul.bf16.gmra.mxu0 %v3429
    %v3446 = vpop.f32.mrf.mxu0
    %v3447 = vadd.f32 %v2784, %v3446
    %v3448 = vpop.f32.mrf.mxu0
    %v3449 = vadd.f32 %v2784, %v3448
    %3450 = vmatmul.bf16.gmra.mxu0 %v3430
    %v3451 = vpop.f32.mrf.mxu0
    %v3452 = vadd.f32 %v2784, %v3451
    %v3453 = vpop.f32.mrf.mxu0
    %v3454 = vadd.f32 %v2784, %v3453
    %3455 = vmatmul.bf16.gmra.mxu0 %v3431
    %v3456 = vpop.f32.mrf.mxu0
    %v3457 = vadd.f32 %v2784, %v3456
    %v3458 = vpop.f32.mrf.mxu0
    %v3459 = vadd.f32 %v2784, %v3458
    %3460 = vmatmul.bf16.gmra.mxu0 %v3432
    %v3461 = vpop.f32.mrf.mxu0
    %v3462 = vadd.f32 %v2784, %v3461
    %v3463 = vpop.f32.mrf.mxu0
    %v3464 = vadd.f32 %v2784, %v3463
    %3465 = vmatmul.bf16.gmra.mxu0 %v3433
    %v3466 = vpop.f32.mrf.mxu0
    %v3467 = vadd.f32 %v2784, %v3466
    %v3468 = vpop.f32.mrf.mxu0
    %v3469 = vadd.f32 %v2784, %v3468
    %3470 = vmatmul.bf16.gmra.mxu0 %v3434
    %v3471 = vpop.f32.mrf.mxu0
    %v3472 = vadd.f32 %v2784, %v3471
    %v3473 = vpop.f32.mrf.mxu0
    %v3474 = vadd.f32 %v2784, %v3473
    %3475 = vmatmul.bf16.gmra.mxu0 %v3435
    %v3476 = vpop.f32.mrf.mxu0
    %v3477 = vadd.f32 %v2784, %v3476
    %v3478 = vpop.f32.mrf.mxu0
    %v3479 = vadd.f32 %v2784, %v3478
    %3480 = vmatmul.bf16.gmra.mxu0 %v3436
    %v3481 = vpop.f32.mrf.mxu0
    %v3482 = vadd.f32 %v2784, %v3481
    %v3483 = vpop.f32.mrf.mxu0
    %v3484 = vadd.f32 %v2784, %v3483
    %3485 = vdwg.mxu0
    %v3486 = vmax.f32 %v3447, 0.0
    %v3487 = vmax.f32 %v3449, 0.0
    %v3488 = vmax.f32 %v3452, 0.0
    %v3489 = vmax.f32 %v3454, 0.0
    %v3490 = vmax.f32 %v3457, 0.0
    %v3491 = vmax.f32 %v3459, 0.0
    %v3492 = vmax.f32 %v3462, 0.0
    %v3493 = vmax.f32 %v3464, 0.0
    %v3494 = vmax.f32 %v3467, 0.0
    %v3495 = vmax.f32 %v3469, 0.0
    %v3496 = vmax.f32 %v3472, 0.0
    %v3497 = vmax.f32 %v3474, 0.0
    %v3498 = vmax.f32 %v3477, 0.0
    %v3499 = vmax.f32 %v3479, 0.0
    %v3500 = vmax.f32 %v3482, 0.0
    %v3501 = vmax.f32 %v3484, 0.0
    %v3502 = vpack.c.bf16 %v3487, %v3486
    %v3503 = vpack.c.bf16 %v3489, %v3488
    %v3504 = vpack.c.bf16 %v3491, %v3490
    %v3505 = vpack.c.bf16 %v3493, %v3492
    %v3506 = vpack.c.bf16 %v3495, %v3494
    %v3507 = vpack.c.bf16 %v3497, %v3496
    %v3508 = vpack.c.bf16 %v3499, %v3498
    %v3509 = vpack.c.bf16 %v3501, %v3500
    %3510 = vmatpush.bf16.msra.mxu0 %v2882
    %3511 = vmatpush.bf16.msra.mxu0 %v2881
    %3512 = vmatpush.bf16.msra.mxu0 %v2880
    %3513 = vmatpush.bf16.msra.mxu0 %v2879
    %3514 = vmatpush.bf16.msra.mxu0 %v2878
    %3515 = vmatpush.bf16.msra.mxu0 %v2877
    %3516 = vmatpush.bf16.msra.mxu0 %v2876
    %3517 = vmatpush.bf16.msra.mxu0 %v2875
    %3518 = vmatmul.bf16.gmra.mxu0 %v3502
    %v3519 = vpop.f32.mrf.mxu0
    %v3520 = vadd.f32 0.0, %v3519
    %v3521 = vpop.f32.mrf.mxu0
    %v3522 = vadd.f32 0.0, %v3521
    %3523 = vmatmul.bf16.gmra.mxu0 %v3503
    %v3524 = vpop.f32.mrf.mxu0
    %v3525 = vadd.f32 0.0, %v3524
    %v3526 = vpop.f32.mrf.mxu0
    %v3527 = vadd.f32 0.0, %v3526
    %3528 = vmatmul.bf16.gmra.mxu0 %v3504
    %v3529 = vpop.f32.mrf.mxu0
    %v3530 = vadd.f32 0.0, %v3529
    %v3531 = vpop.f32.mrf.mxu0
    %v3532 = vadd.f32 0.0, %v3531
    %3533 = vmatmul.bf16.gmra.mxu0 %v3505
    %v3534 = vpop.f32.mrf.mxu0
    %v3535 = vadd.f32 0.0, %v3534
    %v3536 = vpop.f32.mrf.mxu0
    %v3537 = vadd.f32 0.0, %v3536
    %3538 = vmatmul.bf16.gmra.mxu0 %v3506
    %v3539 = vpop.f32.mrf.mxu0
    %v3540 = vadd.f32 0.0, %v3539
    %v3541 = vpop.f32.mrf.mxu0
    %v3542 = vadd.f32 0.0, %v3541
    %3543 = vmatmul.bf16.gmra.mxu0 %v3507
    %v3544 = vpop.f32.mrf.mxu0
    %v3545 = vadd.f32 0.0, %v3544
    %v3546 = vpop.f32.mrf.mxu0
    %v3547 = vadd.f32 0.0, %v3546
    %3548 = vmatmul.bf16.gmra.mxu0 %v3508
    %v3549 = vpop.f32.mrf.mxu0
    %v3550 = vadd.f32 0.0, %v3549
    %v3551 = vpop.f32.mrf.mxu0
    %v3552 = vadd.f32 0.0, %v3551
    %3553 = vmatmul.bf16.gmra.mxu0 %v3509
    %v3554 = vpop.f32.mrf.mxu0
    %v3555 = vadd.f32 0.0, %v3554
    %v3556 = vpop.f32.mrf.mxu0
    %v3557 = vadd.f32 0.0, %v3556
    %3558 = vdwg.mxu0
    %v3559 = vsub.f32 0.0, %v3520
    %v3560 = vsub.f32 0.0, %v3522
    %v3561 = vsub.f32 0.0, %v3525
    %v3562 = vsub.f32 0.0, %v3527
    %v3563 = vsub.f32 0.0, %v3530
    %v3564 = vsub.f32 0.0, %v3532
    %v3565 = vsub.f32 0.0, %v3535
    %v3566 = vsub.f32 0.0, %v3537
    %v3567 = vsub.f32 0.0, %v3540
    %v3568 = vsub.f32 0.0, %v3542
    %v3569 = vsub.f32 0.0, %v3545
    %v3570 = vsub.f32 0.0, %v3547
    %v3571 = vsub.f32 0.0, %v3550
    %v3572 = vsub.f32 0.0, %v3552
    %v3573 = vsub.f32 0.0, %v3555
    %v3574 = vsub.f32 0.0, %v3557
    %3575 = vrot.lane.b32.xlu0 %v2893, 12
    %v3576 = vpop.permute.xlu0 %3575
    %3577 = vrot.lane.b32.xlu0 %v2895, 12
    %v3578 = vpop.permute.xlu0 %3577
    %3579 = vrot.lane.b32.xlu0 %v2898, 12
    %v3580 = vpop.permute.xlu0 %3579
    %3581 = vrot.lane.b32.xlu0 %v2900, 12
    %v3582 = vpop.permute.xlu0 %3581
    %3583 = vrot.lane.b32.xlu0 %v2903, 12
    %v3584 = vpop.permute.xlu0 %3583
    %3585 = vrot.lane.b32.xlu0 %v2905, 12
    %v3586 = vpop.permute.xlu0 %3585
    %3587 = vrot.lane.b32.xlu0 %v2908, 12
    %v3588 = vpop.permute.xlu0 %3587
    %3589 = vrot.lane.b32.xlu0 %v2910, 12
    %v3590 = vpop.permute.xlu0 %3589
    %3591 = vrot.lane.b32.xlu0 %v2913, 12
    %v3592 = vpop.permute.xlu0 %3591
    %3593 = vrot.lane.b32.xlu0 %v2915, 12
    %v3594 = vpop.permute.xlu0 %3593
    %3595 = vrot.lane.b32.xlu0 %v2918, 12
    %v3596 = vpop.permute.xlu0 %3595
    %3597 = vrot.lane.b32.xlu0 %v2920, 12
    %v3598 = vpop.permute.xlu0 %3597
    %3599 = vrot.lane.b32.xlu0 %v2923, 12
    %v3600 = vpop.permute.xlu0 %3599
    %3601 = vrot.lane.b32.xlu0 %v2925, 12
    %v3602 = vpop.permute.xlu0 %3601
    %3603 = vrot.lane.b32.xlu0 %v2928, 12
    %v3604 = vpop.permute.xlu0 %3603
    %3605 = vrot.lane.b32.xlu0 %v2930, 12
    %v3606 = vpop.permute.xlu0 %3605
    %vm3623 = vcmask 121952
    %3624 = vst.msk [vmem:[%s91] sm:$0xff] %vm3623, %v3576
    %3625 = vst.msk [vmem:[%s91 + $0x8] sm:$0xff] %vm3623, %v3578
    %3626 = vst.msk [vmem:[%s91 + $0x10] sm:$0xff] %vm3623, %v3580
    %3627 = vst.msk [vmem:[%s91 + $0x18] sm:$0xff] %vm3623, %v3582
    %3628 = vst.msk [vmem:[%s91 + $0x20] sm:$0xff] %vm3623, %v3584
    %3629 = vst.msk [vmem:[%s91 + $0x28] sm:$0xff] %vm3623, %v3586
    %3630 = vst.msk [vmem:[%s91 + $0x30] sm:$0xff] %vm3623, %v3588
    %3631 = vst.msk [vmem:[%s91 + $0x38] sm:$0xff] %vm3623, %v3590
    %3632 = vst.msk [vmem:[%s91 + $0x40] sm:$0xff] %vm3623, %v3592
    %3633 = vst.msk [vmem:[%s91 + $0x48] sm:$0xff] %vm3623, %v3594
    %3634 = vst.msk [vmem:[%s91 + $0x50] sm:$0xff] %vm3623, %v3596
    %3635 = vst.msk [vmem:[%s91 + $0x58] sm:$0xff] %vm3623, %v3598
    %3636 = vst.msk [vmem:[%s91 + $0x60] sm:$0xff] %vm3623, %v3600
    %3637 = vst.msk [vmem:[%s91 + $0x68] sm:$0xff] %vm3623, %v3602
    %3638 = vst.msk [vmem:[%s91 + $0x70] sm:$0xff] %vm3623, %v3604
    %3639 = vst.msk [vmem:[%s91 + $0x78] sm:$0xff] %vm3623, %v3606
    %3656 = vrot.lane.b32.xlu0 %v3559, 15
    %v3657 = vpop.permute.xlu0 %3656
    %3658 = vrot.lane.b32.xlu0 %v3560, 15
    %v3659 = vpop.permute.xlu0 %3658
    %3660 = vrot.lane.b32.xlu0 %v3561, 15
    %v3661 = vpop.permute.xlu0 %3660
    %3662 = vrot.lane.b32.xlu0 %v3562, 15
    %v3663 = vpop.permute.xlu0 %3662
    %3664 = vrot.lane.b32.xlu0 %v3563, 15
    %v3665 = vpop.permute.xlu0 %3664
    %3666 = vrot.lane.b32.xlu0 %v3564, 15
    %v3667 = vpop.permute.xlu0 %3666
    %3668 = vrot.lane.b32.xlu0 %v3565, 15
    %v3669 = vpop.permute.xlu0 %3668
    %3670 = vrot.lane.b32.xlu0 %v3566, 15
    %v3671 = vpop.permute.xlu0 %3670
    %3672 = vrot.lane.b32.xlu0 %v3567, 15
    %v3673 = vpop.permute.xlu0 %3672
    %3674 = vrot.lane.b32.xlu0 %v3568, 15
    %v3675 = vpop.permute.xlu0 %3674
    %3676 = vrot.lane.b32.xlu0 %v3569, 15
    %v3677 = vpop.permute.xlu0 %3676
    %3678 = vrot.lane.b32.xlu0 %v3570, 15
    %v3679 = vpop.permute.xlu0 %3678
    %3680 = vrot.lane.b32.xlu0 %v3571, 15
    %v3681 = vpop.permute.xlu0 %3680
    %3682 = vrot.lane.b32.xlu0 %v3572, 15
    %v3683 = vpop.permute.xlu0 %3682
    %3684 = vrot.lane.b32.xlu0 %v3573, 15
    %v3685 = vpop.permute.xlu0 %3684
    %3686 = vrot.lane.b32.xlu0 %v3574, 15
    %v3687 = vpop.permute.xlu0 %3686
    %vm3704 = vcmask 146552
    %3705 = vst.msk [vmem:[%s91] sm:$0xff] %vm3704, %v3657
    %3706 = vst.msk [vmem:[%s91 + $0x8] sm:$0xff] %vm3704, %v3659
    %3707 = vst.msk [vmem:[%s91 + $0x10] sm:$0xff] %vm3704, %v3661
    %3708 = vst.msk [vmem:[%s91 + $0x18] sm:$0xff] %vm3704, %v3663
    %3709 = vst.msk [vmem:[%s91 + $0x20] sm:$0xff] %vm3704, %v3665
    %3710 = vst.msk [vmem:[%s91 + $0x28] sm:$0xff] %vm3704, %v3667
    %3711 = vst.msk [vmem:[%s91 + $0x30] sm:$0xff] %vm3704, %v3669
    %3712 = vst.msk [vmem:[%s91 + $0x38] sm:$0xff] %vm3704, %v3671
    %3713 = vst.msk [vmem:[%s91 + $0x40] sm:$0xff] %vm3704, %v3673
    %3714 = vst.msk [vmem:[%s91 + $0x48] sm:$0xff] %vm3704, %v3675
    %3715 = vst.msk [vmem:[%s91 + $0x50] sm:$0xff] %vm3704, %v3677
    %3716 = vst.msk [vmem:[%s91 + $0x58] sm:$0xff] %vm3704, %v3679
    %3717 = vst.msk [vmem:[%s91 + $0x60] sm:$0xff] %vm3704, %v3681
    %3718 = vst.msk [vmem:[%s91 + $0x68] sm:$0xff] %vm3704, %v3683
    %3719 = vst.msk [vmem:[%s91 + $0x70] sm:$0xff] %vm3704, %v3685
    %3720 = vst.msk [vmem:[%s91 + $0x78] sm:$0xff] %vm3704, %v3687
    %3721 = vrot.lane.b32.xlu0 %v2893, 15
    %v3722 = vpop.permute.xlu0 %3721
    %3723 = vrot.lane.b32.xlu0 %v2895, 15
    %v3724 = vpop.permute.xlu0 %3723
    %3725 = vrot.lane.b32.xlu0 %v2898, 15
    %v3726 = vpop.permute.xlu0 %3725
    %3727 = vrot.lane.b32.xlu0 %v2900, 15
    %v3728 = vpop.permute.xlu0 %3727
    %3729 = vrot.lane.b32.xlu0 %v2903, 15
    %v3730 = vpop.permute.xlu0 %3729
    %3731 = vrot.lane.b32.xlu0 %v2905, 15
    %v3732 = vpop.permute.xlu0 %3731
    %3733 = vrot.lane.b32.xlu0 %v2908, 15
    %v3734 = vpop.permute.xlu0 %3733
    %3735 = vrot.lane.b32.xlu0 %v2910, 15
    %v3736 = vpop.permute.xlu0 %3735
    %3737 = vrot.lane.b32.xlu0 %v2913, 15
    %v3738 = vpop.permute.xlu0 %3737
    %3739 = vrot.lane.b32.xlu0 %v2915, 15
    %v3740 = vpop.permute.xlu0 %3739
    %3741 = vrot.lane.b32.xlu0 %v2918, 15
    %v3742 = vpop.permute.xlu0 %3741
    %3743 = vrot.lane.b32.xlu0 %v2920, 15
    %v3744 = vpop.permute.xlu0 %3743
    %3745 = vrot.lane.b32.xlu0 %v2923, 15
    %v3746 = vpop.permute.xlu0 %3745
    %3747 = vrot.lane.b32.xlu0 %v2925, 15
    %v3748 = vpop.permute.xlu0 %3747
    %3749 = vrot.lane.b32.xlu0 %v2928, 15
    %v3750 = vpop.permute.xlu0 %3749
    %3751 = vrot.lane.b32.xlu0 %v2930, 15
    %v3752 = vpop.permute.xlu0 %3751
    %vm3769 = vcmask 171152
    %3770 = vst.msk [vmem:[%s91] sm:$0xff] %vm3769, %v3722
    %3771 = vst.msk [vmem:[%s91 + $0x8] sm:$0xff] %vm3769, %v3724
    %3772 = vst.msk [vmem:[%s91 + $0x10] sm:$0xff] %vm3769, %v3726
    %3773 = vst.msk [vmem:[%s91 + $0x18] sm:$0xff] %vm3769, %v3728
    %3774 = vst.msk [vmem:[%s91 + $0x20] sm:$0xff] %vm3769, %v3730
    %3775 = vst.msk [vmem:[%s91 + $0x28] sm:$0xff] %vm3769, %v3732
    %3776 = vst.msk [vmem:[%s91 + $0x30] sm:$0xff] %vm3769, %v3734
    %3777 = vst.msk [vmem:[%s91 + $0x38] sm:$0xff] %vm3769, %v3736
    %3778 = vst.msk [vmem:[%s91 + $0x40] sm:$0xff] %vm3769, %v3738
    %3779 = vst.msk [vmem:[%s91 + $0x48] sm:$0xff] %vm3769, %v3740
    %3780 = vst.msk [vmem:[%s91 + $0x50] sm:$0xff] %vm3769, %v3742
    %3781 = vst.msk [vmem:[%s91 + $0x58] sm:$0xff] %vm3769, %v3744
    %3782 = vst.msk [vmem:[%s91 + $0x60] sm:$0xff] %vm3769, %v3746
    %3783 = vst.msk [vmem:[%s91 + $0x68] sm:$0xff] %vm3769, %v3748
    %3784 = vst.msk [vmem:[%s91 + $0x70] sm:$0xff] %vm3769, %v3750
    %3785 = vst.msk [vmem:[%s91 + $0x78] sm:$0xff] %vm3769, %v3752
    %3786 = vrot.lane.b32.xlu0 %v3559, 18
    %v3787 = vpop.permute.xlu0 %3786
    %3788 = vrot.lane.b32.xlu0 %v3560, 18
    %v3789 = vpop.permute.xlu0 %3788
    %3790 = vrot.lane.b32.xlu0 %v3561, 18
    %v3791 = vpop.permute.xlu0 %3790
    %3792 = vrot.lane.b32.xlu0 %v3562, 18
    %v3793 = vpop.permute.xlu0 %3792
    %3794 = vrot.lane.b32.xlu0 %v3563, 18
    %v3795 = vpop.permute.xlu0 %3794
    %3796 = vrot.lane.b32.xlu0 %v3564, 18
    %v3797 = vpop.permute.xlu0 %3796
    %3798 = vrot.lane.b32.xlu0 %v3565, 18
    %v3799 = vpop.permute.xlu0 %3798
    %3800 = vrot.lane.b32.xlu0 %v3566, 18
    %v3801 = vpop.permute.xlu0 %3800
    %3802 = vrot.lane.b32.xlu0 %v3567, 18
    %v3803 = vpop.permute.xlu0 %3802
    %3804 = vrot.lane.b32.xlu0 %v3568, 18
    %v3805 = vpop.permute.xlu0 %3804
    %3806 = vrot.lane.b32.xlu0 %v3569, 18
    %v3807 = vpop.permute.xlu0 %3806
    %3808 = vrot.lane.b32.xlu0 %v3570, 18
    %v3809 = vpop.permute.xlu0 %3808
    %3810 = vrot.lane.b32.xlu0 %v3571, 18
    %v3811 = vpop.permute.xlu0 %3810
    %3812 = vrot.lane.b32.xlu0 %v3572, 18
    %v3813 = vpop.permute.xlu0 %3812
    %3814 = vrot.lane.b32.xlu0 %v3573, 18
    %v3815 = vpop.permute.xlu0 %3814
    %3816 = vrot.lane.b32.xlu0 %v3574, 18
    %v3817 = vpop.permute.xlu0 %3816
    %vm3834 = vcmask 195752
    %3835 = vst.msk [vmem:[%s91] sm:$0xff] %vm3834, %v3787
    %3836 = vst.msk [vmem:[%s91 + $0x8] sm:$0xff] %vm3834, %v3789
    %3837 = vst.msk [vmem:[%s91 + $0x10] sm:$0xff] %vm3834, %v3791
    %3838 = vst.msk [vmem:[%s91 + $0x18] sm:$0xff] %vm3834, %v3793
    %3839 = vst.msk [vmem:[%s91 + $0x20] sm:$0xff] %vm3834, %v3795
    %3840 = vst.msk [vmem:[%s91 + $0x28] sm:$0xff] %vm3834, %v3797
    %3841 = vst.msk [vmem:[%s91 + $0x30] sm:$0xff] %vm3834, %v3799
    %3842 = vst.msk [vmem:[%s91 + $0x38] sm:$0xff] %vm3834, %v3801
    %3843 = vst.msk [vmem:[%s91 + $0x40] sm:$0xff] %vm3834, %v3803
    %3844 = vst.msk [vmem:[%s91 + $0x48] sm:$0xff] %vm3834, %v3805
    %3845 = vst.msk [vmem:[%s91 + $0x50] sm:$0xff] %vm3834, %v3807
    %3846 = vst.msk [vmem:[%s91 + $0x58] sm:$0xff] %vm3834, %v3809
    %3847 = vst.msk [vmem:[%s91 + $0x60] sm:$0xff] %vm3834, %v3811
    %3848 = vst.msk [vmem:[%s91 + $0x68] sm:$0xff] %vm3834, %v3813
    %3849 = vst.msk [vmem:[%s91 + $0x70] sm:$0xff] %vm3834, %v3815
    %3850 = vst.msk [vmem:[%s91 + $0x78] sm:$0xff] %vm3834, %v3817
    %v3851 = vadd.f32 %v1292, %v2893
    %v3852 = vadd.f32 %v1294, %v2895
    %v3853 = vadd.f32 %v1297, %v2898
    %v3854 = vadd.f32 %v1299, %v2900
    %v3855 = vadd.f32 %v1302, %v2903
    %v3856 = vadd.f32 %v1304, %v2905
    %v3857 = vadd.f32 %v1307, %v2908
    %v3858 = vadd.f32 %v1309, %v2910
    %v3859 = vadd.f32 %v1312, %v2913
    %v3860 = vadd.f32 %v1314, %v2915
    %v3861 = vadd.f32 %v1317, %v2918
    %v3862 = vadd.f32 %v1319, %v2920
    %v3863 = vadd.f32 %v1322, %v2923
    %v3864 = vadd.f32 %v1324, %v2925
    %v3865 = vadd.f32 %v1327, %v2928
    %v3866 = vadd.f32 %v1329, %v2930
    %3883 = vrot.lane.b32.xlu0 %v3851, 24
    %v3884 = vpop.permute.xlu0 %3883
    %3885 = vrot.lane.b32.xlu0 %v3852, 24
    %v3886 = vpop.permute.xlu0 %3885
    %3887 = vrot.lane.b32.xlu0 %v3853, 24
    %v3888 = vpop.permute.xlu0 %3887
    %3889 = vrot.lane.b32.xlu0 %v3854, 24
    %v3890 = vpop.permute.xlu0 %3889
    %3891 = vrot.lane.b32.xlu0 %v3855, 24
    %v3892 = vpop.permute.xlu0 %3891
    %3893 = vrot.lane.b32.xlu0 %v3856, 24
    %v3894 = vpop.permute.xlu0 %3893
    %3895 = vrot.lane.b32.xlu0 %v3857, 24
    %v3896 = vpop.permute.xlu0 %3895
    %3897 = vrot.lane.b32.xlu0 %v3858, 24
    %v3898 = vpop.permute.xlu0 %3897
    %3899 = vrot.lane.b32.xlu0 %v3859, 24
    %v3900 = vpop.permute.xlu0 %3899
    %3901 = vrot.lane.b32.xlu0 %v3860, 24
    %v3902 = vpop.permute.xlu0 %3901
    %3903 = vrot.lane.b32.xlu0 %v3861, 24
    %v3904 = vpop.permute.xlu0 %3903
    %3905 = vrot.lane.b32.xlu0 %v3862, 24
    %v3906 = vpop.permute.xlu0 %3905
    %3907 = vrot.lane.b32.xlu0 %v3863, 24
    %v3908 = vpop.permute.xlu0 %3907
    %3909 = vrot.lane.b32.xlu0 %v3864, 24
    %v3910 = vpop.permute.xlu0 %3909
    %3911 = vrot.lane.b32.xlu0 %v3865, 24
    %v3912 = vpop.permute.xlu0 %3911
    %3913 = vrot.lane.b32.xlu0 %v3866, 24
    %v3914 = vpop.permute.xlu0 %3913
    %vm3931 = vcmask 220352
    %3932 = vst.msk [vmem:[%s91] sm:$0xff] %vm3931, %v3884
    %3933 = vst.msk [vmem:[%s91 + $0x8] sm:$0xff] %vm3931, %v3886
    %3934 = vst.msk [vmem:[%s91 + $0x10] sm:$0xff] %vm3931, %v3888
    %3935 = vst.msk [vmem:[%s91 + $0x18] sm:$0xff] %vm3931, %v3890
    %3936 = vst.msk [vmem:[%s91 + $0x20] sm:$0xff] %vm3931, %v3892
    %3937 = vst.msk [vmem:[%s91 + $0x28] sm:$0xff] %vm3931, %v3894
    %3938 = vst.msk [vmem:[%s91 + $0x30] sm:$0xff] %vm3931, %v3896
    %3939 = vst.msk [vmem:[%s91 + $0x38] sm:$0xff] %vm3931, %v3898
    %3940 = vst.msk [vmem:[%s91 + $0x40] sm:$0xff] %vm3931, %v3900
    %3941 = vst.msk [vmem:[%s91 + $0x48] sm:$0xff] %vm3931, %v3902
    %3942 = vst.msk [vmem:[%s91 + $0x50] sm:$0xff] %vm3931, %v3904
    %3943 = vst.msk [vmem:[%s91 + $0x58] sm:$0xff] %vm3931, %v3906
    %3944 = vst.msk [vmem:[%s91 + $0x60] sm:$0xff] %vm3931, %v3908
    %3945 = vst.msk [vmem:[%s91 + $0x68] sm:$0xff] %vm3931, %v3910
    %3946 = vst.msk [vmem:[%s91 + $0x70] sm:$0xff] %vm3931, %v3912
    %3947 = vst.msk [vmem:[%s91 + $0x78] sm:$0xff] %vm3931, %v3914
    %vm3948 = vcmask 244952
    %3949 = vst.msk [vmem:[%s91] sm:$0xff] %vm3948, %v3884
    %3950 = vst.msk [vmem:[%s91 + $0x8] sm:$0xff] %vm3948, %v3886
    %3951 = vst.msk [vmem:[%s91 + $0x10] sm:$0xff] %vm3948, %v3888
    %3952 = vst.msk [vmem:[%s91 + $0x18] sm:$0xff] %vm3948, %v3890
    %3953 = vst.msk [vmem:[%s91 + $0x20] sm:$0xff] %vm3948, %v3892
    %3954 = vst.msk [vmem:[%s91 + $0x28] sm:$0xff] %vm3948, %v3894
    %3955 = vst.msk [vmem:[%s91 + $0x30] sm:$0xff] %vm3948, %v3896
    %3956 = vst.msk [vmem:[%s91 + $0x38] sm:$0xff] %vm3948, %v3898
    %3957 = vst.msk [vmem:[%s91 + $0x40] sm:$0xff] %vm3948, %v3900
    %3958 = vst.msk [vmem:[%s91 + $0x48] sm:$0xff] %vm3948, %v3902
    %3959 = vst.msk [vmem:[%s91 + $0x50] sm:$0xff] %vm3948, %v3904
    %3960 = vst.msk [vmem:[%s91 + $0x58] sm:$0xff] %vm3948, %v3906
    %3961 = vst.msk [vmem:[%s91 + $0x60] sm:$0xff] %vm3948, %v3908
    %3962 = vst.msk [vmem:[%s91 + $0x68] sm:$0xff] %vm3948, %v3910
    %3963 = vst.msk [vmem:[%s91 + $0x70] sm:$0xff] %vm3948, %v3912
    %3964 = vst.msk [vmem:[%s91 + $0x78] sm:$0xff] %vm3948, %v3914
    %v3965 = vadd.f32 %v3851, %v498
    %v3966 = vadd.f32 %v3852, %v499
    %v3967 = vadd.f32 %v3853, %v500
    %v3968 = vadd.f32 %v3854, %v501
    %v3969 = vadd.f32 %v3855, %v502
    %v3970 = vadd.f32 %v3856, %v503
    %v3971 = vadd.f32 %v3857, %v504
    %v3972 = vadd.f32 %v3858, %v505
    %v3973 = vadd.f32 %v3859, %v506
    %v3974 = vadd.f32 %v3860, %v507
    %v3975 = vadd.f32 %v3861, %v508
    %v3976 = vadd.f32 %v3862, %v509
    %v3977 = vadd.f32 %v3863, %v510
    %v3978 = vadd.f32 %v3864, %v511
    %v3979 = vadd.f32 %v3865, %v512
    %v3980 = vadd.f32 %v3866, %v513
    %v3981 = vpack.c.bf16 %v3966, %v3965
    %v3982 = vpack.c.bf16 %v3968, %v3967
    %v3983 = vpack.c.bf16 %v3970, %v3969
    %v3984 = vpack.c.bf16 %v3972, %v3971
    %v3985 = vpack.c.bf16 %v3974, %v3973
    %v3986 = vpack.c.bf16 %v3976, %v3975
    %v3987 = vpack.c.bf16 %v3978, %v3977
    %v3988 = vpack.c.bf16 %v3980, %v3979
    %v3989 = vld [vmem:[#allocation27] sm:$0x7]
    %v3990 = vpack.c.bf16 %v3989, %v3989
    %4007 = vrot.lane.b32.xlu0 %v498, 3
    %v4008 = vpop.permute.xlu0 %4007
    %4009 = vrot.lane.b32.xlu0 %v499, 3
    %v4010 = vpop.permute.xlu0 %4009
    %4011 = vrot.lane.b32.xlu0 %v500, 3
    %v4012 = vpop.permute.xlu0 %4011
    %4013 = vrot.lane.b32.xlu0 %v501, 3
    %v4014 = vpop.permute.xlu0 %4013
    %4015 = vrot.lane.b32.xlu0 %v502, 3
    %v4016 = vpop.permute.xlu0 %4015
    %4017 = vrot.lane.b32.xlu0 %v503, 3
    %v4018 = vpop.permute.xlu0 %4017
    %4019 = vrot.lane.b32.xlu0 %v504, 3
    %v4020 = vpop.permute.xlu0 %4019
    %4021 = vrot.lane.b32.xlu0 %v505, 3
    %v4022 = vpop.permute.xlu0 %4021
    %4023 = vrot.lane.b32.xlu0 %v506, 3
    %v4024 = vpop.permute.xlu0 %4023
    %4025 = vrot.lane.b32.xlu0 %v507, 3
    %v4026 = vpop.permute.xlu0 %4025
    %4027 = vrot.lane.b32.xlu0 %v508, 3
    %v4028 = vpop.permute.xlu0 %4027
    %4029 = vrot.lane.b32.xlu0 %v509, 3
    %v4030 = vpop.permute.xlu0 %4029
    %4031 = vrot.lane.b32.xlu0 %v510, 3
    %v4032 = vpop.permute.xlu0 %4031
    %4033 = vrot.lane.b32.xlu0 %v511, 3
    %v4034 = vpop.permute.xlu0 %4033
    %4035 = vrot.lane.b32.xlu0 %v512, 3
    %v4036 = vpop.permute.xlu0 %4035
    %4037 = vrot.lane.b32.xlu0 %v513, 3
    %v4038 = vpop.permute.xlu0 %4037
    %v4055 = vadd.f32 %v3851, %v4008
    %v4056 = vadd.f32 %v3852, %v4010
    %v4057 = vadd.f32 %v3853, %v4012
    %v4058 = vadd.f32 %v3854, %v4014
    %v4059 = vadd.f32 %v3855, %v4016
    %v4060 = vadd.f32 %v3856, %v4018
    %v4061 = vadd.f32 %v3857, %v4020
    %v4062 = vadd.f32 %v3858, %v4022
    %v4063 = vadd.f32 %v3859, %v4024
    %v4064 = vadd.f32 %v3860, %v4026
    %v4065 = vadd.f32 %v3861, %v4028
    %v4066 = vadd.f32 %v3862, %v4030
    %v4067 = vadd.f32 %v3863, %v4032
    %v4068 = vadd.f32 %v3864, %v4034
    %v4069 = vadd.f32 %v3865, %v4036
    %v4070 = vadd.f32 %v3866, %v4038
    %v4071 = vpack.c.bf16 %v4056, %v4055
    %v4072 = vpack.c.bf16 %v4058, %v4057
    %v4073 = vpack.c.bf16 %v4060, %v4059
    %v4074 = vpack.c.bf16 %v4062, %v4061
    %v4075 = vpack.c.bf16 %v4064, %v4063
    %v4076 = vpack.c.bf16 %v4066, %v4065
    %v4077 = vpack.c.bf16 %v4068, %v4067
    %v4078 = vpack.c.bf16 %v4070, %v4069
    %v4079 = vld [vmem:[#allocation28] sm:$0x7]
    %v4080 = vpack.c.bf16 %v4079, %v4079
    %4089 = vrot.lane.b32.xlu0 %v4071, 125
    %v4090 = vpop.permute.xlu0 %4089
    %4091 = vrot.lane.b32.xlu0 %v4072, 125
    %v4092 = vpop.permute.xlu0 %4091
    %4093 = vrot.lane.b32.xlu0 %v4073, 125
    %v4094 = vpop.permute.xlu0 %4093
    %4095 = vrot.lane.b32.xlu0 %v4074, 125
    %v4096 = vpop.permute.xlu0 %4095
    %4097 = vrot.lane.b32.xlu0 %v4075, 125
    %v4098 = vpop.permute.xlu0 %4097
    %4099 = vrot.lane.b32.xlu0 %v4076, 125
    %v4100 = vpop.permute.xlu0 %4099
    %4101 = vrot.lane.b32.xlu0 %v4077, 125
    %v4102 = vpop.permute.xlu0 %4101
    %4103 = vrot.lane.b32.xlu0 %v4078, 125
    %v4104 = vpop.permute.xlu0 %4103
    %v4106 = vsel %vm885, %v4090, 0
    %v4109 = vsel %vm885, %v4092, 0
    %v4112 = vsel %vm885, %v4094, 0
    %v4115 = vsel %vm885, %v4096, 0
    %v4118 = vsel %vm885, %v4098, 0
    %v4121 = vsel %vm885, %v4100, 0
    %v4124 = vsel %vm885, %v4102, 0
    %v4127 = vsel %vm885, %v4104, 0
    %v4130 = vand.u32 %v4080, %v913
    %4132 = vmatpush.bf16.msra.mxu0 0
    %4133 = vmatpush.bf16.msra.mxu0 0
    %4134 = vmatpush.bf16.msra.mxu0 0
    %4135 = vmatpush.bf16.msra.mxu0 0
    %4136 = vmatpush.bf16.msra.mxu0 0
    %4137 = vmatpush.bf16.msra.mxu0 0
    %4138 = vmatpush.bf16.msra.mxu0 0
    %4139 = vmatpush.bf16.msra.mxu0 %v4130
    %4140 = vmatmul.bf16.gmra.mxu0 %v4106
    %v4141 = vpop.f32.mrf.mxu0
    %v4142 = vadd.f32 0.0, %v4141
    %v4143 = vpop.f32.mrf.mxu0
    %v4144 = vadd.f32 0.0, %v4143
    %4145 = vmatmul.bf16.gmra.mxu0 %v4109
    %v4146 = vpop.f32.mrf.mxu0
    %v4147 = vadd.f32 0.0, %v4146
    %v4148 = vpop.f32.mrf.mxu0
    %v4149 = vadd.f32 0.0, %v4148
    %4150 = vmatmul.bf16.gmra.mxu0 %v4112
    %v4151 = vpop.f32.mrf.mxu0
    %v4152 = vadd.f32 0.0, %v4151
    %v4153 = vpop.f32.mrf.mxu0
    %v4154 = vadd.f32 0.0, %v4153
    %4155 = vmatmul.bf16.gmra.mxu0 %v4115
    %v4156 = vpop.f32.mrf.mxu0
    %v4157 = vadd.f32 0.0, %v4156
    %v4158 = vpop.f32.mrf.mxu0
    %v4159 = vadd.f32 0.0, %v4158
    %4160 = vmatmul.bf16.gmra.mxu0 %v4118
    %v4161 = vpop.f32.mrf.mxu0
    %v4162 = vadd.f32 0.0, %v4161
    %v4163 = vpop.f32.mrf.mxu0
    %v4164 = vadd.f32 0.0, %v4163
    %4165 = vmatmul.bf16.gmra.mxu0 %v4121
    %v4166 = vpop.f32.mrf.mxu0
    %v4167 = vadd.f32 0.0, %v4166
    %v4168 = vpop.f32.mrf.mxu0
    %v4169 = vadd.f32 0.0, %v4168
    %4170 = vmatmul.bf16.gmra.mxu0 %v4124
    %v4171 = vpop.f32.mrf.mxu0
    %v4172 = vadd.f32 0.0, %v4171
    %v4173 = vpop.f32.mrf.mxu0
    %v4174 = vadd.f32 0.0, %v4173
    %4175 = vmatmul.bf16.gmra.mxu0 %v4127
    %v4176 = vpop.f32.mrf.mxu0
    %v4177 = vadd.f32 0.0, %v4176
    %v4178 = vpop.f32.mrf.mxu0
    %v4179 = vadd.f32 0.0, %v4178
    %4180 = vdwg.mxu0
    %v4182 = vsel %vm885, %v3981, 0
    %v4185 = vsel %vm885, %v3982, 0
    %v4188 = vsel %vm885, %v3983, 0
    %v4191 = vsel %vm885, %v3984, 0
    %v4194 = vsel %vm885, %v3985, 0
    %v4197 = vsel %vm885, %v3986, 0
    %v4200 = vsel %vm885, %v3987, 0
    %v4203 = vsel %vm885, %v3988, 0
    %v4206 = vand.u32 %v3990, %v913
    %4208 = vmatpush.bf16.msra.mxu0 0
    %4209 = vmatpush.bf16.msra.mxu0 0
    %4210 = vmatpush.bf16.msra.mxu0 0
    %4211 = vmatpush.bf16.msra.mxu0 0
    %4212 = vmatpush.bf16.msra.mxu0 0
    %4213 = vmatpush.bf16.msra.mxu0 0
    %4214 = vmatpush.bf16.msra.mxu0 0
    %4215 = vmatpush.bf16.msra.mxu0 %v4206
    %4216 = vmatmul.bf16.gmra.mxu0 %v4182
    %v4217 = vpop.f32.mrf.mxu0
    %v4218 = vadd.f32 %v4142, %v4217
    %v4219 = vpop.f32.mrf.mxu0
    %v4220 = vadd.f32 %v4144, %v4219
    %4221 = vmatmul.bf16.gmra.mxu0 %v4185
    %v4222 = vpop.f32.mrf.mxu0
    %v4223 = vadd.f32 %v4147, %v4222
    %v4224 = vpop.f32.mrf.mxu0
    %v4225 = vadd.f32 %v4149, %v4224
    %4226 = vmatmul.bf16.gmra.mxu0 %v4188
    %v4227 = vpop.f32.mrf.mxu0
    %v4228 = vadd.f32 %v4152, %v4227
    %v4229 = vpop.f32.mrf.mxu0
    %v4230 = vadd.f32 %v4154, %v4229
    %4231 = vmatmul.bf16.gmra.mxu0 %v4191
    %v4232 = vpop.f32.mrf.mxu0
    %v4233 = vadd.f32 %v4157, %v4232
    %v4234 = vpop.f32.mrf.mxu0
    %v4235 = vadd.f32 %v4159, %v4234
    %4236 = vmatmul.bf16.gmra.mxu0 %v4194
    %v4237 = vpop.f32.mrf.mxu0
    %v4238 = vadd.f32 %v4162, %v4237
    %v4239 = vpop.f32.mrf.mxu0
    %v4240 = vadd.f32 %v4164, %v4239
    %4241 = vmatmul.bf16.gmra.mxu0 %v4197
    %v4242 = vpop.f32.mrf.mxu0
    %v4243 = vadd.f32 %v4167, %v4242
    %v4244 = vpop.f32.mrf.mxu0
    %v4245 = vadd.f32 %v4169, %v4244
    %4246 = vmatmul.bf16.gmra.mxu0 %v4200
    %v4247 = vpop.f32.mrf.mxu0
    %v4248 = vadd.f32 %v4172, %v4247
    %v4249 = vpop.f32.mrf.mxu0
    %v4250 = vadd.f32 %v4174, %v4249
    %4251 = vmatmul.bf16.gmra.mxu0 %v4203
    %v4252 = vpop.f32.mrf.mxu0
    %v4253 = vadd.f32 %v4177, %v4252
    %v4254 = vpop.f32.mrf.mxu0
    %v4255 = vadd.f32 %v4179, %v4254
    %4256 = vdwg.mxu0
    %v4257 = vld [vmem:[#allocation30] sm:$0x7]
    %v4258 = vpack.c.bf16 %v4257, %v4257
    %v4260 = vand.u32 %v4258, %v913
    %4262 = vmatpush.bf16.msra.mxu0 0
    %4263 = vmatpush.bf16.msra.mxu0 0
    %4264 = vmatpush.bf16.msra.mxu0 0
    %4265 = vmatpush.bf16.msra.mxu0 0
    %4266 = vmatpush.bf16.msra.mxu0 0
    %4267 = vmatpush.bf16.msra.mxu0 0
    %4268 = vmatpush.bf16.msra.mxu0 0
    %4269 = vmatpush.bf16.msra.mxu0 %v4260
    %4270 = vmatmul.bf16.gmra.mxu0 %v887
    %v4271 = vpop.f32.mrf.mxu0
    %v4272 = vadd.f32 0.0, %v4271
    %v4273 = vpop.f32.mrf.mxu0
    %v4274 = vadd.f32 0.0, %v4273
    %4275 = vmatmul.bf16.gmra.mxu0 %v890
    %v4276 = vpop.f32.mrf.mxu0
    %v4277 = vadd.f32 0.0, %v4276
    %v4278 = vpop.f32.mrf.mxu0
    %v4279 = vadd.f32 0.0, %v4278
    %4280 = vmatmul.bf16.gmra.mxu0 %v893
    %v4281 = vpop.f32.mrf.mxu0
    %v4282 = vadd.f32 0.0, %v4281
    %v4283 = vpop.f32.mrf.mxu0
    %v4284 = vadd.f32 0.0, %v4283
    %4285 = vmatmul.bf16.gmra.mxu0 %v896
    %v4286 = vpop.f32.mrf.mxu0
    %v4287 = vadd.f32 0.0, %v4286
    %v4288 = vpop.f32.mrf.mxu0
    %v4289 = vadd.f32 0.0, %v4288
    %4290 = vmatmul.bf16.gmra.mxu0 %v899
    %v4291 = vpop.f32.mrf.mxu0
    %v4292 = vadd.f32 0.0, %v4291
    %v4293 = vpop.f32.mrf.mxu0
    %v4294 = vadd.f32 0.0, %v4293
    %4295 = vmatmul.bf16.gmra.mxu0 %v902
    %v4296 = vpop.f32.mrf.mxu0
    %v4297 = vadd.f32 0.0, %v4296
    %v4298 = vpop.f32.mrf.mxu0
    %v4299 = vadd.f32 0.0, %v4298
    %4300 = vmatmul.bf16.gmra.mxu0 %v905
    %v4301 = vpop.f32.mrf.mxu0
    %v4302 = vadd.f32 0.0, %v4301
    %v4303 = vpop.f32.mrf.mxu0
    %v4304 = vadd.f32 0.0, %v4303
    %4305 = vmatmul.bf16.gmra.mxu0 %v908
    %v4306 = vpop.f32.mrf.mxu0
    %v4307 = vadd.f32 0.0, %v4306
    %v4308 = vpop.f32.mrf.mxu0
    %v4309 = vadd.f32 0.0, %v4308
    %4310 = vdwg.mxu0
    %v4311 = vadd.f32 %v4218, %v4272
    %v4312 = vadd.f32 %v4220, %v4274
    %v4313 = vadd.f32 %v4223, %v4277
    %v4314 = vadd.f32 %v4225, %v4279
    %v4315 = vadd.f32 %v4228, %v4282
    %v4316 = vadd.f32 %v4230, %v4284
    %v4317 = vadd.f32 %v4233, %v4287
    %v4318 = vadd.f32 %v4235, %v4289
    %v4319 = vadd.f32 %v4238, %v4292
    %v4320 = vadd.f32 %v4240, %v4294
    %v4321 = vadd.f32 %v4243, %v4297
    %v4322 = vadd.f32 %v4245, %v4299
    %v4323 = vadd.f32 %v4248, %v4302
    %v4324 = vadd.f32 %v4250, %v4304
    %v4325 = vadd.f32 %v4253, %v4307
    %v4326 = vadd.f32 %v4255, %v4309
    %v4327 = vld [vmem:[#allocation31] sm:$0x1]
    %v4329 = vperm.slane %v4327, 0
    %v4331 = vadd.f32 %v4311, %v4329
    %v4332 = vadd.f32 %v4312, %v4329
    %v4333 = vadd.f32 %v4313, %v4329
    %v4334 = vadd.f32 %v4314, %v4329
    %v4335 = vadd.f32 %v4315, %v4329
    %v4336 = vadd.f32 %v4316, %v4329
    %v4337 = vadd.f32 %v4317, %v4329
    %v4338 = vadd.f32 %v4318, %v4329
    %v4339 = vadd.f32 %v4319, %v4329
    %v4340 = vadd.f32 %v4320, %v4329
    %v4341 = vadd.f32 %v4321, %v4329
    %v4342 = vadd.f32 %v4322, %v4329
    %v4343 = vadd.f32 %v4323, %v4329
    %v4344 = vadd.f32 %v4324, %v4329
    %v4345 = vadd.f32 %v4325, %v4329
    %v4346 = vadd.f32 %v4326, %v4329
    %v4347 = vmax.f32 %v4331, 0.0
    %v4348 = vmax.f32 %v4332, 0.0
    %v4349 = vmax.f32 %v4333, 0.0
    %v4350 = vmax.f32 %v4334, 0.0
    %v4351 = vmax.f32 %v4335, 0.0
    %v4352 = vmax.f32 %v4336, 0.0
    %v4353 = vmax.f32 %v4337, 0.0
    %v4354 = vmax.f32 %v4338, 0.0
    %v4355 = vmax.f32 %v4339, 0.0
    %v4356 = vmax.f32 %v4340, 0.0
    %v4357 = vmax.f32 %v4341, 0.0
    %v4358 = vmax.f32 %v4342, 0.0
    %v4359 = vmax.f32 %v4343, 0.0
    %v4360 = vmax.f32 %v4344, 0.0
    %v4361 = vmax.f32 %v4345, 0.0
    %v4362 = vmax.f32 %v4346, 0.0
    %v4363 = vpack.c.bf16 %v4348, %v4347
    %v4364 = vpack.c.bf16 %v4350, %v4349
    %v4365 = vpack.c.bf16 %v4352, %v4351
    %v4366 = vpack.c.bf16 %v4354, %v4353
    %v4367 = vpack.c.bf16 %v4356, %v4355
    %v4368 = vpack.c.bf16 %v4358, %v4357
    %v4369 = vpack.c.bf16 %v4360, %v4359
    %v4370 = vpack.c.bf16 %v4362, %v4361
    %v4371 = vld [vmem:[%s79] sm:$0xff]
    %v4372 = vld [vmem:[%s79 + $0x8] sm:$0xff]
    %v4373 = vld [vmem:[%s79 + $0x10] sm:$0xff]
    %v4374 = vld [vmem:[%s79 + $0x18] sm:$0xff]
    %v4375 = vld [vmem:[%s79 + $0x20] sm:$0xff]
    %v4376 = vld [vmem:[%s79 + $0x28] sm:$0xff]
    %v4377 = vld [vmem:[%s79 + $0x30] sm:$0xff]
    %v4378 = vld [vmem:[%s79 + $0x38] sm:$0xff]
    %v4379 = vld [vmem:[%s79 + $0x40] sm:$0xff]
    %v4380 = vld [vmem:[%s79 + $0x48] sm:$0xff]
    %v4381 = vld [vmem:[%s79 + $0x50] sm:$0xff]
    %v4382 = vld [vmem:[%s79 + $0x58] sm:$0xff]
    %v4383 = vpack.c.bf16 %v4372, %v4371
    %v4384 = vpack.c.bf16 %v4374, %v4373
    %v4385 = vpack.c.bf16 %v4376, %v4375
    %v4386 = vpack.c.bf16 %v4378, %v4377
    %v4387 = vpack.c.bf16 %v4380, %v4379
    %v4388 = vpack.c.bf16 %v4382, %v4381
    %v4389 = vld [vmem:[#allocation33] sm:$0x1]
    %v4391 = vperm.slane %v4389, 0
    %vm4393 = vcmask 785408
    %v4395 = vsel %vm4393, %v4363, 0
    %v4398 = vsel %vm4393, %v4364, 0
    %v4401 = vsel %vm4393, %v4365, 0
    %v4404 = vsel %vm4393, %v4366, 0
    %v4407 = vsel %vm4393, %v4367, 0
    %v4410 = vsel %vm4393, %v4368, 0
    %v4413 = vsel %vm4393, %v4369, 0
    %v4416 = vsel %vm4393, %v4370, 0
    %4418 = vmatpush.bf16.msra.mxu0 0
    %4419 = vmatpush.bf16.msra.mxu0 0
    %4420 = vmatpush.bf16.msra.mxu0 %v4388
    %4421 = vmatpush.bf16.msra.mxu0 %v4387
    %4422 = vmatpush.bf16.msra.mxu0 %v4386
    %4423 = vmatpush.bf16.msra.mxu0 %v4385
    %4424 = vmatpush.bf16.msra.mxu0 %v4384
    %4425 = vmatpush.bf16.msra.mxu0 %v4383
    %4426 = vmatmul.bf16.gmra.mxu0 %v4395
    %v4427 = vpop.f32.mrf.mxu0
    %v4428 = vadd.f32 %v4391, %v4427
    %v4429 = vpop.f32.mrf.mxu0
    %v4430 = vadd.f32 %v4391, %v4429
    %4431 = vmatmul.bf16.gmra.mxu0 %v4398
    %v4432 = vpop.f32.mrf.mxu0
    %v4433 = vadd.f32 %v4391, %v4432
    %v4434 = vpop.f32.mrf.mxu0
    %v4435 = vadd.f32 %v4391, %v4434
    %4436 = vmatmul.bf16.gmra.mxu0 %v4401
    %v4437 = vpop.f32.mrf.mxu0
    %v4438 = vadd.f32 %v4391, %v4437
    %v4439 = vpop.f32.mrf.mxu0
    %v4440 = vadd.f32 %v4391, %v4439
    %4441 = vmatmul.bf16.gmra.mxu0 %v4404
    %v4442 = vpop.f32.mrf.mxu0
    %v4443 = vadd.f32 %v4391, %v4442
    %v4444 = vpop.f32.mrf.mxu0
    %v4445 = vadd.f32 %v4391, %v4444
    %4446 = vmatmul.bf16.gmra.mxu0 %v4407
    %v4447 = vpop.f32.mrf.mxu0
    %v4448 = vadd.f32 %v4391, %v4447
    %v4449 = vpop.f32.mrf.mxu0
    %v4450 = vadd.f32 %v4391, %v4449
    %4451 = vmatmul.bf16.gmra.mxu0 %v4410
    %v4452 = vpop.f32.mrf.mxu0
    %v4453 = vadd.f32 %v4391, %v4452
    %v4454 = vpop.f32.mrf.mxu0
    %v4455 = vadd.f32 %v4391, %v4454
    %4456 = vmatmul.bf16.gmra.mxu0 %v4413
    %v4457 = vpop.f32.mrf.mxu0
    %v4458 = vadd.f32 %v4391, %v4457
    %v4459 = vpop.f32.mrf.mxu0
    %v4460 = vadd.f32 %v4391, %v4459
    %4461 = vmatmul.bf16.gmra.mxu0 %v4416
    %v4462 = vpop.f32.mrf.mxu0
    %v4463 = vadd.f32 %v4391, %v4462
    %v4464 = vpop.f32.mrf.mxu0
    %v4465 = vadd.f32 %v4391, %v4464
    %4466 = vdwg.mxu0
    %v4467 = vmax.f32 %v4428, 0.0
    %v4468 = vmax.f32 %v4430, 0.0
    %v4469 = vmax.f32 %v4433, 0.0
    %v4470 = vmax.f32 %v4435, 0.0
    %v4471 = vmax.f32 %v4438, 0.0
    %v4472 = vmax.f32 %v4440, 0.0
    %v4473 = vmax.f32 %v4443, 0.0
    %v4474 = vmax.f32 %v4445, 0.0
    %v4475 = vmax.f32 %v4448, 0.0
    %v4476 = vmax.f32 %v4450, 0.0
    %v4477 = vmax.f32 %v4453, 0.0
    %v4478 = vmax.f32 %v4455, 0.0
    %v4479 = vmax.f32 %v4458, 0.0
    %v4480 = vmax.f32 %v4460, 0.0
    %v4481 = vmax.f32 %v4463, 0.0
    %v4482 = vmax.f32 %v4465, 0.0
    %v4483 = vpack.c.bf16 %v4468, %v4467
    %v4484 = vpack.c.bf16 %v4470, %v4469
    %v4485 = vpack.c.bf16 %v4472, %v4471
    %v4486 = vpack.c.bf16 %v4474, %v4473
    %v4487 = vpack.c.bf16 %v4476, %v4475
    %v4488 = vpack.c.bf16 %v4478, %v4477
    %v4489 = vpack.c.bf16 %v4480, %v4479
    %v4490 = vpack.c.bf16 %v4482, %v4481
    %v4491 = vld [vmem:[%s83] sm:$0xff]
    %v4492 = vld [vmem:[%s83 + $0x8] sm:$0xff]
    %v4493 = vld [vmem:[%s83 + $0x10] sm:$0xff]
    %v4494 = vld [vmem:[%s83 + $0x18] sm:$0xff]
    %v4495 = vld [vmem:[%s83 + $0x20] sm:$0xff]
    %v4496 = vld [vmem:[%s83 + $0x28] sm:$0xff]
    %v4497 = vld [vmem:[%s83 + $0x30] sm:$0xff]
    %v4498 = vld [vmem:[%s83 + $0x38] sm:$0xff]
    %v4499 = vld [vmem:[%s83 + $0x40] sm:$0xff]
    %v4500 = vld [vmem:[%s83 + $0x48] sm:$0xff]
    %v4501 = vld [vmem:[%s83 + $0x50] sm:$0xff]
    %v4502 = vld [vmem:[%s83 + $0x58] sm:$0xff]
    %v4503 = vpack.c.bf16 %v4492, %v4491
    %v4504 = vpack.c.bf16 %v4494, %v4493
    %v4505 = vpack.c.bf16 %v4496, %v4495
    %v4506 = vpack.c.bf16 %v4498, %v4497
    %v4507 = vpack.c.bf16 %v4500, %v4499
    %v4508 = vpack.c.bf16 %v4502, %v4501
    %v4509 = vld [vmem:[#allocation34] sm:$0x1]
    %v4511 = vperm.slane %v4509, 0
    %v4514 = vsel %vm4393, %v4483, 0
    %v4517 = vsel %vm4393, %v4484, 0
    %v4520 = vsel %vm4393, %v4485, 0
    %v4523 = vsel %vm4393, %v4486, 0
    %v4526 = vsel %vm4393, %v4487, 0
    %v4529 = vsel %vm4393, %v4488, 0
    %v4532 = vsel %vm4393, %v4489, 0
    %v4535 = vsel %vm4393, %v4490, 0
    %4537 = vmatpush.bf16.msra.mxu0 0
    %4538 = vmatpush.bf16.msra.mxu0 0
    %4539 = vmatpush.bf16.msra.mxu0 %v4508
    %4540 = vmatpush.bf16.msra.mxu0 %v4507
    %4541 = vmatpush.bf16.msra.mxu0 %v4506
    %4542 = vmatpush.bf16.msra.mxu0 %v4505
    %4543 = vmatpush.bf16.msra.mxu0 %v4504
    %4544 = vmatpush.bf16.msra.mxu0 %v4503
    %4545 = vmatmul.bf16.gmra.mxu0 %v4514
    %v4546 = vpop.f32.mrf.mxu0
    %v4547 = vadd.f32 %v4511, %v4546
    %v4548 = vpop.f32.mrf.mxu0
    %v4549 = vadd.f32 %v4511, %v4548
    %4550 = vmatmul.bf16.gmra.mxu0 %v4517
    %v4551 = vpop.f32.mrf.mxu0
    %v4552 = vadd.f32 %v4511, %v4551
    %v4553 = vpop.f32.mrf.mxu0
    %v4554 = vadd.f32 %v4511, %v4553
    %4555 = vmatmul.bf16.gmra.mxu0 %v4520
    %v4556 = vpop.f32.mrf.mxu0
    %v4557 = vadd.f32 %v4511, %v4556
    %v4558 = vpop.f32.mrf.mxu0
    %v4559 = vadd.f32 %v4511, %v4558
    %4560 = vmatmul.bf16.gmra.mxu0 %v4523
    %v4561 = vpop.f32.mrf.mxu0
    %v4562 = vadd.f32 %v4511, %v4561
    %v4563 = vpop.f32.mrf.mxu0
    %v4564 = vadd.f32 %v4511, %v4563
    %4565 = vmatmul.bf16.gmra.mxu0 %v4526
    %v4566 = vpop.f32.mrf.mxu0
    %v4567 = vadd.f32 %v4511, %v4566
    %v4568 = vpop.f32.mrf.mxu0
    %v4569 = vadd.f32 %v4511, %v4568
    %4570 = vmatmul.bf16.gmra.mxu0 %v4529
    %v4571 = vpop.f32.mrf.mxu0
    %v4572 = vadd.f32 %v4511, %v4571
    %v4573 = vpop.f32.mrf.mxu0
    %v4574 = vadd.f32 %v4511, %v4573
    %4575 = vmatmul.bf16.gmra.mxu0 %v4532
    %v4576 = vpop.f32.mrf.mxu0
    %v4577 = vadd.f32 %v4511, %v4576
    %v4578 = vpop.f32.mrf.mxu0
    %v4579 = vadd.f32 %v4511, %v4578
    %4580 = vmatmul.bf16.gmra.mxu0 %v4535
    %v4581 = vpop.f32.mrf.mxu0
    %v4582 = vadd.f32 %v4511, %v4581
    %v4583 = vpop.f32.mrf.mxu0
    %v4584 = vadd.f32 %v4511, %v4583
    %4585 = vdwg.mxu0
    %v4586 = vmax.f32 %v4547, 0.0
    %v4587 = vmax.f32 %v4549, 0.0
    %v4588 = vmax.f32 %v4552, 0.0
    %v4589 = vmax.f32 %v4554, 0.0
    %v4590 = vmax.f32 %v4557, 0.0
    %v4591 = vmax.f32 %v4559, 0.0
    %v4592 = vmax.f32 %v4562, 0.0
    %v4593 = vmax.f32 %v4564, 0.0
    %v4594 = vmax.f32 %v4567, 0.0
    %v4595 = vmax.f32 %v4569, 0.0
    %v4596 = vmax.f32 %v4572, 0.0
    %v4597 = vmax.f32 %v4574, 0.0
    %v4598 = vmax.f32 %v4577, 0.0
    %v4599 = vmax.f32 %v4579, 0.0
    %v4600 = vmax.f32 %v4582, 0.0
    %v4601 = vmax.f32 %v4584, 0.0
    %v4602 = vpack.c.bf16 %v4587, %v4586
    %v4603 = vpack.c.bf16 %v4589, %v4588
    %v4604 = vpack.c.bf16 %v4591, %v4590
    %v4605 = vpack.c.bf16 %v4593, %v4592
    %v4606 = vpack.c.bf16 %v4595, %v4594
    %v4607 = vpack.c.bf16 %v4597, %v4596
    %v4608 = vpack.c.bf16 %v4599, %v4598
    %v4609 = vpack.c.bf16 %v4601, %v4600
    %v4610 = vld [vmem:[%s87] sm:$0xff]
    %v4611 = vld [vmem:[%s87 + $0x8] sm:$0xff]
    %v4612 = vld [vmem:[%s87 + $0x10] sm:$0xff]
    %v4613 = vld [vmem:[%s87 + $0x18] sm:$0xff]
    %v4614 = vld [vmem:[%s87 + $0x20] sm:$0xff]
    %v4615 = vld [vmem:[%s87 + $0x28] sm:$0xff]
    %v4616 = vld [vmem:[%s87 + $0x30] sm:$0xff]
    %v4617 = vld [vmem:[%s87 + $0x38] sm:$0xff]
    %v4618 = vld [vmem:[%s87 + $0x40] sm:$0xff]
    %v4619 = vld [vmem:[%s87 + $0x48] sm:$0xff]
    %v4620 = vld [vmem:[%s87 + $0x50] sm:$0xff]
    %v4621 = vld [vmem:[%s87 + $0x58] sm:$0xff]
    %v4622 = vpack.c.bf16 %v4611, %v4610
    %v4623 = vpack.c.bf16 %v4613, %v4612
    %v4624 = vpack.c.bf16 %v4615, %v4614
    %v4625 = vpack.c.bf16 %v4617, %v4616
    %v4626 = vpack.c.bf16 %v4619, %v4618
    %v4627 = vpack.c.bf16 %v4621, %v4620
    %v4628 = vld [vmem:[#allocation36] sm:$0x1]
    %v4630 = vperm.slane %v4628, 0
    %v4633 = vsel %vm4393, %v4602, 0
    %v4636 = vsel %vm4393, %v4603, 0
    %v4639 = vsel %vm4393, %v4604, 0
    %v4642 = vsel %vm4393, %v4605, 0
    %v4645 = vsel %vm4393, %v4606, 0
    %v4648 = vsel %vm4393, %v4607, 0
    %v4651 = vsel %vm4393, %v4608, 0
    %v4654 = vsel %vm4393, %v4609, 0
    %4656 = vmatpush.bf16.msra.mxu0 0
    %4657 = vmatpush.bf16.msra.mxu0 0
    %4658 = vmatpush.bf16.msra.mxu0 %v4627
    %4659 = vmatpush.bf16.msra.mxu0 %v4626
    %4660 = vmatpush.bf16.msra.mxu0 %v4625
    %4661 = vmatpush.bf16.msra.mxu0 %v4624
    %4662 = vmatpush.bf16.msra.mxu0 %v4623
    %4663 = vmatpush.bf16.msra.mxu0 %v4622
    %4664 = vmatmul.bf16.gmra.mxu0 %v4633
    %v4665 = vpop.f32.mrf.mxu0
    %v4666 = vadd.f32 %v4630, %v4665
    %v4667 = vpop.f32.mrf.mxu0
    %v4668 = vadd.f32 %v4630, %v4667
    %4669 = vmatmul.bf16.gmra.mxu0 %v4636
    %v4670 = vpop.f32.mrf.mxu0
    %v4671 = vadd.f32 %v4630, %v4670
    %v4672 = vpop.f32.mrf.mxu0
    %v4673 = vadd.f32 %v4630, %v4672
    %4674 = vmatmul.bf16.gmra.mxu0 %v4639
    %v4675 = vpop.f32.mrf.mxu0
    %v4676 = vadd.f32 %v4630, %v4675
    %v4677 = vpop.f32.mrf.mxu0
    %v4678 = vadd.f32 %v4630, %v4677
    %4679 = vmatmul.bf16.gmra.mxu0 %v4642
    %v4680 = vpop.f32.mrf.mxu0
    %v4681 = vadd.f32 %v4630, %v4680
    %v4682 = vpop.f32.mrf.mxu0
    %v4683 = vadd.f32 %v4630, %v4682
    %4684 = vmatmul.bf16.gmra.mxu0 %v4645
    %v4685 = vpop.f32.mrf.mxu0
    %v4686 = vadd.f32 %v4630, %v4685
    %v4687 = vpop.f32.mrf.mxu0
    %v4688 = vadd.f32 %v4630, %v4687
    %4689 = vmatmul.bf16.gmra.mxu0 %v4648
    %v4690 = vpop.f32.mrf.mxu0
    %v4691 = vadd.f32 %v4630, %v4690
    %v4692 = vpop.f32.mrf.mxu0
    %v4693 = vadd.f32 %v4630, %v4692
    %4694 = vmatmul.bf16.gmra.mxu0 %v4651
    %v4695 = vpop.f32.mrf.mxu0
    %v4696 = vadd.f32 %v4630, %v4695
    %v4697 = vpop.f32.mrf.mxu0
    %v4698 = vadd.f32 %v4630, %v4697
    %4699 = vmatmul.bf16.gmra.mxu0 %v4654
    %v4700 = vpop.f32.mrf.mxu0
    %v4701 = vadd.f32 %v4630, %v4700
    %v4702 = vpop.f32.mrf.mxu0
    %v4703 = vadd.f32 %v4630, %v4702
    %4704 = vdwg.mxu0
    %v4705 = vmax.f32 %v4666, 0.0
    %v4706 = vmax.f32 %v4668, 0.0
    %v4707 = vmax.f32 %v4671, 0.0
    %v4708 = vmax.f32 %v4673, 0.0
    %v4709 = vmax.f32 %v4676, 0.0
    %v4710 = vmax.f32 %v4678, 0.0
    %v4711 = vmax.f32 %v4681, 0.0
    %v4712 = vmax.f32 %v4683, 0.0
    %v4713 = vmax.f32 %v4686, 0.0
    %v4714 = vmax.f32 %v4688, 0.0
    %v4715 = vmax.f32 %v4691, 0.0
    %v4716 = vmax.f32 %v4693, 0.0
    %v4717 = vmax.f32 %v4696, 0.0
    %v4718 = vmax.f32 %v4698, 0.0
    %v4719 = vmax.f32 %v4701, 0.0
    %v4720 = vmax.f32 %v4703, 0.0
    %4737 = vrot.lane.b32.xlu0 %v4705, 30
    %v4738 = vpop.permute.xlu0 %4737
    %4739 = vrot.lane.b32.xlu0 %v4706, 30
    %v4740 = vpop.permute.xlu0 %4739
    %4741 = vrot.lane.b32.xlu0 %v4707, 30
    %v4742 = vpop.permute.xlu0 %4741
    %4743 = vrot.lane.b32.xlu0 %v4708, 30
    %v4744 = vpop.permute.xlu0 %4743
    %4745 = vrot.lane.b32.xlu0 %v4709, 30
    %v4746 = vpop.permute.xlu0 %4745
    %4747 = vrot.lane.b32.xlu0 %v4710, 30
    %v4748 = vpop.permute.xlu0 %4747
    %4749 = vrot.lane.b32.xlu0 %v4711, 30
    %v4750 = vpop.permute.xlu0 %4749
    %4751 = vrot.lane.b32.xlu0 %v4712, 30
    %v4752 = vpop.permute.xlu0 %4751
    %4753 = vrot.lane.b32.xlu0 %v4713, 30
    %v4754 = vpop.permute.xlu0 %4753
    %4755 = vrot.lane.b32.xlu0 %v4714, 30
    %v4756 = vpop.permute.xlu0 %4755
    %4757 = vrot.lane.b32.xlu0 %v4715, 30
    %v4758 = vpop.permute.xlu0 %4757
    %4759 = vrot.lane.b32.xlu0 %v4716, 30
    %v4760 = vpop.permute.xlu0 %4759
    %4761 = vrot.lane.b32.xlu0 %v4717, 30
    %v4762 = vpop.permute.xlu0 %4761
    %4763 = vrot.lane.b32.xlu0 %v4718, 30
    %v4764 = vpop.permute.xlu0 %4763
    %4765 = vrot.lane.b32.xlu0 %v4719, 30
    %v4766 = vpop.permute.xlu0 %4765
    %4767 = vrot.lane.b32.xlu0 %v4720, 30
    %v4768 = vpop.permute.xlu0 %4767
    %vm4785 = vcmask 269552
    %4786 = vst.msk [vmem:[%s91] sm:$0xff] %vm4785, %v4738
    %4787 = vst.msk [vmem:[%s91 + $0x8] sm:$0xff] %vm4785, %v4740
    %4788 = vst.msk [vmem:[%s91 + $0x10] sm:$0xff] %vm4785, %v4742
    %4789 = vst.msk [vmem:[%s91 + $0x18] sm:$0xff] %vm4785, %v4744
    %4790 = vst.msk [vmem:[%s91 + $0x20] sm:$0xff] %vm4785, %v4746
    %4791 = vst.msk [vmem:[%s91 + $0x28] sm:$0xff] %vm4785, %v4748
    %4792 = vst.msk [vmem:[%s91 + $0x30] sm:$0xff] %vm4785, %v4750
    %4793 = vst.msk [vmem:[%s91 + $0x38] sm:$0xff] %vm4785, %v4752
    %4794 = vst.msk [vmem:[%s91 + $0x40] sm:$0xff] %vm4785, %v4754
    %4795 = vst.msk [vmem:[%s91 + $0x48] sm:$0xff] %vm4785, %v4756
    %4796 = vst.msk [vmem:[%s91 + $0x50] sm:$0xff] %vm4785, %v4758
    %4797 = vst.msk [vmem:[%s91 + $0x58] sm:$0xff] %vm4785, %v4760
    %4798 = vst.msk [vmem:[%s91 + $0x60] sm:$0xff] %vm4785, %v4762
    %4799 = vst.msk [vmem:[%s91 + $0x68] sm:$0xff] %vm4785, %v4764
    %4800 = vst.msk [vmem:[%s91 + $0x70] sm:$0xff] %vm4785, %v4766
    %4801 = vst.msk [vmem:[%s91 + $0x78] sm:$0xff] %vm4785, %v4768
    // Predicated region
    $region274: #{deep_naigsr_forward.1} parent=1 // pred_check
      _
    $region275: #{deep_naigsr_forward.1} parent=1 // pred_check_branch
      %4803 = sbr.rel (0) target = $region277
    $region276: #{deep_naigsr_forward.1} parent=1 // pred_region
      _
    $region277: #{deep_naigsr_forward.1} parent=1 // pred_fallthru
      _
    // Predicated region
    $region278: #{deep_naigsr_forward.1} parent=1 // pred_check
      _
    $region279: #{deep_naigsr_forward.1} parent=1 // pred_check_branch
      %4805 = sbr.rel (0) target = $region281
    $region280: #{deep_naigsr_forward.1} parent=1 // pred_region
      _
    $region281: #{deep_naigsr_forward.1} parent=1 // pred_fallthru
      _
    %4806 = vsyncpa [#allocation3], 1
    %4807 = vsyncpa [#allocation5], 1
    %4808 = vsyncpa [#allocation8], 1
    %4809 = vsyncpa [#allocation11], 1
    %4810 = vsyncpa [#allocation14], 1
    %4811 = vsyncpa [#allocation17], 1
    %4812 = vsyncpa [#allocation20], 1
    %4813 = vsyncpa [#allocation23], 1
    %4814 = vsyncpa [#allocation26], 1
    %4815 = vsyncpa [#allocation29], 1
    %4816 = vsyncpa [#allocation32], 1
    %4817 = vsyncpa [#allocation35], 1

</llo_original>
